<compile_context>
chip_gen: v6e
topology: v6e:2x2x1
jax: 0.10.0
libtpu: 0.0.40
codegen_flags: <defaults>
</compile_context>

<pallas_src>
import math
from functools import partial

import jax
import jax.numpy as jnp
from jax import lax
from jax.experimental import pallas as pl
from jax.experimental.pallas import tpu as pltpu


# ------------------------------ fused kernel -------------------------------

def _wave_kernel(xq_ref, wq4_ref, wred4_ref, bred4_ref, taps_ref, bfilt_ref,
                 sel_ref, lng_ref, lnb_ref, wkv_ref, g_ref, qhm_ref,
                 wp4_ref, bp4_ref, o_ref,
                 xp_sc, z_sc, k_sc, v_sc,
                 *, H2, W2, C, heads, tq, eps):
    t = pl.program_id(1)
    HW2 = H2 * W2
    PAD = 2 * W2                      # vertical halo (>= W2+1), 8-aligned

    # ---------------- shared per-batch phase (runs once, at tile 0) ----------
    @pl.when(t == 0)
    def _shared():
        # reduce: 1x1 conv + BN + ReLU on the 4 packed quadrant pixels per row.
        xq = xq_ref[0].astype(jnp.bfloat16)                       # (HW2, 4C)
        xred = jnp.dot(xq, wred4_ref[...], preferred_element_type=jnp.float32)
        xred = jnp.maximum(xred + bred4_ref[...], 0.0)            # (HW2, C)

        # zero-padded copy for the 3x3 conv halo on the H2 x W2 grid.
        xp_sc[0:PAD, :] = jnp.zeros((PAD, C), jnp.float32)
        xp_sc[PAD:PAD + HW2, :] = xred
        xp_sc[PAD + HW2:PAD + HW2 + PAD, :] = jnp.zeros((PAD, C), jnp.float32)

        # column-boundary masks (horizontal zero padding of the conv).
        w2_idx = lax.broadcasted_iota(jnp.int32, (HW2, 1), 0) % W2
        mask_l = (w2_idx > 0).astype(jnp.float32)
        mask_r = (w2_idx < W2 - 1).astype(jnp.float32)

        # 3x3 filter conv (Haar DWT + BN folded into the taps) + ReLU.
        acc = jnp.zeros((HW2, C), jnp.float32)
        for ti in range(9):                                       # static taps
            di, dj = ti // 3 - 1, ti % 3 - 1
            off = PAD + di * W2 + dj
            src = xp_sc[off:off + HW2, :]
            if dj == -1:
                src = src * mask_l
            elif dj == 1:
                src = src * mask_r
            acc = acc + jnp.dot(src.astype(jnp.bfloat16), taps_ref[ti],
                                preferred_element_type=jnp.float32)
        y = jnp.maximum(acc + bfilt_ref[...], 0.0)                # filtered DWT map

        # IDWT folded through w_proj[C:, :] -> quadrant-lane output layout.
        z_sc[...] = jnp.dot(y.astype(jnp.bfloat16), g_ref[...],
                            preferred_element_type=jnp.float32)   # (HW2, 4C)

        # k/v columns (w2==0 -> k rows, w2==1 -> v rows): LayerNorm + kv linear.
        kv_src = jnp.dot(sel_ref[...], y, preferred_element_type=jnp.float32)
        mu = jnp.mean(kv_src, axis=-1, keepdims=True)
        var = jnp.mean(jnp.square(kv_src - mu), axis=-1, keepdims=True)
        ln = (kv_src - mu) * lax.rsqrt(var + eps) * lng_ref[...] + lnb_ref[...]
        kv_rows = jnp.dot(ln.astype(jnp.bfloat16), wkv_ref[...],
                          preferred_element_type=jnp.float32)     # (2*H2, C)
        kb = kv_rows[0:H2, :].astype(jnp.bfloat16)
        vb = kv_rows[H2:2 * H2, :].astype(jnp.bfloat16)
        for qq in range(4):                                       # lane-tile x4
            k_sc[:, qq * C:(qq + 1) * C] = kb
            v_sc[:, qq * C:(qq + 1) * C] = vb

    # ------------- per query-tile: q projection + attention + proj ----------
    r0 = pl.multiple_of(t * tq, tq)
    x_t = xq_ref[0, pl.ds(r0, tq), :].astype(jnp.bfloat16)        # (tq, 4C)
    q_bf = jnp.dot(x_t, wq4_ref[...],                             # scale folded
                   preferred_element_type=jnp.float32).astype(jnp.bfloat16)

    kt = k_sc[...]                                                # (H2, 4C) bf16
    vt = v_sc[...]
    acc = jnp.zeros((tq, 4 * C), jnp.float32)
    for qi in range(4):                                           # quadrant
        for h in range(heads):                                    # head
            m = qhm_ref[qi * heads + h:qi * heads + h + 1, :]     # (1, 4C) bf16
            s = lax.dot_general(q_bf, kt * m, (((1,), (1,)), ((), ())),
                                preferred_element_type=jnp.float32)   # (tq, H2)
            mx = jnp.max(s, axis=-1, keepdims=True)
            p = jnp.exp(s - mx)
            l = jnp.sum(p, axis=-1, keepdims=True)
            p = p * pl.reciprocal(l, approx=True)                 # EUP
            acc = acc + jnp.dot(p.astype(jnp.bfloat16), vt * m,
                                preferred_element_type=jnp.float32)

    out = jnp.dot(acc.astype(jnp.bfloat16), wp4_ref[...],         # one proj GEMM
                  preferred_element_type=jnp.float32)
    o_ref[0] = out + z_sc[pl.ds(r0, tq), :] + bp4_ref[...]


# --------------------------- weight preprocessing ---------------------------

def fold_params(p, *, dim, heads, dim_head, H, W, eps=1e-5):
    """Fold BN (eval mode), the Haar DWT/IDWT, the attention scale and the
    4-token lane packing into matmul-ready weights. Done once, outside jit."""
    C = dim
    inner = heads * dim_head
    assert inner == C and C % 4 == 0 and H == W and H % 2 == 0
    C4 = C // 4
    H2, W2 = H // 2, W // 2
    HW2 = H2 * W2
    dh = dim_head
    f32, bf16 = jnp.float32, jnp.bfloat16
    eye4 = jnp.eye(4, dtype=f32)
    eyeC4 = jnp.eye(C4, dtype=f32)

    # Haar analysis/synthesis over the 2x2 quadrants (a,b,c,d)=((0,0),(0,1),(1,0),(1,1)).
    S = jnp.array([[1., 1., 1., 1.],
                   [1., 1., -1., -1.],
                   [1., -1., 1., -1.],
                   [1., -1., -1., 1.]], f32)

    # q projection (attention scale folded), block-diag over the 4 packed tokens.
    wq4 = jnp.kron(eye4, p["w_q"] * (dim_head ** -0.5)).astype(bf16)

    # reduce: 1x1 conv + BN folded.
    s_r = p["red_gamma"] / jnp.sqrt(p["red_var"] + eps)
    w_red = p["w_red"].reshape(C4, C).T * s_r[None, :]
    b_red = (p["b_red"] - p["red_mean"]) * s_r + p["red_beta"]
    wred4 = jnp.kron(eye4, w_red).astype(bf16)                     # (4C, C)
    bred4 = jnp.tile(b_red, 4).reshape(1, C).astype(f32)

    # filter: 3x3 conv + BN folded, Haar DWT folded on the input side (dense taps).
    D = 0.5 * jnp.kron(S.T, eyeC4)                                 # quadrant-lane -> DWT-ch
    s_f = p["filt_gamma"] / jnp.sqrt(p["filt_var"] + eps)
    w_f = p["w_filt"] * s_f[:, None, None, None]
    b_f = (p["b_filt"] - p["filt_mean"]) * s_f + p["filt_beta"]
    taps = jnp.stack([D @ w_f[:, :, ki, kj].T
                      for ki in range(3) for kj in range(3)]).astype(bf16)
    bfilt = b_f.reshape(1, C).astype(f32)

    # proj: attention part (block-diag over quadrants) + IDWT folded tail.
    w_pa = p["w_proj"][:C, :]
    w_pi = p["w_proj"][C:, :]
    g = jnp.concatenate(
        [(0.5 * jnp.kron(S[q].reshape(4, 1), eyeC4)) @ w_pi for q in range(4)],
        axis=1)                                                    # (C, 4C)
    wp4 = jnp.kron(eye4, w_pa).astype(bf16)
    bp4 = jnp.tile(p["b_proj"], 4).reshape(1, 4 * C).astype(f32)

    # constant row-selector for the k/v columns of the filtered DWT map.
    sel = jnp.zeros((2 * H2, HW2), f32)
    for i in range(H2):
        sel = sel.at[i, i * W2].set(1.0)
        sel = sel.at[H2 + i, i * W2 + 1].set(1.0)

    # per-(quadrant, head) lane masks for the packed attention.
    qhm = jnp.zeros((4 * heads, 4 * C), f32)
    for q in range(4):
        for h in range(heads):
            qhm = qhm.at[q * heads + h, q * C + h * dh:q * C + (h + 1) * dh].set(1.0)

    return dict(
        wq4=wq4, wred4=wred4, bred4=bred4, taps=taps, bfilt=bfilt,
        g_idwt=g.astype(bf16),
        ln_gamma=p["ln_gamma"].reshape(1, C).astype(f32),
        ln_beta=p["ln_beta"].reshape(1, C).astype(f32),
        w_kv=p["w_kv"].astype(bf16),
        sel=sel, qhmask=qhm.astype(bf16),
        wp4=wp4, bp4=bp4,
    )


# ------------------------------- forward pass -------------------------------

def wave_attention(x, fp, *, heads, dim_head):
    B, N, C = x.shape
    H = W = int(math.sqrt(N))
    H2, W2 = H // 2, W // 2
    HW2 = H2 * W2
    assert heads * dim_head == C and H * W == N and H % 2 == 0 and C % 4 == 0

    # token -> (2x2 block, quadrant) packed layout (and inverse on the output):
    # one cheap XLA pass over the raw input/output only; every intermediate
    # stays inside the fused kernel.
    # TODO(synk): could be folded into the kernel via banded weights/index_maps,
    # not worth the weight blow-up for a single 4C-lane-dense transform.
    xq = (x.reshape(B, H2, 2, W2, 2, C).transpose(0, 1, 3, 2, 4, 5)
           .reshape(B, HW2, 4 * C))

    qt = 2 if (HW2 // 2) % 8 == 0 else 1        # >=2 query tiles per batch
    tq = HW2 // qt

    out_q = pl.pallas_call(
        partial(_wave_kernel, H2=H2, W2=W2, C=C, heads=heads, tq=tq, eps=1e-5),
        out_shape=jax.ShapeDtypeStruct((B, HW2, 4 * C), jnp.float32),
        grid=(B, qt),
        in_specs=[
            pl.BlockSpec((1, HW2, 4 * C), lambda b, t: (b, 0, 0)),   # x (packed)
            pl.BlockSpec((4 * C, 4 * C), lambda b, t: (0, 0)),       # wq4
            pl.BlockSpec((4 * C, C), lambda b, t: (0, 0)),           # wred4
            pl.BlockSpec((1, C), lambda b, t: (0, 0)),               # bred4
            pl.BlockSpec((9, C, C), lambda b, t: (0, 0, 0)),         # taps
            pl.BlockSpec((1, C), lambda b, t: (0, 0)),               # bfilt
            pl.BlockSpec((2 * H2, HW2), lambda b, t: (0, 0)),        # sel
            pl.BlockSpec((1, C), lambda b, t: (0, 0)),               # ln gamma
            pl.BlockSpec((1, C), lambda b, t: (0, 0)),               # ln beta
            pl.BlockSpec((C, C), lambda b, t: (0, 0)),               # w_kv
            pl.BlockSpec((C, 4 * C), lambda b, t: (0, 0)),           # g_idwt
            pl.BlockSpec((4 * heads, 4 * C), lambda b, t: (0, 0)),   # qh masks
            pl.BlockSpec((4 * C, 4 * C), lambda b, t: (0, 0)),       # wp4
            pl.BlockSpec((1, 4 * C), lambda b, t: (0, 0)),           # bp4
        ],
        out_specs=pl.BlockSpec((1, tq, 4 * C), lambda b, t: (b, t, 0)),
        scratch_shapes=[
            pltpu.VMEM((HW2 + 4 * W2, C), jnp.float32),   # padded reduce output
            pltpu.VMEM((HW2, 4 * C), jnp.float32),        # IDWT->proj contribution
            pltpu.VMEM((H2, 4 * C), jnp.bfloat16),        # k (lane-tiled x4)
            pltpu.VMEM((H2, 4 * C), jnp.bfloat16),        # v (lane-tiled x4)
        ],
        compiler_params=pltpu.CompilerParams(
            dimension_semantics=("parallel", "arbitrary")),
    )(xq, fp["wq4"], fp["wred4"], fp["bred4"], fp["taps"], fp["bfilt"],
      fp["sel"], fp["ln_gamma"], fp["ln_beta"], fp["w_kv"], fp["g_idwt"],
      fp["qhmask"], fp["wp4"], fp["bp4"])

    return (out_q.reshape(B, H2, W2, 2, 2, C).transpose(0, 1, 3, 2, 4, 5)
             .reshape(B, N, C))


# ----------------------------- parameter init -------------------------------

def init_params(key, dim, heads, dim_head):
    inner = heads * dim_head
    c4 = inner // 4
    ks = jax.random.split(key, 16)
    n = lambda k, shape, s=0.1: s * jax.random.normal(k, shape, jnp.float32)
    return dict(
        w_q=n(ks[0], (dim, inner)),
        w_red=n(ks[1], (c4, inner, 1, 1)), b_red=n(ks[2], (c4,)),
        red_gamma=1.0 + n(ks[3], (c4,)), red_beta=n(ks[4], (c4,)),
        red_mean=n(ks[5], (c4,)),
        red_var=jax.random.uniform(ks[6], (c4,), jnp.float32, 0.5, 1.5),
        w_filt=n(ks[7], (inner, inner, 3, 3)), b_filt=n(ks[8], (inner,)),
        filt_gamma=1.0 + n(ks[9], (inner,)), filt_beta=n(ks[10], (inner,)),
        filt_mean=n(ks[11], (inner,)),
        filt_var=jax.random.uniform(ks[12], (inner,), jnp.float32, 0.5, 1.5),
        ln_gamma=jnp.ones((dim,), jnp.float32),
        ln_beta=jnp.zeros((dim,), jnp.float32),
        w_kv=n(ks[13], (dim, inner)),
        w_proj=n(ks[14], (inner + c4, dim)), b_proj=n(ks[15], (dim,)),
    )


if __name__ == "__main__":
    dim, heads, dim_head = 32, 4, 8      # inner_dim == dim, as the torch reshapes require
    B, H, W = 2, 16, 16
    N = H * W

    key = jax.random.PRNGKey(0)
    kx, kp = jax.random.split(key)
    x = jax.random.normal(kx, (B, N, dim), jnp.float32)
    params = init_params(kp, dim, heads, dim_head)
    folded = fold_params(params, dim=dim, heads=heads, dim_head=dim_head, H=H, W=W)

    fwd = jax.jit(partial(wave_attention, heads=heads, dim_head=dim_head))
    out = fwd(x, folded)
    jax.block_until_ready(out)
    assert out.shape == (B, N, dim) and out.dtype == jnp.float32
    print("KERNEL_OK")
</pallas_src>

<mosaic_0001>
module attributes {stable_mosaic.version = 11 : i64} {
  func.func @_wave_kernel(%arg0: i32, %arg1: i32, %arg2: memref<1x64x128xf32, #tpu.memory_space<vmem>>, %arg3: memref<128x128xbf16, #tpu.memory_space<vmem>>, %arg4: memref<128x32xbf16, #tpu.memory_space<vmem>>, %arg5: memref<1x32xf32, #tpu.memory_space<vmem>>, %arg6: memref<9x32x32xbf16, #tpu.memory_space<vmem>>, %arg7: memref<1x32xf32, #tpu.memory_space<vmem>>, %arg8: memref<16x64xf32, #tpu.memory_space<vmem>>, %arg9: memref<1x32xf32, #tpu.memory_space<vmem>>, %arg10: memref<1x32xf32, #tpu.memory_space<vmem>>, %arg11: memref<32x32xbf16, #tpu.memory_space<vmem>>, %arg12: memref<32x128xbf16, #tpu.memory_space<vmem>>, %arg13: memref<16x128xbf16, #tpu.memory_space<vmem>>, %arg14: memref<128x128xbf16, #tpu.memory_space<vmem>>, %arg15: memref<1x128xf32, #tpu.memory_space<vmem>>, %arg16: memref<1x32x128xf32, #tpu.memory_space<vmem>>, %arg17: memref<96x32xf32, #tpu.memory_space<vmem>>, %arg18: memref<64x128xf32, #tpu.memory_space<vmem>>, %arg19: memref<8x128xbf16, #tpu.memory_space<vmem>>, %arg20: memref<8x128xbf16, #tpu.memory_space<vmem>>) attributes {dimension_semantics = [#tpu.dimension_semantics<parallel>, #tpu.dimension_semantics<arbitrary>], iteration_bounds = array<i64: 2, 2>, scalar_prefetch = 0 : i64, scratch_operands = 4 : i64, tpu.core_type = #tpu.core_type<tc>, window_params = [{transform_indices = @transform_0, window_bounds = array<i64: 1, 64, 128>}, {pipeline_mode = #tpu.pipeline_mode<synchronous>, transform_indices = @transform_1, window_bounds = array<i64: 128, 128>}, {pipeline_mode = #tpu.pipeline_mode<synchronous>, transform_indices = @transform_2, window_bounds = array<i64: 128, 32>}, {pipeline_mode = #tpu.pipeline_mode<synchronous>, transform_indices = @transform_3, window_bounds = array<i64: 1, 32>}, {pipeline_mode = #tpu.pipeline_mode<synchronous>, transform_indices = @transform_4, window_bounds = array<i64: 9, 32, 32>}, {pipeline_mode = #tpu.pipeline_mode<synchronous>, transform_indices = @transform_5, window_bounds = array<i64: 1, 32>}, {pipeline_mode = #tpu.pipeline_mode<synchronous>, transform_indices = @transform_6, window_bounds = array<i64: 16, 64>}, {pipeline_mode = #tpu.pipeline_mode<synchronous>, transform_indices = @transform_7, window_bounds = array<i64: 1, 32>}, {pipeline_mode = #tpu.pipeline_mode<synchronous>, transform_indices = @transform_8, window_bounds = array<i64: 1, 32>}, {pipeline_mode = #tpu.pipeline_mode<synchronous>, transform_indices = @transform_9, window_bounds = array<i64: 32, 32>}, {pipeline_mode = #tpu.pipeline_mode<synchronous>, transform_indices = @transform_10, window_bounds = array<i64: 32, 128>}, {pipeline_mode = #tpu.pipeline_mode<synchronous>, transform_indices = @transform_11, window_bounds = array<i64: 16, 128>}, {pipeline_mode = #tpu.pipeline_mode<synchronous>, transform_indices = @transform_12, window_bounds = array<i64: 128, 128>}, {pipeline_mode = #tpu.pipeline_mode<synchronous>, transform_indices = @transform_13, window_bounds = array<i64: 1, 128>}, {transform_indices = @transform_14, window_bounds = array<i64: 1, 32, 128>}]} {
    %c0_i32 = arith.constant 0 : i32
    %0 = arith.cmpi eq, %arg1, %c0_i32 : i32
    %1 = arith.extui %0 : i1 to i32
    %c0_i32_0 = arith.constant 0 : i32
    %2 = arith.cmpi ne, %1, %c0_i32_0 : i32
    scf.if %2 {
      %c0_99 = arith.constant 0 : index
      %c0_100 = arith.constant 0 : index
      %c0_101 = arith.constant 0 : index
      %331 = vector.load %arg2[%c0_99, %c0_100, %c0_101] : memref<1x64x128xf32, #tpu.memory_space<vmem>>, vector<1x64x128xf32>
      %332 = vector.shape_cast %331 : vector<1x64x128xf32> to vector<64x128xf32>
      %333 = arith.truncf %332 : vector<64x128xf32> to vector<64x128xbf16>
      %c0_102 = arith.constant 0 : index
      %c0_103 = arith.constant 0 : index
      %334 = vector.load %arg4[%c0_102, %c0_103] : memref<128x32xbf16, #tpu.memory_space<vmem>>, vector<128x32xbf16>
      %cst_104 = arith.constant dense<0.000000e+00> : vector<64x32xf32>
      %335 = tpu.matmul %333, %334, %cst_104 {dimension_numbers = #tpu.dot_dimension_numbers<[1], [0], [0], [1], [0, 0, 1, 1], [], []>} : vector<64x128xbf16>, vector<128x32xbf16>, vector<64x32xf32> -> vector<64x32xf32>
      %c0_105 = arith.constant 0 : index
      %c0_106 = arith.constant 0 : index
      %336 = vector.load %arg5[%c0_105, %c0_106] : memref<1x32xf32, #tpu.memory_space<vmem>>, vector<1x32xf32>
      %337 = vector.broadcast %336 : vector<1x32xf32> to vector<64x32xf32>
      %338 = arith.addf %335, %337 : vector<64x32xf32>
      %cst_107 = arith.constant 0.000000e+00 : f32
      %339 = vector.broadcast %cst_107 : f32 to vector<64x32xf32>
      %340 = arith.maximumf %338, %339 : vector<64x32xf32>
      %cst_108 = arith.constant 0.000000e+00 : f32
      %341 = vector.broadcast %cst_108 : f32 to vector<16x32xf32>
      %c0_109 = arith.constant 0 : index
      %c0_110 = arith.constant 0 : index
      %342 = vector.load %arg17[%c0_109, %c0_110] : memref<96x32xf32, #tpu.memory_space<vmem>>, vector<16x32xf32>
      tpu.vector_store %arg17[%c0_109, %c0_110], %341 {strides = array<i32>} : memref<96x32xf32, #tpu.memory_space<vmem>>, vector<16x32xf32>,
      %c16 = arith.constant 16 : index
      %c0_111 = arith.constant 0 : index
      %343 = vector.load %arg17[%c16, %c0_111] : memref<96x32xf32, #tpu.memory_space<vmem>>, vector<64x32xf32>
      tpu.vector_store %arg17[%c16, %c0_111], %340 {strides = array<i32>} : memref<96x32xf32, #tpu.memory_space<vmem>>, vector<64x32xf32>,
      %cst_112 = arith.constant 0.000000e+00 : f32
      %344 = vector.broadcast %cst_112 : f32 to vector<16x32xf32>
      %c80 = arith.constant 80 : index
      %c0_113 = arith.constant 0 : index
      %345 = vector.load %arg17[%c80, %c0_113] : memref<96x32xf32, #tpu.memory_space<vmem>>, vector<16x32xf32>
      tpu.vector_store %arg17[%c80, %c0_113], %344 {strides = array<i32>} : memref<96x32xf32, #tpu.memory_space<vmem>>, vector<16x32xf32>,
      %346 = tpu.iota {dimensions = array<i32: 0>} : vector<64x1xi32>
      %c8_i32 = arith.constant 8 : i32
      %c0_i32_114 = arith.constant 0 : i32
      %347 = arith.cmpi eq, %c8_i32, %c0_i32_114 : i32
      %c1_i32 = arith.constant 1 : i32
      %348 = arith.select %347, %c1_i32, %c8_i32 : i32
      %349 = vector.broadcast %348 : i32 to vector<64x1xi32>
      %350 = arith.remsi %346, %349 : vector<64x1xi32>
      %c0_i32_115 = arith.constant 0 : i32
      %351 = vector.broadcast %c0_i32_115 : i32 to vector<64x1xi32>
      %352 = arith.cmpi ne, %350, %351 : vector<64x1xi32>
      %c0_i32_116 = arith.constant 0 : i32
      %353 = vector.broadcast %c0_i32_116 : i32 to vector<64x1xi32>
      %354 = arith.cmpi slt, %350, %353 : vector<64x1xi32>
      %c0_i32_117 = arith.constant 0 : i32
      %355 = arith.cmpi slt, %348, %c0_i32_117 : i32
      %356 = vector.broadcast %355 : i1 to vector<64x1xi1>
      %357 = vector.broadcast %356 : vector<64x1xi1> to vector<64x1xi1>
      %358 = arith.xori %354, %357 : vector<64x1xi1>
      %359 = arith.andi %358, %352 : vector<64x1xi1>
      %360 = vector.broadcast %348 : i32 to vector<64x1xi32>
      %361 = arith.addi %350, %360 : vector<64x1xi32>
      %362 = arith.select %359, %361, %350 : vector<64x1xi1>, vector<64x1xi32>
      %c0_i32_118 = arith.constant 0 : i32
      %363 = vector.broadcast %c0_i32_118 : i32 to vector<64x1xi32>
      %364 = arith.cmpi sgt, %362, %363 : vector<64x1xi32>
      %365 = arith.extui %364 : vector<64x1xi1> to vector<64x1xi32>
      %366 = arith.sitofp %365 : vector<64x1xi32> to vector<64x1xf32>
      %c7_i32 = arith.constant 7 : i32
      %367 = vector.broadcast %c7_i32 : i32 to vector<64x1xi32>
      %368 = arith.cmpi slt, %362, %367 : vector<64x1xi32>
      %369 = arith.extui %368 : vector<64x1xi1> to vector<64x1xi32>
      %370 = arith.sitofp %369 : vector<64x1xi32> to vector<64x1xf32>
      %cst_119 = arith.constant 0.000000e+00 : f32
      %371 = vector.broadcast %cst_119 : f32 to vector<64x32xf32>
      %c7_120 = arith.constant 7 : index
      %c0_121 = arith.constant 0 : index
      %372 = vector.load %arg17[%c7_120, %c0_121] : memref<96x32xf32, #tpu.memory_space<vmem>>, vector<64x32xf32>
      %373 = vector.broadcast %366 : vector<64x1xf32> to vector<64x32xf32>
      %374 = arith.mulf %372, %373 : vector<64x32xf32>
      %375 = arith.truncf %374 : vector<64x32xf32> to vector<64x32xbf16>
      %c0_122 = arith.constant 0 : index
      %c0_123 = arith.constant 0 : index
      %c0_124 = arith.constant 0 : index
      %376 = vector.load %arg6[%c0_122, %c0_123, %c0_124] : memref<9x32x32xbf16, #tpu.memory_space<vmem>>, vector<1x32x32xbf16>
      %377 = vector.shape_cast %376 : vector<1x32x32xbf16> to vector<32x32xbf16>
      %cst_125 = arith.constant dense<0.000000e+00> : vector<64x32xf32>
      %378 = tpu.matmul %375, %377, %cst_125 {dimension_numbers = #tpu.dot_dimension_numbers<[1], [0], [0], [1], [0, 0, 1, 1], [], []>} : vector<64x32xbf16>, vector<32x32xbf16>, vector<64x32xf32> -> vector<64x32xf32>
      %379 = arith.addf %371, %378 : vector<64x32xf32>
      %c8_126 = arith.constant 8 : index
      %c0_127 = arith.constant 0 : index
      %380 = vector.load %arg17[%c8_126, %c0_127] : memref<96x32xf32, #tpu.memory_space<vmem>>, vector<64x32xf32>
      %381 = arith.truncf %380 : vector<64x32xf32> to vector<64x32xbf16>
      %c1_128 = arith.constant 1 : index
      %c0_129 = arith.constant 0 : index
      %c0_130 = arith.constant 0 : index
      %382 = vector.load %arg6[%c1_128, %c0_129, %c0_130] : memref<9x32x32xbf16, #tpu.memory_space<vmem>>, vector<1x32x32xbf16>
      %383 = vector.shape_cast %382 : vector<1x32x32xbf16> to vector<32x32xbf16>
      %cst_131 = arith.constant dense<0.000000e+00> : vector<64x32xf32>
      %384 = tpu.matmul %381, %383, %cst_131 {dimension_numbers = #tpu.dot_dimension_numbers<[1], [0], [0], [1], [0, 0, 1, 1], [], []>} : vector<64x32xbf16>, vector<32x32xbf16>, vector<64x32xf32> -> vector<64x32xf32>
      %385 = arith.addf %379, %384 : vector<64x32xf32>
      %c9_132 = arith.constant 9 : index
      %c0_133 = arith.constant 0 : index
      %386 = vector.load %arg17[%c9_132, %c0_133] : memref<96x32xf32, #tpu.memory_space<vmem>>, vector<64x32xf32>
      %387 = vector.broadcast %370 : vector<64x1xf32> to vector<64x32xf32>
      %388 = arith.mulf %386, %387 : vector<64x32xf32>
      %389 = arith.truncf %388 : vector<64x32xf32> to vector<64x32xbf16>
      %c2_134 = arith.constant 2 : index
      %c0_135 = arith.constant 0 : index
      %c0_136 = arith.constant 0 : index
      %390 = vector.load %arg6[%c2_134, %c0_135, %c0_136] : memref<9x32x32xbf16, #tpu.memory_space<vmem>>, vector<1x32x32xbf16>
      %391 = vector.shape_cast %390 : vector<1x32x32xbf16> to vector<32x32xbf16>
      %cst_137 = arith.constant dense<0.000000e+00> : vector<64x32xf32>
      %392 = tpu.matmul %389, %391, %cst_137 {dimension_numbers = #tpu.dot_dimension_numbers<[1], [0], [0], [1], [0, 0, 1, 1], [], []>} : vector<64x32xbf16>, vector<32x32xbf16>, vector<64x32xf32> -> vector<64x32xf32>
      %393 = arith.addf %385, %392 : vector<64x32xf32>
      %c15_138 = arith.constant 15 : index
      %c0_139 = arith.constant 0 : index
      %394 = vector.load %arg17[%c15_138, %c0_139] : memref<96x32xf32, #tpu.memory_space<vmem>>, vector<64x32xf32>
      %395 = vector.broadcast %366 : vector<64x1xf32> to vector<64x32xf32>
      %396 = arith.mulf %394, %395 : vector<64x32xf32>
      %397 = arith.truncf %396 : vector<64x32xf32> to vector<64x32xbf16>
      %c3_140 = arith.constant 3 : index
      %c0_141 = arith.constant 0 : index
      %c0_142 = arith.constant 0 : index
      %398 = vector.load %arg6[%c3_140, %c0_141, %c0_142] : memref<9x32x32xbf16, #tpu.memory_space<vmem>>, vector<1x32x32xbf16>
      %399 = vector.shape_cast %398 : vector<1x32x32xbf16> to vector<32x32xbf16>
      %cst_143 = arith.constant dense<0.000000e+00> : vector<64x32xf32>
      %400 = tpu.matmul %397, %399, %cst_143 {dimension_numbers = #tpu.dot_dimension_numbers<[1], [0], [0], [1], [0, 0, 1, 1], [], []>} : vector<64x32xbf16>, vector<32x32xbf16>, vector<64x32xf32> -> vector<64x32xf32>
      %401 = arith.addf %393, %400 : vector<64x32xf32>
      %c16_144 = arith.constant 16 : index
      %c0_145 = arith.constant 0 : index
      %402 = vector.load %arg17[%c16_144, %c0_145] : memref<96x32xf32, #tpu.memory_space<vmem>>, vector<64x32xf32>
      %403 = arith.truncf %402 : vector<64x32xf32> to vector<64x32xbf16>
      %c4_146 = arith.constant 4 : index
      %c0_147 = arith.constant 0 : index
      %c0_148 = arith.constant 0 : index
      %404 = vector.load %arg6[%c4_146, %c0_147, %c0_148] : memref<9x32x32xbf16, #tpu.memory_space<vmem>>, vector<1x32x32xbf16>
      %405 = vector.shape_cast %404 : vector<1x32x32xbf16> to vector<32x32xbf16>
      %cst_149 = arith.constant dense<0.000000e+00> : vector<64x32xf32>
      %406 = tpu.matmul %403, %405, %cst_149 {dimension_numbers = #tpu.dot_dimension_numbers<[1], [0], [0], [1], [0, 0, 1, 1], [], []>} : vector<64x32xbf16>, vector<32x32xbf16>, vector<64x32xf32> -> vector<64x32xf32>
      %407 = arith.addf %401, %406 : vector<64x32xf32>
      %c17 = arith.constant 17 : index
      %c0_150 = arith.constant 0 : index
      %408 = vector.load %arg17[%c17, %c0_150] : memref<96x32xf32, #tpu.memory_space<vmem>>, vector<64x32xf32>
      %409 = vector.broadcast %370 : vector<64x1xf32> to vector<64x32xf32>
      %410 = arith.mulf %408, %409 : vector<64x32xf32>
      %411 = arith.truncf %410 : vector<64x32xf32> to vector<64x32xbf16>
      %c5_151 = arith.constant 5 : index
      %c0_152 = arith.constant 0 : index
      %c0_153 = arith.constant 0 : index
      %412 = vector.load %arg6[%c5_151, %c0_152, %c0_153] : memref<9x32x32xbf16, #tpu.memory_space<vmem>>, vector<1x32x32xbf16>
      %413 = vector.shape_cast %412 : vector<1x32x32xbf16> to vector<32x32xbf16>
      %cst_154 = arith.constant dense<0.000000e+00> : vector<64x32xf32>
      %414 = tpu.matmul %411, %413, %cst_154 {dimension_numbers = #tpu.dot_dimension_numbers<[1], [0], [0], [1], [0, 0, 1, 1], [], []>} : vector<64x32xbf16>, vector<32x32xbf16>, vector<64x32xf32> -> vector<64x32xf32>
      %415 = arith.addf %407, %414 : vector<64x32xf32>
      %c23 = arith.constant 23 : index
      %c0_155 = arith.constant 0 : index
      %416 = vector.load %arg17[%c23, %c0_155] : memref<96x32xf32, #tpu.memory_space<vmem>>, vector<64x32xf32>
      %417 = vector.broadcast %366 : vector<64x1xf32> to vector<64x32xf32>
      %418 = arith.mulf %416, %417 : vector<64x32xf32>
      %419 = arith.truncf %418 : vector<64x32xf32> to vector<64x32xbf16>
      %c6_156 = arith.constant 6 : index
      %c0_157 = arith.constant 0 : index
      %c0_158 = arith.constant 0 : index
      %420 = vector.load %arg6[%c6_156, %c0_157, %c0_158] : memref<9x32x32xbf16, #tpu.memory_space<vmem>>, vector<1x32x32xbf16>
      %421 = vector.shape_cast %420 : vector<1x32x32xbf16> to vector<32x32xbf16>
      %cst_159 = arith.constant dense<0.000000e+00> : vector<64x32xf32>
      %422 = tpu.matmul %419, %421, %cst_159 {dimension_numbers = #tpu.dot_dimension_numbers<[1], [0], [0], [1], [0, 0, 1, 1], [], []>} : vector<64x32xbf16>, vector<32x32xbf16>, vector<64x32xf32> -> vector<64x32xf32>
      %423 = arith.addf %415, %422 : vector<64x32xf32>
      %c24 = arith.constant 24 : index
      %c0_160 = arith.constant 0 : index
      %424 = vector.load %arg17[%c24, %c0_160] : memref<96x32xf32, #tpu.memory_space<vmem>>, vector<64x32xf32>
      %425 = arith.truncf %424 : vector<64x32xf32> to vector<64x32xbf16>
      %c7_161 = arith.constant 7 : index
      %c0_162 = arith.constant 0 : index
      %c0_163 = arith.constant 0 : index
      %426 = vector.load %arg6[%c7_161, %c0_162, %c0_163] : memref<9x32x32xbf16, #tpu.memory_space<vmem>>, vector<1x32x32xbf16>
      %427 = vector.shape_cast %426 : vector<1x32x32xbf16> to vector<32x32xbf16>
      %cst_164 = arith.constant dense<0.000000e+00> : vector<64x32xf32>
      %428 = tpu.matmul %425, %427, %cst_164 {dimension_numbers = #tpu.dot_dimension_numbers<[1], [0], [0], [1], [0, 0, 1, 1], [], []>} : vector<64x32xbf16>, vector<32x32xbf16>, vector<64x32xf32> -> vector<64x32xf32>
      %429 = arith.addf %423, %428 : vector<64x32xf32>
      %c25 = arith.constant 25 : index
      %c0_165 = arith.constant 0 : index
      %430 = vector.load %arg17[%c25, %c0_165] : memref<96x32xf32, #tpu.memory_space<vmem>>, vector<64x32xf32>
      %431 = vector.broadcast %370 : vector<64x1xf32> to vector<64x32xf32>
      %432 = arith.mulf %430, %431 : vector<64x32xf32>
      %433 = arith.truncf %432 : vector<64x32xf32> to vector<64x32xbf16>
      %c8_166 = arith.constant 8 : index
      %c0_167 = arith.constant 0 : index
      %c0_168 = arith.constant 0 : index
      %434 = vector.load %arg6[%c8_166, %c0_167, %c0_168] : memref<9x32x32xbf16, #tpu.memory_space<vmem>>, vector<1x32x32xbf16>
      %435 = vector.shape_cast %434 : vector<1x32x32xbf16> to vector<32x32xbf16>
      %cst_169 = arith.constant dense<0.000000e+00> : vector<64x32xf32>
      %436 = tpu.matmul %433, %435, %cst_169 {dimension_numbers = #tpu.dot_dimension_numbers<[1], [0], [0], [1], [0, 0, 1, 1], [], []>} : vector<64x32xbf16>, vector<32x32xbf16>, vector<64x32xf32> -> vector<64x32xf32>
      %437 = arith.addf %429, %436 : vector<64x32xf32>
      %c0_170 = arith.constant 0 : index
      %c0_171 = arith.constant 0 : index
      %438 = vector.load %arg7[%c0_170, %c0_171] : memref<1x32xf32, #tpu.memory_space<vmem>>, vector<1x32xf32>
      %439 = vector.broadcast %438 : vector<1x32xf32> to vector<64x32xf32>
      %440 = arith.addf %437, %439 : vector<64x32xf32>
      %cst_172 = arith.constant 0.000000e+00 : f32
      %441 = vector.broadcast %cst_172 : f32 to vector<64x32xf32>
      %442 = arith.maximumf %440, %441 : vector<64x32xf32>
      %443 = arith.truncf %442 : vector<64x32xf32> to vector<64x32xbf16>
      %c0_173 = arith.constant 0 : index
      %c0_174 = arith.constant 0 : index
      %444 = vector.load %arg12[%c0_173, %c0_174] : memref<32x128xbf16, #tpu.memory_space<vmem>>, vector<32x128xbf16>
      %cst_175 = arith.constant dense<0.000000e+00> : vector<64x128xf32>
      %445 = tpu.matmul %443, %444, %cst_175 {dimension_numbers = #tpu.dot_dimension_numbers<[1], [0], [0], [1], [0, 0, 1, 1], [], []>} : vector<64x32xbf16>, vector<32x128xbf16>, vector<64x128xf32> -> vector<64x128xf32>
      %c0_176 = arith.constant 0 : index
      %c0_177 = arith.constant 0 : index
      %446 = vector.load %arg18[%c0_176, %c0_177] : memref<64x128xf32, #tpu.memory_space<vmem>>, vector<64x128xf32>
      tpu.vector_store %arg18[%c0_176, %c0_177], %445 {strides = array<i32>} : memref<64x128xf32, #tpu.memory_space<vmem>>, vector<64x128xf32>,
      %c0_178 = arith.constant 0 : index
      %c0_179 = arith.constant 0 : index
      %447 = vector.load %arg8[%c0_178, %c0_179] : memref<16x64xf32, #tpu.memory_space<vmem>>, vector<16x64xf32>
      %cst_180 = arith.constant dense<0.000000e+00> : vector<16x32xf32>
      %448 = tpu.matmul %447, %442, %cst_180 {dimension_numbers = #tpu.dot_dimension_numbers<[1], [0], [0], [1], [0, 0, 1, 1], [], []>} : vector<16x64xf32>, vector<64x32xf32>, vector<16x32xf32> -> vector<16x32xf32>
      %cst_181 = arith.constant dense<0.000000e+00> : vector<16xf32>
      %449 = vector.multi_reduction <add>, %448, %cst_181 [1] : vector<16x32xf32> to vector<16xf32>
      %450 = vector.shape_cast %449 : vector<16xf32> to vector<16x1xf32>
      %cst_182 = arith.constant 3.200000e+01 : f32
      %451 = vector.broadcast %cst_182 : f32 to vector<16x1xf32>
      %452 = arith.divf %450, %451 : vector<16x1xf32>
      %453 = vector.broadcast %452 : vector<16x1xf32> to vector<16x32xf32>
      %454 = arith.subf %448, %453 : vector<16x32xf32>
      %455 = arith.mulf %454, %454 : vector<16x32xf32>
      %cst_183 = arith.constant dense<0.000000e+00> : vector<16xf32>
      %456 = vector.multi_reduction <add>, %455, %cst_183 [1] : vector<16x32xf32> to vector<16xf32>
      %457 = vector.shape_cast %456 : vector<16xf32> to vector<16x1xf32>
      %cst_184 = arith.constant 3.200000e+01 : f32
      %458 = vector.broadcast %cst_184 : f32 to vector<16x1xf32>
      %459 = arith.divf %457, %458 : vector<16x1xf32>
      %460 = vector.broadcast %452 : vector<16x1xf32> to vector<16x32xf32>
      %461 = arith.subf %448, %460 : vector<16x32xf32>
      %cst_185 = arith.constant 9.99999974E-6 : f32
      %462 = vector.broadcast %cst_185 : f32 to vector<16x1xf32>
      %463 = arith.addf %459, %462 : vector<16x1xf32>
      %464 = math.rsqrt %463 : vector<16x1xf32>
      %465 = vector.broadcast %464 : vector<16x1xf32> to vector<16x32xf32>
      %466 = arith.mulf %461, %465 : vector<16x32xf32>
      %c0_186 = arith.constant 0 : index
      %c0_187 = arith.constant 0 : index
      %467 = vector.load %arg9[%c0_186, %c0_187] : memref<1x32xf32, #tpu.memory_space<vmem>>, vector<1x32xf32>
      %468 = vector.broadcast %467 : vector<1x32xf32> to vector<16x32xf32>
      %469 = arith.mulf %466, %468 : vector<16x32xf32>
      %c0_188 = arith.constant 0 : index
      %c0_189 = arith.constant 0 : index
      %470 = vector.load %arg10[%c0_188, %c0_189] : memref<1x32xf32, #tpu.memory_space<vmem>>, vector<1x32xf32>
      %471 = vector.broadcast %470 : vector<1x32xf32> to vector<16x32xf32>
      %472 = arith.addf %469, %471 : vector<16x32xf32>
      %473 = arith.truncf %472 : vector<16x32xf32> to vector<16x32xbf16>
      %c0_190 = arith.constant 0 : index
      %c0_191 = arith.constant 0 : index
      %474 = vector.load %arg11[%c0_190, %c0_191] : memref<32x32xbf16, #tpu.memory_space<vmem>>, vector<32x32xbf16>
      %cst_192 = arith.constant dense<0.000000e+00> : vector<16x32xf32>
      %475 = tpu.matmul %473, %474, %cst_192 {dimension_numbers = #tpu.dot_dimension_numbers<[1], [0], [0], [1], [0, 0, 1, 1], [], []>} : vector<16x32xbf16>, vector<32x32xbf16>, vector<16x32xf32> -> vector<16x32xf32>
      %476 = vector.extract_strided_slice %475 {offsets = [0, 0], sizes = [8, 32], strides = [1, 1]} : vector<16x32xf32> to vector<8x32xf32>
      %477 = arith.truncf %476 : vector<8x32xf32> to vector<8x32xbf16>
      %478 = vector.extract_strided_slice %475 {offsets = [8, 0], sizes = [8, 32], strides = [1, 1]} : vector<16x32xf32> to vector<8x32xf32>
      %479 = arith.truncf %478 : vector<8x32xf32> to vector<8x32xbf16>
      %c0_193 = arith.constant 0 : index
      %c0_194 = arith.constant 0 : index
      %480 = vector.load %arg19[%c0_193, %c0_194] : memref<8x128xbf16, #tpu.memory_space<vmem>>, vector<8x32xbf16>
      tpu.vector_store %arg19[%c0_193, %c0_194], %477 {strides = array<i32>} : memref<8x128xbf16, #tpu.memory_space<vmem>>, vector<8x32xbf16>,
      %c0_195 = arith.constant 0 : index
      %c0_196 = arith.constant 0 : index
      %481 = vector.load %arg20[%c0_195, %c0_196] : memref<8x128xbf16, #tpu.memory_space<vmem>>, vector<8x32xbf16>
      tpu.vector_store %arg20[%c0_195, %c0_196], %479 {strides = array<i32>} : memref<8x128xbf16, #tpu.memory_space<vmem>>, vector<8x32xbf16>,
      %c0_197 = arith.constant 0 : index
      %c32 = arith.constant 32 : index
      %482 = vector.load %arg19[%c0_197, %c32] : memref<8x128xbf16, #tpu.memory_space<vmem>>, vector<8x32xbf16>
      tpu.vector_store %arg19[%c0_197, %c32], %477 {strides = array<i32>} : memref<8x128xbf16, #tpu.memory_space<vmem>>, vector<8x32xbf16>,
      %c0_198 = arith.constant 0 : index
      %c32_199 = arith.constant 32 : index
      %483 = vector.load %arg20[%c0_198, %c32_199] : memref<8x128xbf16, #tpu.memory_space<vmem>>, vector<8x32xbf16>
      tpu.vector_store %arg20[%c0_198, %c32_199], %479 {strides = array<i32>} : memref<8x128xbf16, #tpu.memory_space<vmem>>, vector<8x32xbf16>,
      %c0_200 = arith.constant 0 : index
      %c64 = arith.constant 64 : index
      %484 = vector.load %arg19[%c0_200, %c64] : memref<8x128xbf16, #tpu.memory_space<vmem>>, vector<8x32xbf16>
      tpu.vector_store %arg19[%c0_200, %c64], %477 {strides = array<i32>} : memref<8x128xbf16, #tpu.memory_space<vmem>>, vector<8x32xbf16>,
      %c0_201 = arith.constant 0 : index
      %c64_202 = arith.constant 64 : index
      %485 = vector.load %arg20[%c0_201, %c64_202] : memref<8x128xbf16, #tpu.memory_space<vmem>>, vector<8x32xbf16>
      tpu.vector_store %arg20[%c0_201, %c64_202], %479 {strides = array<i32>} : memref<8x128xbf16, #tpu.memory_space<vmem>>, vector<8x32xbf16>,
      %c0_203 = arith.constant 0 : index
      %c96 = arith.constant 96 : index
      %486 = vector.load %arg19[%c0_203, %c96] : memref<8x128xbf16, #tpu.memory_space<vmem>>, vector<8x32xbf16>
      tpu.vector_store %arg19[%c0_203, %c96], %477 {strides = array<i32>} : memref<8x128xbf16, #tpu.memory_space<vmem>>, vector<8x32xbf16>,
      %c0_204 = arith.constant 0 : index
      %c96_205 = arith.constant 96 : index
      %487 = vector.load %arg20[%c0_204, %c96_205] : memref<8x128xbf16, #tpu.memory_space<vmem>>, vector<8x32xbf16>
      tpu.vector_store %arg20[%c0_204, %c96_205], %479 {strides = array<i32>} : memref<8x128xbf16, #tpu.memory_space<vmem>>, vector<8x32xbf16>,
    } else {
    }
    %c32_i32 = arith.constant 32 : i32
    %3 = arith.muli %arg1, %c32_i32 : i32
    %4 = tpu.assume_multiple %3, 32 : i32
    %c0 = arith.constant 0 : index
    %5 = arith.index_cast %4 : i32 to index
    %c0_1 = arith.constant 0 : index
    %6 = vector.load %arg2[%c0, %5, %c0_1] : memref<1x64x128xf32, #tpu.memory_space<vmem>>, vector<1x32x128xf32>
    %7 = vector.shape_cast %6 : vector<1x32x128xf32> to vector<32x128xf32>
    %8 = arith.truncf %7 : vector<32x128xf32> to vector<32x128xbf16>
    %c0_2 = arith.constant 0 : index
    %c0_3 = arith.constant 0 : index
    %9 = vector.load %arg3[%c0_2, %c0_3] : memref<128x128xbf16, #tpu.memory_space<vmem>>, vector<128x128xbf16>
    %cst = arith.constant dense<0.000000e+00> : vector<32x128xf32>
    %10 = tpu.matmul %8, %9, %cst {dimension_numbers = #tpu.dot_dimension_numbers<[1], [0], [0], [1], [0, 0, 1, 1], [], []>} : vector<32x128xbf16>, vector<128x128xbf16>, vector<32x128xf32> -> vector<32x128xf32>
    %11 = arith.truncf %10 : vector<32x128xf32> to vector<32x128xbf16>
    %c0_4 = arith.constant 0 : index
    %c0_5 = arith.constant 0 : index
    %12 = vector.load %arg19[%c0_4, %c0_5] : memref<8x128xbf16, #tpu.memory_space<vmem>>, vector<8x128xbf16>
    %c0_6 = arith.constant 0 : index
    %c0_7 = arith.constant 0 : index
    %13 = vector.load %arg20[%c0_6, %c0_7] : memref<8x128xbf16, #tpu.memory_space<vmem>>, vector<8x128xbf16>
    %cst_8 = arith.constant 0.000000e+00 : f32
    %14 = vector.broadcast %cst_8 : f32 to vector<32x128xf32>
    %c0_9 = arith.constant 0 : index
    %c0_10 = arith.constant 0 : index
    %15 = vector.load %arg13[%c0_9, %c0_10] : memref<16x128xbf16, #tpu.memory_space<vmem>>, vector<1x128xbf16>
    %16 = vector.broadcast %15 : vector<1x128xbf16> to vector<8x128xbf16>
    %17 = arith.mulf %12, %16 : vector<8x128xbf16>
    %cst_11 = arith.constant dense<0.000000e+00> : vector<32x8xf32>
    %18 = tpu.matmul %11, %17, %cst_11 {dimension_numbers = #tpu.dot_dimension_numbers<[1], [1], [0], [0], [0, 0, 1, 0], [], []>} : vector<32x128xbf16>, vector<8x128xbf16>, vector<32x8xf32> -> vector<32x8xf32>
    %cst_12 = arith.constant dense<0xFF800000> : vector<32xf32>
    %19 = vector.multi_reduction <maximumf>, %18, %cst_12 [1] : vector<32x8xf32> to vector<32xf32>
    %20 = vector.shape_cast %19 : vector<32xf32> to vector<32x1xf32>
    %21 = vector.broadcast %20 : vector<32x1xf32> to vector<32x8xf32>
    %22 = arith.subf %18, %21 : vector<32x8xf32>
    %23 = math.exp %22 : vector<32x8xf32>
    %cst_13 = arith.constant dense<0.000000e+00> : vector<32xf32>
    %24 = vector.multi_reduction <add>, %23, %cst_13 [1] : vector<32x8xf32> to vector<32xf32>
    %25 = vector.shape_cast %24 : vector<32xf32> to vector<32x1xf32>
    %26 = tpu.reciprocal %25 {approx = true} : vector<32x1xf32> -> vector<32x1xf32>
    %27 = vector.broadcast %26 : vector<32x1xf32> to vector<32x8xf32>
    %28 = arith.mulf %23, %27 : vector<32x8xf32>
    %29 = arith.truncf %28 : vector<32x8xf32> to vector<32x8xbf16>
    %30 = vector.broadcast %15 : vector<1x128xbf16> to vector<8x128xbf16>
    %31 = arith.mulf %13, %30 : vector<8x128xbf16>
    %cst_14 = arith.constant dense<0.000000e+00> : vector<32x128xf32>
    %32 = tpu.matmul %29, %31, %cst_14 {dimension_numbers = #tpu.dot_dimension_numbers<[1], [0], [0], [1], [0, 0, 1, 1], [], []>} : vector<32x8xbf16>, vector<8x128xbf16>, vector<32x128xf32> -> vector<32x128xf32>
    %33 = arith.addf %14, %32 : vector<32x128xf32>
    %c1 = arith.constant 1 : index
    %c0_15 = arith.constant 0 : index
    %34 = vector.load %arg13[%c1, %c0_15] : memref<16x128xbf16, #tpu.memory_space<vmem>>, vector<1x128xbf16>
    %35 = vector.broadcast %34 : vector<1x128xbf16> to vector<8x128xbf16>
    %36 = arith.mulf %12, %35 : vector<8x128xbf16>
    %cst_16 = arith.constant dense<0.000000e+00> : vector<32x8xf32>
    %37 = tpu.matmul %11, %36, %cst_16 {dimension_numbers = #tpu.dot_dimension_numbers<[1], [1], [0], [0], [0, 0, 1, 0], [], []>} : vector<32x128xbf16>, vector<8x128xbf16>, vector<32x8xf32> -> vector<32x8xf32>
    %cst_17 = arith.constant dense<0xFF800000> : vector<32xf32>
    %38 = vector.multi_reduction <maximumf>, %37, %cst_17 [1] : vector<32x8xf32> to vector<32xf32>
    %39 = vector.shape_cast %38 : vector<32xf32> to vector<32x1xf32>
    %40 = vector.broadcast %39 : vector<32x1xf32> to vector<32x8xf32>
    %41 = arith.subf %37, %40 : vector<32x8xf32>
    %42 = math.exp %41 : vector<32x8xf32>
    %cst_18 = arith.constant dense<0.000000e+00> : vector<32xf32>
    %43 = vector.multi_reduction <add>, %42, %cst_18 [1] : vector<32x8xf32> to vector<32xf32>
    %44 = vector.shape_cast %43 : vector<32xf32> to vector<32x1xf32>
    %45 = tpu.reciprocal %44 {approx = true} : vector<32x1xf32> -> vector<32x1xf32>
    %46 = vector.broadcast %45 : vector<32x1xf32> to vector<32x8xf32>
    %47 = arith.mulf %42, %46 : vector<32x8xf32>
    %48 = arith.truncf %47 : vector<32x8xf32> to vector<32x8xbf16>
    %49 = vector.broadcast %34 : vector<1x128xbf16> to vector<8x128xbf16>
    %50 = arith.mulf %13, %49 : vector<8x128xbf16>
    %cst_19 = arith.constant dense<0.000000e+00> : vector<32x128xf32>
    %51 = tpu.matmul %48, %50, %cst_19 {dimension_numbers = #tpu.dot_dimension_numbers<[1], [0], [0], [1], [0, 0, 1, 1], [], []>} : vector<32x8xbf16>, vector<8x128xbf16>, vector<32x128xf32> -> vector<32x128xf32>
    %52 = arith.addf %33, %51 : vector<32x128xf32>
    %c2 = arith.constant 2 : index
    %c0_20 = arith.constant 0 : index
    %53 = vector.load %arg13[%c2, %c0_20] : memref<16x128xbf16, #tpu.memory_space<vmem>>, vector<1x128xbf16>
    %54 = vector.broadcast %53 : vector<1x128xbf16> to vector<8x128xbf16>
    %55 = arith.mulf %12, %54 : vector<8x128xbf16>
    %cst_21 = arith.constant dense<0.000000e+00> : vector<32x8xf32>
    %56 = tpu.matmul %11, %55, %cst_21 {dimension_numbers = #tpu.dot_dimension_numbers<[1], [1], [0], [0], [0, 0, 1, 0], [], []>} : vector<32x128xbf16>, vector<8x128xbf16>, vector<32x8xf32> -> vector<32x8xf32>
    %cst_22 = arith.constant dense<0xFF800000> : vector<32xf32>
    %57 = vector.multi_reduction <maximumf>, %56, %cst_22 [1] : vector<32x8xf32> to vector<32xf32>
    %58 = vector.shape_cast %57 : vector<32xf32> to vector<32x1xf32>
    %59 = vector.broadcast %58 : vector<32x1xf32> to vector<32x8xf32>
    %60 = arith.subf %56, %59 : vector<32x8xf32>
    %61 = math.exp %60 : vector<32x8xf32>
    %cst_23 = arith.constant dense<0.000000e+00> : vector<32xf32>
    %62 = vector.multi_reduction <add>, %61, %cst_23 [1] : vector<32x8xf32> to vector<32xf32>
    %63 = vector.shape_cast %62 : vector<32xf32> to vector<32x1xf32>
    %64 = tpu.reciprocal %63 {approx = true} : vector<32x1xf32> -> vector<32x1xf32>
    %65 = vector.broadcast %64 : vector<32x1xf32> to vector<32x8xf32>
    %66 = arith.mulf %61, %65 : vector<32x8xf32>
    %67 = arith.truncf %66 : vector<32x8xf32> to vector<32x8xbf16>
    %68 = vector.broadcast %53 : vector<1x128xbf16> to vector<8x128xbf16>
    %69 = arith.mulf %13, %68 : vector<8x128xbf16>
    %cst_24 = arith.constant dense<0.000000e+00> : vector<32x128xf32>
    %70 = tpu.matmul %67, %69, %cst_24 {dimension_numbers = #tpu.dot_dimension_numbers<[1], [0], [0], [1], [0, 0, 1, 1], [], []>} : vector<32x8xbf16>, vector<8x128xbf16>, vector<32x128xf32> -> vector<32x128xf32>
    %71 = arith.addf %52, %70 : vector<32x128xf32>
    %c3 = arith.constant 3 : index
    %c0_25 = arith.constant 0 : index
    %72 = vector.load %arg13[%c3, %c0_25] : memref<16x128xbf16, #tpu.memory_space<vmem>>, vector<1x128xbf16>
    %73 = vector.broadcast %72 : vector<1x128xbf16> to vector<8x128xbf16>
    %74 = arith.mulf %12, %73 : vector<8x128xbf16>
    %cst_26 = arith.constant dense<0.000000e+00> : vector<32x8xf32>
    %75 = tpu.matmul %11, %74, %cst_26 {dimension_numbers = #tpu.dot_dimension_numbers<[1], [1], [0], [0], [0, 0, 1, 0], [], []>} : vector<32x128xbf16>, vector<8x128xbf16>, vector<32x8xf32> -> vector<32x8xf32>
    %cst_27 = arith.constant dense<0xFF800000> : vector<32xf32>
    %76 = vector.multi_reduction <maximumf>, %75, %cst_27 [1] : vector<32x8xf32> to vector<32xf32>
    %77 = vector.shape_cast %76 : vector<32xf32> to vector<32x1xf32>
    %78 = vector.broadcast %77 : vector<32x1xf32> to vector<32x8xf32>
    %79 = arith.subf %75, %78 : vector<32x8xf32>
    %80 = math.exp %79 : vector<32x8xf32>
    %cst_28 = arith.constant dense<0.000000e+00> : vector<32xf32>
    %81 = vector.multi_reduction <add>, %80, %cst_28 [1] : vector<32x8xf32> to vector<32xf32>
    %82 = vector.shape_cast %81 : vector<32xf32> to vector<32x1xf32>
    %83 = tpu.reciprocal %82 {approx = true} : vector<32x1xf32> -> vector<32x1xf32>
    %84 = vector.broadcast %83 : vector<32x1xf32> to vector<32x8xf32>
    %85 = arith.mulf %80, %84 : vector<32x8xf32>
    %86 = arith.truncf %85 : vector<32x8xf32> to vector<32x8xbf16>
    %87 = vector.broadcast %72 : vector<1x128xbf16> to vector<8x128xbf16>
    %88 = arith.mulf %13, %87 : vector<8x128xbf16>
    %cst_29 = arith.constant dense<0.000000e+00> : vector<32x128xf32>
    %89 = tpu.matmul %86, %88, %cst_29 {dimension_numbers = #tpu.dot_dimension_numbers<[1], [0], [0], [1], [0, 0, 1, 1], [], []>} : vector<32x8xbf16>, vector<8x128xbf16>, vector<32x128xf32> -> vector<32x128xf32>
    %90 = arith.addf %71, %89 : vector<32x128xf32>
    %c4 = arith.constant 4 : index
    %c0_30 = arith.constant 0 : index
    %91 = vector.load %arg13[%c4, %c0_30] : memref<16x128xbf16, #tpu.memory_space<vmem>>, vector<1x128xbf16>
    %92 = vector.broadcast %91 : vector<1x128xbf16> to vector<8x128xbf16>
    %93 = arith.mulf %12, %92 : vector<8x128xbf16>
    %cst_31 = arith.constant dense<0.000000e+00> : vector<32x8xf32>
    %94 = tpu.matmul %11, %93, %cst_31 {dimension_numbers = #tpu.dot_dimension_numbers<[1], [1], [0], [0], [0, 0, 1, 0], [], []>} : vector<32x128xbf16>, vector<8x128xbf16>, vector<32x8xf32> -> vector<32x8xf32>
    %cst_32 = arith.constant dense<0xFF800000> : vector<32xf32>
    %95 = vector.multi_reduction <maximumf>, %94, %cst_32 [1] : vector<32x8xf32> to vector<32xf32>
    %96 = vector.shape_cast %95 : vector<32xf32> to vector<32x1xf32>
    %97 = vector.broadcast %96 : vector<32x1xf32> to vector<32x8xf32>
    %98 = arith.subf %94, %97 : vector<32x8xf32>
    %99 = math.exp %98 : vector<32x8xf32>
    %cst_33 = arith.constant dense<0.000000e+00> : vector<32xf32>
    %100 = vector.multi_reduction <add>, %99, %cst_33 [1] : vector<32x8xf32> to vector<32xf32>
    %101 = vector.shape_cast %100 : vector<32xf32> to vector<32x1xf32>
    %102 = tpu.reciprocal %101 {approx = true} : vector<32x1xf32> -> vector<32x1xf32>
    %103 = vector.broadcast %102 : vector<32x1xf32> to vector<32x8xf32>
    %104 = arith.mulf %99, %103 : vector<32x8xf32>
    %105 = arith.truncf %104 : vector<32x8xf32> to vector<32x8xbf16>
    %106 = vector.broadcast %91 : vector<1x128xbf16> to vector<8x128xbf16>
    %107 = arith.mulf %13, %106 : vector<8x128xbf16>
    %cst_34 = arith.constant dense<0.000000e+00> : vector<32x128xf32>
    %108 = tpu.matmul %105, %107, %cst_34 {dimension_numbers = #tpu.dot_dimension_numbers<[1], [0], [0], [1], [0, 0, 1, 1], [], []>} : vector<32x8xbf16>, vector<8x128xbf16>, vector<32x128xf32> -> vector<32x128xf32>
    %109 = arith.addf %90, %108 : vector<32x128xf32>
    %c5 = arith.constant 5 : index
    %c0_35 = arith.constant 0 : index
    %110 = vector.load %arg13[%c5, %c0_35] : memref<16x128xbf16, #tpu.memory_space<vmem>>, vector<1x128xbf16>
    %111 = vector.broadcast %110 : vector<1x128xbf16> to vector<8x128xbf16>
    %112 = arith.mulf %12, %111 : vector<8x128xbf16>
    %cst_36 = arith.constant dense<0.000000e+00> : vector<32x8xf32>
    %113 = tpu.matmul %11, %112, %cst_36 {dimension_numbers = #tpu.dot_dimension_numbers<[1], [1], [0], [0], [0, 0, 1, 0], [], []>} : vector<32x128xbf16>, vector<8x128xbf16>, vector<32x8xf32> -> vector<32x8xf32>
    %cst_37 = arith.constant dense<0xFF800000> : vector<32xf32>
    %114 = vector.multi_reduction <maximumf>, %113, %cst_37 [1] : vector<32x8xf32> to vector<32xf32>
    %115 = vector.shape_cast %114 : vector<32xf32> to vector<32x1xf32>
    %116 = vector.broadcast %115 : vector<32x1xf32> to vector<32x8xf32>
    %117 = arith.subf %113, %116 : vector<32x8xf32>
    %118 = math.exp %117 : vector<32x8xf32>
    %cst_38 = arith.constant dense<0.000000e+00> : vector<32xf32>
    %119 = vector.multi_reduction <add>, %118, %cst_38 [1] : vector<32x8xf32> to vector<32xf32>
    %120 = vector.shape_cast %119 : vector<32xf32> to vector<32x1xf32>
    %121 = tpu.reciprocal %120 {approx = true} : vector<32x1xf32> -> vector<32x1xf32>
    %122 = vector.broadcast %121 : vector<32x1xf32> to vector<32x8xf32>
    %123 = arith.mulf %118, %122 : vector<32x8xf32>
    %124 = arith.truncf %123 : vector<32x8xf32> to vector<32x8xbf16>
    %125 = vector.broadcast %110 : vector<1x128xbf16> to vector<8x128xbf16>
    %126 = arith.mulf %13, %125 : vector<8x128xbf16>
    %cst_39 = arith.constant dense<0.000000e+00> : vector<32x128xf32>
    %127 = tpu.matmul %124, %126, %cst_39 {dimension_numbers = #tpu.dot_dimension_numbers<[1], [0], [0], [1], [0, 0, 1, 1], [], []>} : vector<32x8xbf16>, vector<8x128xbf16>, vector<32x128xf32> -> vector<32x128xf32>
    %128 = arith.addf %109, %127 : vector<32x128xf32>
    %c6 = arith.constant 6 : index
    %c0_40 = arith.constant 0 : index
    %129 = vector.load %arg13[%c6, %c0_40] : memref<16x128xbf16, #tpu.memory_space<vmem>>, vector<1x128xbf16>
    %130 = vector.broadcast %129 : vector<1x128xbf16> to vector<8x128xbf16>
    %131 = arith.mulf %12, %130 : vector<8x128xbf16>
    %cst_41 = arith.constant dense<0.000000e+00> : vector<32x8xf32>
    %132 = tpu.matmul %11, %131, %cst_41 {dimension_numbers = #tpu.dot_dimension_numbers<[1], [1], [0], [0], [0, 0, 1, 0], [], []>} : vector<32x128xbf16>, vector<8x128xbf16>, vector<32x8xf32> -> vector<32x8xf32>
    %cst_42 = arith.constant dense<0xFF800000> : vector<32xf32>
    %133 = vector.multi_reduction <maximumf>, %132, %cst_42 [1] : vector<32x8xf32> to vector<32xf32>
    %134 = vector.shape_cast %133 : vector<32xf32> to vector<32x1xf32>
    %135 = vector.broadcast %134 : vector<32x1xf32> to vector<32x8xf32>
    %136 = arith.subf %132, %135 : vector<32x8xf32>
    %137 = math.exp %136 : vector<32x8xf32>
    %cst_43 = arith.constant dense<0.000000e+00> : vector<32xf32>
    %138 = vector.multi_reduction <add>, %137, %cst_43 [1] : vector<32x8xf32> to vector<32xf32>
    %139 = vector.shape_cast %138 : vector<32xf32> to vector<32x1xf32>
    %140 = tpu.reciprocal %139 {approx = true} : vector<32x1xf32> -> vector<32x1xf32>
    %141 = vector.broadcast %140 : vector<32x1xf32> to vector<32x8xf32>
    %142 = arith.mulf %137, %141 : vector<32x8xf32>
    %143 = arith.truncf %142 : vector<32x8xf32> to vector<32x8xbf16>
    %144 = vector.broadcast %129 : vector<1x128xbf16> to vector<8x128xbf16>
    %145 = arith.mulf %13, %144 : vector<8x128xbf16>
    %cst_44 = arith.constant dense<0.000000e+00> : vector<32x128xf32>
    %146 = tpu.matmul %143, %145, %cst_44 {dimension_numbers = #tpu.dot_dimension_numbers<[1], [0], [0], [1], [0, 0, 1, 1], [], []>} : vector<32x8xbf16>, vector<8x128xbf16>, vector<32x128xf32> -> vector<32x128xf32>
    %147 = arith.addf %128, %146 : vector<32x128xf32>
    %c7 = arith.constant 7 : index
    %c0_45 = arith.constant 0 : index
    %148 = vector.load %arg13[%c7, %c0_45] : memref<16x128xbf16, #tpu.memory_space<vmem>>, vector<1x128xbf16>
    %149 = vector.broadcast %148 : vector<1x128xbf16> to vector<8x128xbf16>
    %150 = arith.mulf %12, %149 : vector<8x128xbf16>
    %cst_46 = arith.constant dense<0.000000e+00> : vector<32x8xf32>
    %151 = tpu.matmul %11, %150, %cst_46 {dimension_numbers = #tpu.dot_dimension_numbers<[1], [1], [0], [0], [0, 0, 1, 0], [], []>} : vector<32x128xbf16>, vector<8x128xbf16>, vector<32x8xf32> -> vector<32x8xf32>
    %cst_47 = arith.constant dense<0xFF800000> : vector<32xf32>
    %152 = vector.multi_reduction <maximumf>, %151, %cst_47 [1] : vector<32x8xf32> to vector<32xf32>
    %153 = vector.shape_cast %152 : vector<32xf32> to vector<32x1xf32>
    %154 = vector.broadcast %153 : vector<32x1xf32> to vector<32x8xf32>
    %155 = arith.subf %151, %154 : vector<32x8xf32>
    %156 = math.exp %155 : vector<32x8xf32>
    %cst_48 = arith.constant dense<0.000000e+00> : vector<32xf32>
    %157 = vector.multi_reduction <add>, %156, %cst_48 [1] : vector<32x8xf32> to vector<32xf32>
    %158 = vector.shape_cast %157 : vector<32xf32> to vector<32x1xf32>
    %159 = tpu.reciprocal %158 {approx = true} : vector<32x1xf32> -> vector<32x1xf32>
    %160 = vector.broadcast %159 : vector<32x1xf32> to vector<32x8xf32>
    %161 = arith.mulf %156, %160 : vector<32x8xf32>
    %162 = arith.truncf %161 : vector<32x8xf32> to vector<32x8xbf16>
    %163 = vector.broadcast %148 : vector<1x128xbf16> to vector<8x128xbf16>
    %164 = arith.mulf %13, %163 : vector<8x128xbf16>
    %cst_49 = arith.constant dense<0.000000e+00> : vector<32x128xf32>
    %165 = tpu.matmul %162, %164, %cst_49 {dimension_numbers = #tpu.dot_dimension_numbers<[1], [0], [0], [1], [0, 0, 1, 1], [], []>} : vector<32x8xbf16>, vector<8x128xbf16>, vector<32x128xf32> -> vector<32x128xf32>
    %166 = arith.addf %147, %165 : vector<32x128xf32>
    %c8 = arith.constant 8 : index
    %c0_50 = arith.constant 0 : index
    %167 = vector.load %arg13[%c8, %c0_50] : memref<16x128xbf16, #tpu.memory_space<vmem>>, vector<1x128xbf16>
    %168 = vector.broadcast %167 : vector<1x128xbf16> to vector<8x128xbf16>
    %169 = arith.mulf %12, %168 : vector<8x128xbf16>
    %cst_51 = arith.constant dense<0.000000e+00> : vector<32x8xf32>
    %170 = tpu.matmul %11, %169, %cst_51 {dimension_numbers = #tpu.dot_dimension_numbers<[1], [1], [0], [0], [0, 0, 1, 0], [], []>} : vector<32x128xbf16>, vector<8x128xbf16>, vector<32x8xf32> -> vector<32x8xf32>
    %cst_52 = arith.constant dense<0xFF800000> : vector<32xf32>
    %171 = vector.multi_reduction <maximumf>, %170, %cst_52 [1] : vector<32x8xf32> to vector<32xf32>
    %172 = vector.shape_cast %171 : vector<32xf32> to vector<32x1xf32>
    %173 = vector.broadcast %172 : vector<32x1xf32> to vector<32x8xf32>
    %174 = arith.subf %170, %173 : vector<32x8xf32>
    %175 = math.exp %174 : vector<32x8xf32>
    %cst_53 = arith.constant dense<0.000000e+00> : vector<32xf32>
    %176 = vector.multi_reduction <add>, %175, %cst_53 [1] : vector<32x8xf32> to vector<32xf32>
    %177 = vector.shape_cast %176 : vector<32xf32> to vector<32x1xf32>
    %178 = tpu.reciprocal %177 {approx = true} : vector<32x1xf32> -> vector<32x1xf32>
    %179 = vector.broadcast %178 : vector<32x1xf32> to vector<32x8xf32>
    %180 = arith.mulf %175, %179 : vector<32x8xf32>
    %181 = arith.truncf %180 : vector<32x8xf32> to vector<32x8xbf16>
    %182 = vector.broadcast %167 : vector<1x128xbf16> to vector<8x128xbf16>
    %183 = arith.mulf %13, %182 : vector<8x128xbf16>
    %cst_54 = arith.constant dense<0.000000e+00> : vector<32x128xf32>
    %184 = tpu.matmul %181, %183, %cst_54 {dimension_numbers = #tpu.dot_dimension_numbers<[1], [0], [0], [1], [0, 0, 1, 1], [], []>} : vector<32x8xbf16>, vector<8x128xbf16>, vector<32x128xf32> -> vector<32x128xf32>
    %185 = arith.addf %166, %184 : vector<32x128xf32>
    %c9 = arith.constant 9 : index
    %c0_55 = arith.constant 0 : index
    %186 = vector.load %arg13[%c9, %c0_55] : memref<16x128xbf16, #tpu.memory_space<vmem>>, vector<1x128xbf16>
    %187 = vector.broadcast %186 : vector<1x128xbf16> to vector<8x128xbf16>
    %188 = arith.mulf %12, %187 : vector<8x128xbf16>
    %cst_56 = arith.constant dense<0.000000e+00> : vector<32x8xf32>
    %189 = tpu.matmul %11, %188, %cst_56 {dimension_numbers = #tpu.dot_dimension_numbers<[1], [1], [0], [0], [0, 0, 1, 0], [], []>} : vector<32x128xbf16>, vector<8x128xbf16>, vector<32x8xf32> -> vector<32x8xf32>
    %cst_57 = arith.constant dense<0xFF800000> : vector<32xf32>
    %190 = vector.multi_reduction <maximumf>, %189, %cst_57 [1] : vector<32x8xf32> to vector<32xf32>
    %191 = vector.shape_cast %190 : vector<32xf32> to vector<32x1xf32>
    %192 = vector.broadcast %191 : vector<32x1xf32> to vector<32x8xf32>
    %193 = arith.subf %189, %192 : vector<32x8xf32>
    %194 = math.exp %193 : vector<32x8xf32>
    %cst_58 = arith.constant dense<0.000000e+00> : vector<32xf32>
    %195 = vector.multi_reduction <add>, %194, %cst_58 [1] : vector<32x8xf32> to vector<32xf32>
    %196 = vector.shape_cast %195 : vector<32xf32> to vector<32x1xf32>
    %197 = tpu.reciprocal %196 {approx = true} : vector<32x1xf32> -> vector<32x1xf32>
    %198 = vector.broadcast %197 : vector<32x1xf32> to vector<32x8xf32>
    %199 = arith.mulf %194, %198 : vector<32x8xf32>
    %200 = arith.truncf %199 : vector<32x8xf32> to vector<32x8xbf16>
    %201 = vector.broadcast %186 : vector<1x128xbf16> to vector<8x128xbf16>
    %202 = arith.mulf %13, %201 : vector<8x128xbf16>
    %cst_59 = arith.constant dense<0.000000e+00> : vector<32x128xf32>
    %203 = tpu.matmul %200, %202, %cst_59 {dimension_numbers = #tpu.dot_dimension_numbers<[1], [0], [0], [1], [0, 0, 1, 1], [], []>} : vector<32x8xbf16>, vector<8x128xbf16>, vector<32x128xf32> -> vector<32x128xf32>
    %204 = arith.addf %185, %203 : vector<32x128xf32>
    %c10 = arith.constant 10 : index
    %c0_60 = arith.constant 0 : index
    %205 = vector.load %arg13[%c10, %c0_60] : memref<16x128xbf16, #tpu.memory_space<vmem>>, vector<1x128xbf16>
    %206 = vector.broadcast %205 : vector<1x128xbf16> to vector<8x128xbf16>
    %207 = arith.mulf %12, %206 : vector<8x128xbf16>
    %cst_61 = arith.constant dense<0.000000e+00> : vector<32x8xf32>
    %208 = tpu.matmul %11, %207, %cst_61 {dimension_numbers = #tpu.dot_dimension_numbers<[1], [1], [0], [0], [0, 0, 1, 0], [], []>} : vector<32x128xbf16>, vector<8x128xbf16>, vector<32x8xf32> -> vector<32x8xf32>
    %cst_62 = arith.constant dense<0xFF800000> : vector<32xf32>
    %209 = vector.multi_reduction <maximumf>, %208, %cst_62 [1] : vector<32x8xf32> to vector<32xf32>
    %210 = vector.shape_cast %209 : vector<32xf32> to vector<32x1xf32>
    %211 = vector.broadcast %210 : vector<32x1xf32> to vector<32x8xf32>
    %212 = arith.subf %208, %211 : vector<32x8xf32>
    %213 = math.exp %212 : vector<32x8xf32>
    %cst_63 = arith.constant dense<0.000000e+00> : vector<32xf32>
    %214 = vector.multi_reduction <add>, %213, %cst_63 [1] : vector<32x8xf32> to vector<32xf32>
    %215 = vector.shape_cast %214 : vector<32xf32> to vector<32x1xf32>
    %216 = tpu.reciprocal %215 {approx = true} : vector<32x1xf32> -> vector<32x1xf32>
    %217 = vector.broadcast %216 : vector<32x1xf32> to vector<32x8xf32>
    %218 = arith.mulf %213, %217 : vector<32x8xf32>
    %219 = arith.truncf %218 : vector<32x8xf32> to vector<32x8xbf16>
    %220 = vector.broadcast %205 : vector<1x128xbf16> to vector<8x128xbf16>
    %221 = arith.mulf %13, %220 : vector<8x128xbf16>
    %cst_64 = arith.constant dense<0.000000e+00> : vector<32x128xf32>
    %222 = tpu.matmul %219, %221, %cst_64 {dimension_numbers = #tpu.dot_dimension_numbers<[1], [0], [0], [1], [0, 0, 1, 1], [], []>} : vector<32x8xbf16>, vector<8x128xbf16>, vector<32x128xf32> -> vector<32x128xf32>
    %223 = arith.addf %204, %222 : vector<32x128xf32>
    %c11 = arith.constant 11 : index
    %c0_65 = arith.constant 0 : index
    %224 = vector.load %arg13[%c11, %c0_65] : memref<16x128xbf16, #tpu.memory_space<vmem>>, vector<1x128xbf16>
    %225 = vector.broadcast %224 : vector<1x128xbf16> to vector<8x128xbf16>
    %226 = arith.mulf %12, %225 : vector<8x128xbf16>
    %cst_66 = arith.constant dense<0.000000e+00> : vector<32x8xf32>
    %227 = tpu.matmul %11, %226, %cst_66 {dimension_numbers = #tpu.dot_dimension_numbers<[1], [1], [0], [0], [0, 0, 1, 0], [], []>} : vector<32x128xbf16>, vector<8x128xbf16>, vector<32x8xf32> -> vector<32x8xf32>
    %cst_67 = arith.constant dense<0xFF800000> : vector<32xf32>
    %228 = vector.multi_reduction <maximumf>, %227, %cst_67 [1] : vector<32x8xf32> to vector<32xf32>
    %229 = vector.shape_cast %228 : vector<32xf32> to vector<32x1xf32>
    %230 = vector.broadcast %229 : vector<32x1xf32> to vector<32x8xf32>
    %231 = arith.subf %227, %230 : vector<32x8xf32>
    %232 = math.exp %231 : vector<32x8xf32>
    %cst_68 = arith.constant dense<0.000000e+00> : vector<32xf32>
    %233 = vector.multi_reduction <add>, %232, %cst_68 [1] : vector<32x8xf32> to vector<32xf32>
    %234 = vector.shape_cast %233 : vector<32xf32> to vector<32x1xf32>
    %235 = tpu.reciprocal %234 {approx = true} : vector<32x1xf32> -> vector<32x1xf32>
    %236 = vector.broadcast %235 : vector<32x1xf32> to vector<32x8xf32>
    %237 = arith.mulf %232, %236 : vector<32x8xf32>
    %238 = arith.truncf %237 : vector<32x8xf32> to vector<32x8xbf16>
    %239 = vector.broadcast %224 : vector<1x128xbf16> to vector<8x128xbf16>
    %240 = arith.mulf %13, %239 : vector<8x128xbf16>
    %cst_69 = arith.constant dense<0.000000e+00> : vector<32x128xf32>
    %241 = tpu.matmul %238, %240, %cst_69 {dimension_numbers = #tpu.dot_dimension_numbers<[1], [0], [0], [1], [0, 0, 1, 1], [], []>} : vector<32x8xbf16>, vector<8x128xbf16>, vector<32x128xf32> -> vector<32x128xf32>
    %242 = arith.addf %223, %241 : vector<32x128xf32>
    %c12 = arith.constant 12 : index
    %c0_70 = arith.constant 0 : index
    %243 = vector.load %arg13[%c12, %c0_70] : memref<16x128xbf16, #tpu.memory_space<vmem>>, vector<1x128xbf16>
    %244 = vector.broadcast %243 : vector<1x128xbf16> to vector<8x128xbf16>
    %245 = arith.mulf %12, %244 : vector<8x128xbf16>
    %cst_71 = arith.constant dense<0.000000e+00> : vector<32x8xf32>
    %246 = tpu.matmul %11, %245, %cst_71 {dimension_numbers = #tpu.dot_dimension_numbers<[1], [1], [0], [0], [0, 0, 1, 0], [], []>} : vector<32x128xbf16>, vector<8x128xbf16>, vector<32x8xf32> -> vector<32x8xf32>
    %cst_72 = arith.constant dense<0xFF800000> : vector<32xf32>
    %247 = vector.multi_reduction <maximumf>, %246, %cst_72 [1] : vector<32x8xf32> to vector<32xf32>
    %248 = vector.shape_cast %247 : vector<32xf32> to vector<32x1xf32>
    %249 = vector.broadcast %248 : vector<32x1xf32> to vector<32x8xf32>
    %250 = arith.subf %246, %249 : vector<32x8xf32>
    %251 = math.exp %250 : vector<32x8xf32>
    %cst_73 = arith.constant dense<0.000000e+00> : vector<32xf32>
    %252 = vector.multi_reduction <add>, %251, %cst_73 [1] : vector<32x8xf32> to vector<32xf32>
    %253 = vector.shape_cast %252 : vector<32xf32> to vector<32x1xf32>
    %254 = tpu.reciprocal %253 {approx = true} : vector<32x1xf32> -> vector<32x1xf32>
    %255 = vector.broadcast %254 : vector<32x1xf32> to vector<32x8xf32>
    %256 = arith.mulf %251, %255 : vector<32x8xf32>
    %257 = arith.truncf %256 : vector<32x8xf32> to vector<32x8xbf16>
    %258 = vector.broadcast %243 : vector<1x128xbf16> to vector<8x128xbf16>
    %259 = arith.mulf %13, %258 : vector<8x128xbf16>
    %cst_74 = arith.constant dense<0.000000e+00> : vector<32x128xf32>
    %260 = tpu.matmul %257, %259, %cst_74 {dimension_numbers = #tpu.dot_dimension_numbers<[1], [0], [0], [1], [0, 0, 1, 1], [], []>} : vector<32x8xbf16>, vector<8x128xbf16>, vector<32x128xf32> -> vector<32x128xf32>
    %261 = arith.addf %242, %260 : vector<32x128xf32>
    %c13 = arith.constant 13 : index
    %c0_75 = arith.constant 0 : index
    %262 = vector.load %arg13[%c13, %c0_75] : memref<16x128xbf16, #tpu.memory_space<vmem>>, vector<1x128xbf16>
    %263 = vector.broadcast %262 : vector<1x128xbf16> to vector<8x128xbf16>
    %264 = arith.mulf %12, %263 : vector<8x128xbf16>
    %cst_76 = arith.constant dense<0.000000e+00> : vector<32x8xf32>
    %265 = tpu.matmul %11, %264, %cst_76 {dimension_numbers = #tpu.dot_dimension_numbers<[1], [1], [0], [0], [0, 0, 1, 0], [], []>} : vector<32x128xbf16>, vector<8x128xbf16>, vector<32x8xf32> -> vector<32x8xf32>
    %cst_77 = arith.constant dense<0xFF800000> : vector<32xf32>
    %266 = vector.multi_reduction <maximumf>, %265, %cst_77 [1] : vector<32x8xf32> to vector<32xf32>
    %267 = vector.shape_cast %266 : vector<32xf32> to vector<32x1xf32>
    %268 = vector.broadcast %267 : vector<32x1xf32> to vector<32x8xf32>
    %269 = arith.subf %265, %268 : vector<32x8xf32>
    %270 = math.exp %269 : vector<32x8xf32>
    %cst_78 = arith.constant dense<0.000000e+00> : vector<32xf32>
    %271 = vector.multi_reduction <add>, %270, %cst_78 [1] : vector<32x8xf32> to vector<32xf32>
    %272 = vector.shape_cast %271 : vector<32xf32> to vector<32x1xf32>
    %273 = tpu.reciprocal %272 {approx = true} : vector<32x1xf32> -> vector<32x1xf32>
    %274 = vector.broadcast %273 : vector<32x1xf32> to vector<32x8xf32>
    %275 = arith.mulf %270, %274 : vector<32x8xf32>
    %276 = arith.truncf %275 : vector<32x8xf32> to vector<32x8xbf16>
    %277 = vector.broadcast %262 : vector<1x128xbf16> to vector<8x128xbf16>
    %278 = arith.mulf %13, %277 : vector<8x128xbf16>
    %cst_79 = arith.constant dense<0.000000e+00> : vector<32x128xf32>
    %279 = tpu.matmul %276, %278, %cst_79 {dimension_numbers = #tpu.dot_dimension_numbers<[1], [0], [0], [1], [0, 0, 1, 1], [], []>} : vector<32x8xbf16>, vector<8x128xbf16>, vector<32x128xf32> -> vector<32x128xf32>
    %280 = arith.addf %261, %279 : vector<32x128xf32>
    %c14 = arith.constant 14 : index
    %c0_80 = arith.constant 0 : index
    %281 = vector.load %arg13[%c14, %c0_80] : memref<16x128xbf16, #tpu.memory_space<vmem>>, vector<1x128xbf16>
    %282 = vector.broadcast %281 : vector<1x128xbf16> to vector<8x128xbf16>
    %283 = arith.mulf %12, %282 : vector<8x128xbf16>
    %cst_81 = arith.constant dense<0.000000e+00> : vector<32x8xf32>
    %284 = tpu.matmul %11, %283, %cst_81 {dimension_numbers = #tpu.dot_dimension_numbers<[1], [1], [0], [0], [0, 0, 1, 0], [], []>} : vector<32x128xbf16>, vector<8x128xbf16>, vector<32x8xf32> -> vector<32x8xf32>
    %cst_82 = arith.constant dense<0xFF800000> : vector<32xf32>
    %285 = vector.multi_reduction <maximumf>, %284, %cst_82 [1] : vector<32x8xf32> to vector<32xf32>
    %286 = vector.shape_cast %285 : vector<32xf32> to vector<32x1xf32>
    %287 = vector.broadcast %286 : vector<32x1xf32> to vector<32x8xf32>
    %288 = arith.subf %284, %287 : vector<32x8xf32>
    %289 = math.exp %288 : vector<32x8xf32>
    %cst_83 = arith.constant dense<0.000000e+00> : vector<32xf32>
    %290 = vector.multi_reduction <add>, %289, %cst_83 [1] : vector<32x8xf32> to vector<32xf32>
    %291 = vector.shape_cast %290 : vector<32xf32> to vector<32x1xf32>
    %292 = tpu.reciprocal %291 {approx = true} : vector<32x1xf32> -> vector<32x1xf32>
    %293 = vector.broadcast %292 : vector<32x1xf32> to vector<32x8xf32>
    %294 = arith.mulf %289, %293 : vector<32x8xf32>
    %295 = arith.truncf %294 : vector<32x8xf32> to vector<32x8xbf16>
    %296 = vector.broadcast %281 : vector<1x128xbf16> to vector<8x128xbf16>
    %297 = arith.mulf %13, %296 : vector<8x128xbf16>
    %cst_84 = arith.constant dense<0.000000e+00> : vector<32x128xf32>
    %298 = tpu.matmul %295, %297, %cst_84 {dimension_numbers = #tpu.dot_dimension_numbers<[1], [0], [0], [1], [0, 0, 1, 1], [], []>} : vector<32x8xbf16>, vector<8x128xbf16>, vector<32x128xf32> -> vector<32x128xf32>
    %299 = arith.addf %280, %298 : vector<32x128xf32>
    %c15 = arith.constant 15 : index
    %c0_85 = arith.constant 0 : index
    %300 = vector.load %arg13[%c15, %c0_85] : memref<16x128xbf16, #tpu.memory_space<vmem>>, vector<1x128xbf16>
    %301 = vector.broadcast %300 : vector<1x128xbf16> to vector<8x128xbf16>
    %302 = arith.mulf %12, %301 : vector<8x128xbf16>
    %cst_86 = arith.constant dense<0.000000e+00> : vector<32x8xf32>
    %303 = tpu.matmul %11, %302, %cst_86 {dimension_numbers = #tpu.dot_dimension_numbers<[1], [1], [0], [0], [0, 0, 1, 0], [], []>} : vector<32x128xbf16>, vector<8x128xbf16>, vector<32x8xf32> -> vector<32x8xf32>
    %cst_87 = arith.constant dense<0xFF800000> : vector<32xf32>
    %304 = vector.multi_reduction <maximumf>, %303, %cst_87 [1] : vector<32x8xf32> to vector<32xf32>
    %305 = vector.shape_cast %304 : vector<32xf32> to vector<32x1xf32>
    %306 = vector.broadcast %305 : vector<32x1xf32> to vector<32x8xf32>
    %307 = arith.subf %303, %306 : vector<32x8xf32>
    %308 = math.exp %307 : vector<32x8xf32>
    %cst_88 = arith.constant dense<0.000000e+00> : vector<32xf32>
    %309 = vector.multi_reduction <add>, %308, %cst_88 [1] : vector<32x8xf32> to vector<32xf32>
    %310 = vector.shape_cast %309 : vector<32xf32> to vector<32x1xf32>
    %311 = tpu.reciprocal %310 {approx = true} : vector<32x1xf32> -> vector<32x1xf32>
    %312 = vector.broadcast %311 : vector<32x1xf32> to vector<32x8xf32>
    %313 = arith.mulf %308, %312 : vector<32x8xf32>
    %314 = arith.truncf %313 : vector<32x8xf32> to vector<32x8xbf16>
    %315 = vector.broadcast %300 : vector<1x128xbf16> to vector<8x128xbf16>
    %316 = arith.mulf %13, %315 : vector<8x128xbf16>
    %cst_89 = arith.constant dense<0.000000e+00> : vector<32x128xf32>
    %317 = tpu.matmul %314, %316, %cst_89 {dimension_numbers = #tpu.dot_dimension_numbers<[1], [0], [0], [1], [0, 0, 1, 1], [], []>} : vector<32x8xbf16>, vector<8x128xbf16>, vector<32x128xf32> -> vector<32x128xf32>
    %318 = arith.addf %299, %317 : vector<32x128xf32>
    %319 = arith.truncf %318 : vector<32x128xf32> to vector<32x128xbf16>
    %c0_90 = arith.constant 0 : index
    %c0_91 = arith.constant 0 : index
    %320 = vector.load %arg14[%c0_90, %c0_91] : memref<128x128xbf16, #tpu.memory_space<vmem>>, vector<128x128xbf16>
    %cst_92 = arith.constant dense<0.000000e+00> : vector<32x128xf32>
    %321 = tpu.matmul %319, %320, %cst_92 {dimension_numbers = #tpu.dot_dimension_numbers<[1], [0], [0], [1], [0, 0, 1, 1], [], []>} : vector<32x128xbf16>, vector<128x128xbf16>, vector<32x128xf32> -> vector<32x128xf32>
    %322 = arith.index_cast %4 : i32 to index
    %c0_93 = arith.constant 0 : index
    %323 = vector.load %arg18[%322, %c0_93] : memref<64x128xf32, #tpu.memory_space<vmem>>, vector<32x128xf32>
    %324 = arith.addf %321, %323 : vector<32x128xf32>
    %c0_94 = arith.constant 0 : index
    %c0_95 = arith.constant 0 : index
    %325 = vector.load %arg15[%c0_94, %c0_95] : memref<1x128xf32, #tpu.memory_space<vmem>>, vector<1x128xf32>
    %326 = vector.broadcast %325 : vector<1x128xf32> to vector<32x128xf32>
    %327 = arith.addf %324, %326 : vector<32x128xf32>
    %c0_96 = arith.constant 0 : index
    %c0_97 = arith.constant 0 : index
    %c0_98 = arith.constant 0 : index
    %328 = vector.load %arg16[%c0_96, %c0_97, %c0_98] : memref<1x32x128xf32, #tpu.memory_space<vmem>>, vector<1x32x128xf32>
    %329 = vector.shape_cast %328 : vector<1x32x128xf32> to vector<32x128xf32>
    %330 = vector.shape_cast %327 : vector<32x128xf32> to vector<1x32x128xf32>
    tpu.vector_store %arg16[%c0_96, %c0_97, %c0_98], %330 {strides = array<i32>} : memref<1x32x128xf32, #tpu.memory_space<vmem>>, vector<1x32x128xf32>,
    return
  }
  func.func @transform_0(%arg0: i32, %arg1: i32) -> (i32, i32, i32) {
    %c0_i32 = arith.constant 0 : i32
    %c0_i32_0 = arith.constant 0 : i32
    %c0_i32_1 = arith.constant 0 : i32
    return %arg0, %c0_i32, %c0_i32_0 : i32, i32, i32
  }
  func.func @transform_1(%arg0: i32, %arg1: i32) -> (i32, i32) {
    %c0_i32 = arith.constant 0 : i32
    %c0_i32_0 = arith.constant 0 : i32
    %c0_i32_1 = arith.constant 0 : i32
    return %c0_i32, %c0_i32_0 : i32, i32
  }
  func.func @transform_2(%arg0: i32, %arg1: i32) -> (i32, i32) {
    %c0_i32 = arith.constant 0 : i32
    %c0_i32_0 = arith.constant 0 : i32
    %c0_i32_1 = arith.constant 0 : i32
    return %c0_i32, %c0_i32_0 : i32, i32
  }
  func.func @transform_3(%arg0: i32, %arg1: i32) -> (i32, i32) {
    %c0_i32 = arith.constant 0 : i32
    %c0_i32_0 = arith.constant 0 : i32
    %c0_i32_1 = arith.constant 0 : i32
    return %c0_i32, %c0_i32_0 : i32, i32
  }
  func.func @transform_4(%arg0: i32, %arg1: i32) -> (i32, i32, i32) {
    %c0_i32 = arith.constant 0 : i32
    %c0_i32_0 = arith.constant 0 : i32
    %c0_i32_1 = arith.constant 0 : i32
    %c0_i32_2 = arith.constant 0 : i32
    return %c0_i32, %c0_i32_0, %c0_i32_1 : i32, i32, i32
  }
  func.func @transform_5(%arg0: i32, %arg1: i32) -> (i32, i32) {
    %c0_i32 = arith.constant 0 : i32
    %c0_i32_0 = arith.constant 0 : i32
    %c0_i32_1 = arith.constant 0 : i32
    return %c0_i32, %c0_i32_0 : i32, i32
  }
  func.func @transform_6(%arg0: i32, %arg1: i32) -> (i32, i32) {
    %c0_i32 = arith.constant 0 : i32
    %c0_i32_0 = arith.constant 0 : i32
    %c0_i32_1 = arith.constant 0 : i32
    return %c0_i32, %c0_i32_0 : i32, i32
  }
  func.func @transform_7(%arg0: i32, %arg1: i32) -> (i32, i32) {
    %c0_i32 = arith.constant 0 : i32
    %c0_i32_0 = arith.constant 0 : i32
    %c0_i32_1 = arith.constant 0 : i32
    return %c0_i32, %c0_i32_0 : i32, i32
  }
  func.func @transform_8(%arg0: i32, %arg1: i32) -> (i32, i32) {
    %c0_i32 = arith.constant 0 : i32
    %c0_i32_0 = arith.constant 0 : i32
    %c0_i32_1 = arith.constant 0 : i32
    return %c0_i32, %c0_i32_0 : i32, i32
  }
  func.func @transform_9(%arg0: i32, %arg1: i32) -> (i32, i32) {
    %c0_i32 = arith.constant 0 : i32
    %c0_i32_0 = arith.constant 0 : i32
    %c0_i32_1 = arith.constant 0 : i32
    return %c0_i32, %c0_i32_0 : i32, i32
  }
  func.func @transform_10(%arg0: i32, %arg1: i32) -> (i32, i32) {
    %c0_i32 = arith.constant 0 : i32
    %c0_i32_0 = arith.constant 0 : i32
    %c0_i32_1 = arith.constant 0 : i32
    return %c0_i32, %c0_i32_0 : i32, i32
  }
  func.func @transform_11(%arg0: i32, %arg1: i32) -> (i32, i32) {
    %c0_i32 = arith.constant 0 : i32
    %c0_i32_0 = arith.constant 0 : i32
    %c0_i32_1 = arith.constant 0 : i32
    return %c0_i32, %c0_i32_0 : i32, i32
  }
  func.func @transform_12(%arg0: i32, %arg1: i32) -> (i32, i32) {
    %c0_i32 = arith.constant 0 : i32
    %c0_i32_0 = arith.constant 0 : i32
    %c0_i32_1 = arith.constant 0 : i32
    return %c0_i32, %c0_i32_0 : i32, i32
  }
  func.func @transform_13(%arg0: i32, %arg1: i32) -> (i32, i32) {
    %c0_i32 = arith.constant 0 : i32
    %c0_i32_0 = arith.constant 0 : i32
    %c0_i32_1 = arith.constant 0 : i32
    return %c0_i32, %c0_i32_0 : i32, i32
  }
  func.func @transform_14(%arg0: i32, %arg1: i32) -> (i32, i32, i32) {
    %c0_i32 = arith.constant 0 : i32
    %c0_i32_0 = arith.constant 0 : i32
    return %arg0, %arg1, %c0_i32 : i32, i32, i32
  }
}

</mosaic_0001>

<llo_original>
// kernel: wave_attention.1
$region0: #{wave_attention.1}
  #allocation0 [shape = 'u32[]', space=smem, size = 0x4, offset = 0x4, fixed_abs, tag = 'smem constant byte address 0x4 - core index']
  #allocation1 [shape = 'u32[144,128]{1,0:T(1,128)}', space=vmem, size = 0x12000, scoped, tag = 'internal scratch']
  #allocation2 [shape = 'f32[96,32]{1,0:T(8,128)}', space=vmem, size = 0xc000, scoped, tag = 'scratch operand']
  #allocation3 [shape = 'f32[64,128]{1,0:T(8,128)}', space=vmem, size = 0x8000, scoped, tag = 'scratch operand']
  #allocation4 [shape = 'bf16[8,128]{1,0:T(8,128)(2,1)}', space=vmem, size = 0x800, scoped, tag = 'scratch operand']
  #allocation5 [shape = 'bf16[8,128]{1,0:T(8,128)(2,1)}', space=vmem, size = 0x800, scoped, tag = 'scratch operand']
  %s0 = inlined_call_operand.vmem [shape: f32[2,64,128], index: 0, kind: input, shape index: {}]
  %s1 = inlined_call_operand.vmem [shape: bf16[128,128], index: 1, kind: input, shape index: {}]
  %s2 = inlined_call_operand.vmem [shape: bf16[128,32], index: 2, kind: input, shape index: {}]
  %s3 = inlined_call_operand.vmem [shape: f32[1,32], index: 3, kind: input, shape index: {}]
  %s4 = inlined_call_operand.vmem [shape: bf16[9,32,32], index: 4, kind: input, shape index: {}]
  %s5 = inlined_call_operand.vmem [shape: f32[1,32], index: 5, kind: input, shape index: {}]
  %s6 = inlined_call_operand.vmem [shape: f32[16,64], index: 6, kind: input, shape index: {}]
  %s7 = inlined_call_operand.vmem [shape: f32[1,32], index: 7, kind: input, shape index: {}]
  %s8 = inlined_call_operand.vmem [shape: f32[1,32], index: 8, kind: input, shape index: {}]
  %s9 = inlined_call_operand.vmem [shape: bf16[32,32], index: 9, kind: input, shape index: {}]
  %s10 = inlined_call_operand.vmem [shape: bf16[32,128], index: 10, kind: input, shape index: {}]
  %s11 = inlined_call_operand.vmem [shape: bf16[16,128], index: 11, kind: input, shape index: {}]
  %s12 = inlined_call_operand.vmem [shape: bf16[128,128], index: 12, kind: input, shape index: {}]
  %s13 = inlined_call_operand.vmem [shape: f32[1,128], index: 13, kind: input, shape index: {}]
  %s14 = inlined_call_operand.vmem [shape: f32[2,64,128], index: 14, kind: output, shape index: {}]
  %s15 = sld [smem:[#allocation0]]
  $region93: #{wave_attention.1} parent=0
    _
  %s17 = ssub.s32 1, %s15
  %s18 = scalar_select 0, %s17, %s15
  loop: start=0, step=1, limit=6
  $region2: #{wave_attention.1} parent=0 // loop_pre_header
    _
  $region3: #{wave_attention.1} parent=0 // loop_header
    %s20 = sphi 0, %s24
    %p21 = scmp.ge.s32.totalorder %s20, 6
    %s27 = sphi 0, %s39
    %s28 = sphi 0, %s35
    %s29 = sphi 0, %s27
    %s30 = sphi 0, %s28
    %s31 = sphi 0, %s29
    %s32 = sphi 0, %s30
    %s42 = sphi 0, %s44
    %s45 = sphi 0, %s42
    %s46 = sphi 0, %s45
    %s62 = sphi 0, %s46
    %s66 = sphi 0, %s66
    %s68 = sphi 0, %s66
    %s69 = sphi 0, %s68
    %s83 = sphi 0, %s69
    %s87 = sphi 0, %s87
    %s89 = sphi 0, %s87
    %s90 = sphi 0, %s89
    %s104 = sphi 0, %s90
    %s108 = sphi 0, %s108
    %s110 = sphi 0, %s108
    %s111 = sphi 0, %s110
    %s125 = sphi 0, %s111
    %s129 = sphi 0, %s129
    %s131 = sphi 0, %s129
    %s132 = sphi 0, %s131
    %s146 = sphi 0, %s132
    %s150 = sphi 0, %s150
    %s152 = sphi 0, %s150
    %s153 = sphi 0, %s152
    %s167 = sphi 0, %s153
    %s171 = sphi 0, %s171
    %s173 = sphi 0, %s171
    %s174 = sphi 0, %s173
    %s188 = sphi 0, %s174
    %s192 = sphi 0, %s192
    %s194 = sphi 0, %s192
    %s195 = sphi 0, %s194
    %s209 = sphi 0, %s195
    %s213 = sphi 0, %s213
    %s215 = sphi 0, %s213
    %s216 = sphi 0, %s215
    %s230 = sphi 0, %s216
    %s234 = sphi 0, %s234
    %s236 = sphi 0, %s234
    %s237 = sphi 0, %s236
    %s251 = sphi 0, %s237
    %s255 = sphi 0, %s255
    %s257 = sphi 0, %s255
    %s258 = sphi 0, %s257
    %s272 = sphi 0, %s258
    %s276 = sphi 0, %s276
    %s278 = sphi 0, %s276
    %s279 = sphi 0, %s278
    %s293 = sphi 0, %s279
    %s297 = sphi 0, %s297
    %s299 = sphi 0, %s297
    %s300 = sphi 0, %s299
    %s314 = sphi 0, %s300
    %s318 = sphi 0, %s318
    %s320 = sphi 0, %s318
    %s321 = sphi 0, %s320
    %s335 = sphi 0, %s321
    %s343 = sphi 0, %s345
    %s346 = sphi 0, %s343
    %s347 = sphi 0, %s346
    %s363 = sphi 0, %s347
  $region4: #{wave_attention.1} parent=0 // loop_header_branch
    %23 = sbr.rel (%p21) target = $region8
  $region5: #{wave_attention.1} parent=0 // loop_body
    %s25 = ssub.s32 %s20, 1
    %s26 = ssub.s32 %s20, 2
    %s33 = sadd.s32 1, %s28
    %p34 = scmp.ge.s32.totalorder %s33, 2
    %s35 = scalar_select %p34, 0, %s33
    %s36 = sadd.s32 1, %s27
    %s37 = scalar_select %p34, %s36, %s27
    %p38 = scmp.ge.s32.totalorder %s37, 2
    %s39 = scalar_select %p38, 0, %s37
    %s40 = ssub.s32 %s27, %s39
    %p41 = scmp.eq.s32.totalorder %s40, 0
    %s43 = sadd.s32 %s42, 1
    %s44 = scalar_select %p41, %s42, %s43
    %p47 = pneg %p41
    %p48 = scmp.eq.s32.totalorder %s20, 3
    %p49 = por %p47, %p48
    %p50 = scmp.ne.s32.totalorder %s42, %s45
    %p51 = scmp.eq.s32.totalorder %s20, 0
    %p52 = por %p50, %p51
    %p53 = scmp.ne.s32.totalorder %s42, %s45
    %p54 = scmp.eq.s32.totalorder %s25, 3
    %p55 = por %p53, %p54
    %p56 = scmp.ne.s32.totalorder %s45, %s46
    %p57 = scmp.eq.s32.totalorder %s25, 0
    %p58 = por %p56, %p57
    %p59 = scmp.ne.s32.totalorder %s45, %s46
    %p60 = scmp.eq.s32.totalorder %s26, 3
    %p61 = por %p59, %p60
    %p63 = scmp.ne.s32.totalorder %s46, %s62
    %p64 = scmp.eq.s32.totalorder %s26, 0
    %p65 = por %p63, %p64
    %s67 = sadd.s32 %s66, 1
    %p70 = scmp.eq.s32.totalorder %s20, 3
    %p71 = scmp.ne.s32.totalorder %s66, %s68
    %p72 = scmp.eq.s32.totalorder %s20, 0
    %p73 = por %p71, %p72
    %p74 = scmp.ne.s32.totalorder %s66, %s68
    %p75 = scmp.eq.s32.totalorder %s25, 3
    %p76 = por %p74, %p75
    %p77 = scmp.ne.s32.totalorder %s68, %s69
    %p78 = scmp.eq.s32.totalorder %s25, 0
    %p79 = por %p77, %p78
    %p80 = scmp.ne.s32.totalorder %s68, %s69
    %p81 = scmp.eq.s32.totalorder %s26, 3
    %p82 = por %p80, %p81
    %p84 = scmp.ne.s32.totalorder %s69, %s83
    %p85 = scmp.eq.s32.totalorder %s26, 0
    %p86 = por %p84, %p85
    %s88 = sadd.s32 %s87, 1
    %p91 = scmp.eq.s32.totalorder %s20, 3
    %p92 = scmp.ne.s32.totalorder %s87, %s89
    %p93 = scmp.eq.s32.totalorder %s20, 0
    %p94 = por %p92, %p93
    %p95 = scmp.ne.s32.totalorder %s87, %s89
    %p96 = scmp.eq.s32.totalorder %s25, 3
    %p97 = por %p95, %p96
    %p98 = scmp.ne.s32.totalorder %s89, %s90
    %p99 = scmp.eq.s32.totalorder %s25, 0
    %p100 = por %p98, %p99
    %p101 = scmp.ne.s32.totalorder %s89, %s90
    %p102 = scmp.eq.s32.totalorder %s26, 3
    %p103 = por %p101, %p102
    %p105 = scmp.ne.s32.totalorder %s90, %s104
    %p106 = scmp.eq.s32.totalorder %s26, 0
    %p107 = por %p105, %p106
    %s109 = sadd.s32 %s108, 1
    %p112 = scmp.eq.s32.totalorder %s20, 3
    %p113 = scmp.ne.s32.totalorder %s108, %s110
    %p114 = scmp.eq.s32.totalorder %s20, 0
    %p115 = por %p113, %p114
    %p116 = scmp.ne.s32.totalorder %s108, %s110
    %p117 = scmp.eq.s32.totalorder %s25, 3
    %p118 = por %p116, %p117
    %p119 = scmp.ne.s32.totalorder %s110, %s111
    %p120 = scmp.eq.s32.totalorder %s25, 0
    %p121 = por %p119, %p120
    %p122 = scmp.ne.s32.totalorder %s110, %s111
    %p123 = scmp.eq.s32.totalorder %s26, 3
    %p124 = por %p122, %p123
    %p126 = scmp.ne.s32.totalorder %s111, %s125
    %p127 = scmp.eq.s32.totalorder %s26, 0
    %p128 = por %p126, %p127
    %s130 = sadd.s32 %s129, 1
    %p133 = scmp.eq.s32.totalorder %s20, 3
    %p134 = scmp.ne.s32.totalorder %s129, %s131
    %p135 = scmp.eq.s32.totalorder %s20, 0
    %p136 = por %p134, %p135
    %p137 = scmp.ne.s32.totalorder %s129, %s131
    %p138 = scmp.eq.s32.totalorder %s25, 3
    %p139 = por %p137, %p138
    %p140 = scmp.ne.s32.totalorder %s131, %s132
    %p141 = scmp.eq.s32.totalorder %s25, 0
    %p142 = por %p140, %p141
    %p143 = scmp.ne.s32.totalorder %s131, %s132
    %p144 = scmp.eq.s32.totalorder %s26, 3
    %p145 = por %p143, %p144
    %p147 = scmp.ne.s32.totalorder %s132, %s146
    %p148 = scmp.eq.s32.totalorder %s26, 0
    %p149 = por %p147, %p148
    %s151 = sadd.s32 %s150, 1
    %p154 = scmp.eq.s32.totalorder %s20, 3
    %p155 = scmp.ne.s32.totalorder %s150, %s152
    %p156 = scmp.eq.s32.totalorder %s20, 0
    %p157 = por %p155, %p156
    %p158 = scmp.ne.s32.totalorder %s150, %s152
    %p159 = scmp.eq.s32.totalorder %s25, 3
    %p160 = por %p158, %p159
    %p161 = scmp.ne.s32.totalorder %s152, %s153
    %p162 = scmp.eq.s32.totalorder %s25, 0
    %p163 = por %p161, %p162
    %p164 = scmp.ne.s32.totalorder %s152, %s153
    %p165 = scmp.eq.s32.totalorder %s26, 3
    %p166 = por %p164, %p165
    %p168 = scmp.ne.s32.totalorder %s153, %s167
    %p169 = scmp.eq.s32.totalorder %s26, 0
    %p170 = por %p168, %p169
    %s172 = sadd.s32 %s171, 1
    %p175 = scmp.eq.s32.totalorder %s20, 3
    %p176 = scmp.ne.s32.totalorder %s171, %s173
    %p177 = scmp.eq.s32.totalorder %s20, 0
    %p178 = por %p176, %p177
    %p179 = scmp.ne.s32.totalorder %s171, %s173
    %p180 = scmp.eq.s32.totalorder %s25, 3
    %p181 = por %p179, %p180
    %p182 = scmp.ne.s32.totalorder %s173, %s174
    %p183 = scmp.eq.s32.totalorder %s25, 0
    %p184 = por %p182, %p183
    %p185 = scmp.ne.s32.totalorder %s173, %s174
    %p186 = scmp.eq.s32.totalorder %s26, 3
    %p187 = por %p185, %p186
    %p189 = scmp.ne.s32.totalorder %s174, %s188
    %p190 = scmp.eq.s32.totalorder %s26, 0
    %p191 = por %p189, %p190
    %s193 = sadd.s32 %s192, 1
    %p196 = scmp.eq.s32.totalorder %s20, 3
    %p197 = scmp.ne.s32.totalorder %s192, %s194
    %p198 = scmp.eq.s32.totalorder %s20, 0
    %p199 = por %p197, %p198
    %p200 = scmp.ne.s32.totalorder %s192, %s194
    %p201 = scmp.eq.s32.totalorder %s25, 3
    %p202 = por %p200, %p201
    %p203 = scmp.ne.s32.totalorder %s194, %s195
    %p204 = scmp.eq.s32.totalorder %s25, 0
    %p205 = por %p203, %p204
    %p206 = scmp.ne.s32.totalorder %s194, %s195
    %p207 = scmp.eq.s32.totalorder %s26, 3
    %p208 = por %p206, %p207
    %p210 = scmp.ne.s32.totalorder %s195, %s209
    %p211 = scmp.eq.s32.totalorder %s26, 0
    %p212 = por %p210, %p211
    %s214 = sadd.s32 %s213, 1
    %p217 = scmp.eq.s32.totalorder %s20, 3
    %p218 = scmp.ne.s32.totalorder %s213, %s215
    %p219 = scmp.eq.s32.totalorder %s20, 0
    %p220 = por %p218, %p219
    %p221 = scmp.ne.s32.totalorder %s213, %s215
    %p222 = scmp.eq.s32.totalorder %s25, 3
    %p223 = por %p221, %p222
    %p224 = scmp.ne.s32.totalorder %s215, %s216
    %p225 = scmp.eq.s32.totalorder %s25, 0
    %p226 = por %p224, %p225
    %p227 = scmp.ne.s32.totalorder %s215, %s216
    %p228 = scmp.eq.s32.totalorder %s26, 3
    %p229 = por %p227, %p228
    %p231 = scmp.ne.s32.totalorder %s216, %s230
    %p232 = scmp.eq.s32.totalorder %s26, 0
    %p233 = por %p231, %p232
    %s235 = sadd.s32 %s234, 1
    %p238 = scmp.eq.s32.totalorder %s20, 3
    %p239 = scmp.ne.s32.totalorder %s234, %s236
    %p240 = scmp.eq.s32.totalorder %s20, 0
    %p241 = por %p239, %p240
    %p242 = scmp.ne.s32.totalorder %s234, %s236
    %p243 = scmp.eq.s32.totalorder %s25, 3
    %p244 = por %p242, %p243
    %p245 = scmp.ne.s32.totalorder %s236, %s237
    %p246 = scmp.eq.s32.totalorder %s25, 0
    %p247 = por %p245, %p246
    %p248 = scmp.ne.s32.totalorder %s236, %s237
    %p249 = scmp.eq.s32.totalorder %s26, 3
    %p250 = por %p248, %p249
    %p252 = scmp.ne.s32.totalorder %s237, %s251
    %p253 = scmp.eq.s32.totalorder %s26, 0
    %p254 = por %p252, %p253
    %s256 = sadd.s32 %s255, 1
    %p259 = scmp.eq.s32.totalorder %s20, 3
    %p260 = scmp.ne.s32.totalorder %s255, %s257
    %p261 = scmp.eq.s32.totalorder %s20, 0
    %p262 = por %p260, %p261
    %p263 = scmp.ne.s32.totalorder %s255, %s257
    %p264 = scmp.eq.s32.totalorder %s25, 3
    %p265 = por %p263, %p264
    %p266 = scmp.ne.s32.totalorder %s257, %s258
    %p267 = scmp.eq.s32.totalorder %s25, 0
    %p268 = por %p266, %p267
    %p269 = scmp.ne.s32.totalorder %s257, %s258
    %p270 = scmp.eq.s32.totalorder %s26, 3
    %p271 = por %p269, %p270
    %p273 = scmp.ne.s32.totalorder %s258, %s272
    %p274 = scmp.eq.s32.totalorder %s26, 0
    %p275 = por %p273, %p274
    %s277 = sadd.s32 %s276, 1
    %p280 = scmp.eq.s32.totalorder %s20, 3
    %p281 = scmp.ne.s32.totalorder %s276, %s278
    %p282 = scmp.eq.s32.totalorder %s20, 0
    %p283 = por %p281, %p282
    %p284 = scmp.ne.s32.totalorder %s276, %s278
    %p285 = scmp.eq.s32.totalorder %s25, 3
    %p286 = por %p284, %p285
    %p287 = scmp.ne.s32.totalorder %s278, %s279
    %p288 = scmp.eq.s32.totalorder %s25, 0
    %p289 = por %p287, %p288
    %p290 = scmp.ne.s32.totalorder %s278, %s279
    %p291 = scmp.eq.s32.totalorder %s26, 3
    %p292 = por %p290, %p291
    %p294 = scmp.ne.s32.totalorder %s279, %s293
    %p295 = scmp.eq.s32.totalorder %s26, 0
    %p296 = por %p294, %p295
    %s298 = sadd.s32 %s297, 1
    %p301 = scmp.eq.s32.totalorder %s20, 3
    %p302 = scmp.ne.s32.totalorder %s297, %s299
    %p303 = scmp.eq.s32.totalorder %s20, 0
    %p304 = por %p302, %p303
    %p305 = scmp.ne.s32.totalorder %s297, %s299
    %p306 = scmp.eq.s32.totalorder %s25, 3
    %p307 = por %p305, %p306
    %p308 = scmp.ne.s32.totalorder %s299, %s300
    %p309 = scmp.eq.s32.totalorder %s25, 0
    %p310 = por %p308, %p309
    %p311 = scmp.ne.s32.totalorder %s299, %s300
    %p312 = scmp.eq.s32.totalorder %s26, 3
    %p313 = por %p311, %p312
    %p315 = scmp.ne.s32.totalorder %s300, %s314
    %p316 = scmp.eq.s32.totalorder %s26, 0
    %p317 = por %p315, %p316
    %s319 = sadd.s32 %s318, 1
    %p322 = scmp.eq.s32.totalorder %s20, 3
    %p323 = scmp.ne.s32.totalorder %s318, %s320
    %p324 = scmp.eq.s32.totalorder %s20, 0
    %p325 = por %p323, %p324
    %p326 = scmp.ne.s32.totalorder %s318, %s320
    %p327 = scmp.eq.s32.totalorder %s25, 3
    %p328 = por %p326, %p327
    %p329 = scmp.ne.s32.totalorder %s320, %s321
    %p330 = scmp.eq.s32.totalorder %s25, 0
    %p331 = por %p329, %p330
    %p332 = scmp.ne.s32.totalorder %s320, %s321
    %p333 = scmp.eq.s32.totalorder %s26, 3
    %p334 = por %p332, %p333
    %p336 = scmp.ne.s32.totalorder %s321, %s335
    %p337 = scmp.eq.s32.totalorder %s26, 0
    %p338 = por %p336, %p337
    %s339 = ssub.s32 %s27, %s39
    %s340 = ssub.s32 %s28, %s35
    %s341 = sor.u32 %s339, %s340
    %p342 = scmp.eq.s32.totalorder %s341, 0
    %s344 = sadd.s32 %s343, 1
    %s345 = scalar_select %p342, %s343, %s344
    %p348 = pneg %p342
    %p349 = scmp.eq.s32.totalorder %s20, 3
    %p350 = por %p348, %p349
    %p351 = scmp.ne.s32.totalorder %s343, %s346
    %p352 = scmp.eq.s32.totalorder %s20, 0
    %p353 = por %p351, %p352
    %p354 = scmp.ne.s32.totalorder %s343, %s346
    %p355 = scmp.eq.s32.totalorder %s25, 3
    %p356 = por %p354, %p355
    %p357 = scmp.ne.s32.totalorder %s346, %s347
    %p358 = scmp.eq.s32.totalorder %s25, 0
    %p359 = por %p357, %p358
    %p360 = scmp.ne.s32.totalorder %s346, %s347
    %p361 = scmp.eq.s32.totalorder %s26, 3
    %p362 = por %p360, %p361
    %p364 = scmp.ne.s32.totalorder %s347, %s363
    %p365 = scmp.eq.s32.totalorder %s26, 0
    %p366 = por %p364, %p365
    %p367 = scmp.le.s32.totalorder 1, %s20
    %p368 = scmp.lt.s32.totalorder %s20, 5
    %p369 = pnand %p367, %p368
    %p370 = pneg %p369
    // Predicated region
    $region9: #{wave_attention.1} parent=5 // pred_check
      _
    $region10: #{wave_attention.1} parent=5 // pred_check_branch
      %372 = sbr.rel (%p369) target = $region12
    $region11: #{wave_attention.1} parent=5 // pred_region
      %s373 = ssub.s32 %s20, 1
      // Predicated region
      $region13: #{wave_attention.1} parent=11 // pred_check
        %p374 = pneg %p79
      $region14: #{wave_attention.1} parent=11 // pred_check_branch
        %376 = sbr.rel (%p374) target = $region16
      $region15: #{wave_attention.1} parent=11 // pred_region
        _
      $region16: #{wave_attention.1} parent=11 // pred_fallthru
        _
      // Predicated region
      $region17: #{wave_attention.1} parent=11 // pred_check
        %p377 = pneg %p100
      $region18: #{wave_attention.1} parent=11 // pred_check_branch
        %379 = sbr.rel (%p377) target = $region20
      $region19: #{wave_attention.1} parent=11 // pred_region
        _
      $region20: #{wave_attention.1} parent=11 // pred_fallthru
        _
      // Predicated region
      $region21: #{wave_attention.1} parent=11 // pred_check
        %p380 = pneg %p121
      $region22: #{wave_attention.1} parent=11 // pred_check_branch
        %382 = sbr.rel (%p380) target = $region24
      $region23: #{wave_attention.1} parent=11 // pred_region
        _
      $region24: #{wave_attention.1} parent=11 // pred_fallthru
        _
      // Predicated region
      $region25: #{wave_attention.1} parent=11 // pred_check
        %p383 = pneg %p142
      $region26: #{wave_attention.1} parent=11 // pred_check_branch
        %385 = sbr.rel (%p383) target = $region28
      $region27: #{wave_attention.1} parent=11 // pred_region
        _
      $region28: #{wave_attention.1} parent=11 // pred_fallthru
        _
      // Predicated region
      $region29: #{wave_attention.1} parent=11 // pred_check
        %p386 = pneg %p163
      $region30: #{wave_attention.1} parent=11 // pred_check_branch
        %388 = sbr.rel (%p386) target = $region32
      $region31: #{wave_attention.1} parent=11 // pred_region
        _
      $region32: #{wave_attention.1} parent=11 // pred_fallthru
        _
      // Predicated region
      $region33: #{wave_attention.1} parent=11 // pred_check
        %p389 = pneg %p184
      $region34: #{wave_attention.1} parent=11 // pred_check_branch
        %391 = sbr.rel (%p389) target = $region36
      $region35: #{wave_attention.1} parent=11 // pred_region
        _
      $region36: #{wave_attention.1} parent=11 // pred_fallthru
        _
      // Predicated region
      $region37: #{wave_attention.1} parent=11 // pred_check
        %p392 = pneg %p205
      $region38: #{wave_attention.1} parent=11 // pred_check_branch
        %394 = sbr.rel (%p392) target = $region40
      $region39: #{wave_attention.1} parent=11 // pred_region
        _
      $region40: #{wave_attention.1} parent=11 // pred_fallthru
        _
      // Predicated region
      $region41: #{wave_attention.1} parent=11 // pred_check
        %p395 = pneg %p226
      $region42: #{wave_attention.1} parent=11 // pred_check_branch
        %397 = sbr.rel (%p395) target = $region44
      $region43: #{wave_attention.1} parent=11 // pred_region
        _
      $region44: #{wave_attention.1} parent=11 // pred_fallthru
        _
      // Predicated region
      $region45: #{wave_attention.1} parent=11 // pred_check
        %p398 = pneg %p247
      $region46: #{wave_attention.1} parent=11 // pred_check_branch
        %400 = sbr.rel (%p398) target = $region48
      $region47: #{wave_attention.1} parent=11 // pred_region
        _
      $region48: #{wave_attention.1} parent=11 // pred_fallthru
        _
      // Predicated region
      $region49: #{wave_attention.1} parent=11 // pred_check
        %p401 = pneg %p268
      $region50: #{wave_attention.1} parent=11 // pred_check_branch
        %403 = sbr.rel (%p401) target = $region52
      $region51: #{wave_attention.1} parent=11 // pred_region
        _
      $region52: #{wave_attention.1} parent=11 // pred_fallthru
        _
      // Predicated region
      $region53: #{wave_attention.1} parent=11 // pred_check
        %p404 = pneg %p289
      $region54: #{wave_attention.1} parent=11 // pred_check_branch
        %406 = sbr.rel (%p404) target = $region56
      $region55: #{wave_attention.1} parent=11 // pred_region
        _
      $region56: #{wave_attention.1} parent=11 // pred_fallthru
        _
      // Predicated region
      $region57: #{wave_attention.1} parent=11 // pred_check
        %p407 = pneg %p310
      $region58: #{wave_attention.1} parent=11 // pred_check_branch
        %409 = sbr.rel (%p407) target = $region60
      $region59: #{wave_attention.1} parent=11 // pred_region
        _
      $region60: #{wave_attention.1} parent=11 // pred_fallthru
        _
      // Predicated region
      $region61: #{wave_attention.1} parent=11 // pred_check
        %p410 = pneg %p331
      $region62: #{wave_attention.1} parent=11 // pred_check_branch
        %412 = sbr.rel (%p410) target = $region64
      $region63: #{wave_attention.1} parent=11 // pred_region
        _
      $region64: #{wave_attention.1} parent=11 // pred_fallthru
        _
    $region12: #{wave_attention.1} parent=5 // pred_fallthru
      _
    %p413 = scmp.lt.s32.totalorder %s20, 4
    // Predicated region
    $region65: #{wave_attention.1} parent=5 // pred_check
      %p414 = pneg %p413
    $region66: #{wave_attention.1} parent=5 // pred_check_branch
      %416 = sbr.rel (%p414) target = $region68
    $region67: #{wave_attention.1} parent=5 // pred_region
      // Predicated region
      $region69: #{wave_attention.1} parent=67 // pred_check
        %p417 = pneg %p52
      $region70: #{wave_attention.1} parent=67 // pred_check_branch
        %419 = sbr.rel (%p417) target = $region72
      $region71: #{wave_attention.1} parent=67 // pred_region
        %p420 = scmp.lt.s32.totalorder %s27, 1
        %s421 = scalar_select %p420, %s27, 1
        %s422 = smul.addr %s421, 8
        %s423 = smul.addr %s422, 8
        %s424 = scalar_lea.vmem %s0, %s423
      $region72: #{wave_attention.1} parent=67 // pred_fallthru
        _
    $region68: #{wave_attention.1} parent=5 // pred_fallthru
      _
    %p425 = scmp.le.s32.totalorder 1, %s20
    %p426 = scmp.lt.s32.totalorder %s20, 5
    %p427 = pnand %p425, %p426
    %p428 = pneg %p427
    // Predicated region
    $region73: #{wave_attention.1} parent=5 // pred_check
      _
    $region74: #{wave_attention.1} parent=5 // pred_check_branch
      %430 = sbr.rel (%p427) target = $region76
    $region75: #{wave_attention.1} parent=5 // pred_region
      %s431 = ssub.s32 %s20, 1
      %p432 = scmp.lt.s32.totalorder %s29, 1
      %s433 = scalar_select %p432, %s29, 1
      %s434 = smul.addr %s433, 8
      %s435 = smul.addr %s434, 8
      %s436 = scalar_lea.vmem %s0, %s435
      %p437 = pneg %p58
      %p438 = pneg %p55
      %p439 = pneg %p79
      %p440 = pneg %p76
      %p441 = pneg %p100
      %p442 = pneg %p97
      %p443 = pneg %p121
      %p444 = pneg %p118
      %p445 = pneg %p142
      %p446 = pneg %p139
      %p447 = pneg %p163
      %p448 = pneg %p160
      %p449 = pneg %p184
      %p450 = pneg %p181
      %p451 = pneg %p205
      %p452 = pneg %p202
      %p453 = pneg %p226
      %p454 = pneg %p223
      %p455 = pneg %p247
      %p456 = pneg %p244
      %p457 = pneg %p268
      %p458 = pneg %p265
      %p459 = pneg %p289
      %p460 = pneg %p286
      %p461 = pneg %p310
      %p462 = pneg %p307
      %p463 = pneg %p331
      %p464 = pneg %p328
      %p465 = pneg %p359
      %p466 = pneg %p356
      %s467 = smul.u32 4, %s30
      %p468 = scmp.lt.s32.totalorder %s29, 1
      %s469 = scalar_select %p468, %s29, 1
      %p470 = scmp.lt.s32.totalorder %s467, 7
      %s471 = scalar_select %p470, %s467, 7
      %s472 = smul.addr %s469, 8
      %s473 = sadd.s32 %s471, %s472
      %s474 = smul.addr %s473, 8
      %s475 = scalar_lea.vmem %s14, %s474
      %p476 = scmp.lt.s32.totalorder %s29, 1
      %s477 = scalar_select %p476, %s29, 1
      %s478 = smul.addr %s477, 8
      %s479 = smul.addr %s478, 8
      %s480 = scalar_lea.vmem %s0, %s479
      %s481 = smul.u32 4, %s30
      %p482 = scmp.lt.s32.totalorder %s29, 1
      %s483 = scalar_select %p482, %s29, 1
      %p484 = scmp.lt.s32.totalorder %s481, 7
      %s485 = scalar_select %p484, %s481, 7
      %s486 = smul.addr %s483, 8
      %s487 = sadd.s32 %s485, %s486
      %s488 = smul.addr %s487, 8
      %s489 = scalar_lea.vmem %s14, %s488
      %s490 = smul.u32 4, %s30
      %p492 = scmp.eq.s32.totalorder %s30, 0
      // Predicated region
      $region77: #{wave_attention.1} parent=75 // pred_check
        %p493 = pneg %p492
      $region78: #{wave_attention.1} parent=75 // pred_check_branch
        %495 = sbr.rel (%p493) target = $region80
      $region79: #{wave_attention.1} parent=75 // pred_region
        %v496 = vld [vmem:[%s480] sm:$0xff]
        %v497 = vld [vmem:[%s480 + $0x8] sm:$0xff]
        %v498 = vld [vmem:[%s480 + $0x10] sm:$0xff]
        %v499 = vld [vmem:[%s480 + $0x18] sm:$0xff]
        %v500 = vld [vmem:[%s480 + $0x20] sm:$0xff]
        %v501 = vld [vmem:[%s480 + $0x28] sm:$0xff]
        %v502 = vld [vmem:[%s480 + $0x30] sm:$0xff]
        %v503 = vld [vmem:[%s480 + $0x38] sm:$0xff]
        %v504 = vpack.c.bf16 %v497, %v496
        %v505 = vpack.c.bf16 %v499, %v498
        %v506 = vpack.c.bf16 %v501, %v500
        %v507 = vpack.c.bf16 %v503, %v502
        %v508 = vld [vmem:[%s2] sm:$0xf]
        %v509 = vld [vmem:[%s2 + $0x4] sm:$0xf]
        %v510 = vld [vmem:[%s2 + $0x8] sm:$0xf]
        %v511 = vld [vmem:[%s2 + $0xc] sm:$0xf]
        %v512 = vld [vmem:[%s2 + $0x10] sm:$0xf]
        %v513 = vld [vmem:[%s2 + $0x14] sm:$0xf]
        %v514 = vld [vmem:[%s2 + $0x18] sm:$0xf]
        %v515 = vld [vmem:[%s2 + $0x1c] sm:$0xf]
        %v516 = vld [vmem:[%s2 + $0x20] sm:$0xf]
        %v517 = vld [vmem:[%s2 + $0x24] sm:$0xf]
        %v518 = vld [vmem:[%s2 + $0x28] sm:$0xf]
        %v519 = vld [vmem:[%s2 + $0x2c] sm:$0xf]
        %v520 = vld [vmem:[%s2 + $0x30] sm:$0xf]
        %v521 = vld [vmem:[%s2 + $0x34] sm:$0xf]
        %v522 = vld [vmem:[%s2 + $0x38] sm:$0xf]
        %v523 = vld [vmem:[%s2 + $0x3c] sm:$0xf]
        %v524 = vld [vmem:[%s3] sm:$0x1]
        %v526 = vlaneseq
        %v527 = vshrl.u32 %v526, 7
        %v528 = vsub.s32 0, %v527
        %v529 = vrot.slane %v524, %v528
        %v547 = vunpack.c.l.b16 %v508
        %v548 = vunpack.c.l.b16 %v509
        %v549 = vunpack.c.l.b16 %v510
        %v550 = vunpack.c.l.b16 %v511
        %v551 = vunpack.c.l.b16 %v512
        %v552 = vunpack.c.l.b16 %v513
        %v553 = vunpack.c.l.b16 %v514
        %v554 = vunpack.c.l.b16 %v515
        %v555 = vunpack.c.l.b16 %v516
        %v556 = vunpack.c.l.b16 %v517
        %v557 = vunpack.c.l.b16 %v518
        %v558 = vunpack.c.l.b16 %v519
        %v559 = vunpack.c.l.b16 %v520
        %v560 = vunpack.c.l.b16 %v521
        %v561 = vunpack.c.l.b16 %v522
        %v562 = vunpack.c.l.b16 %v523
        %v563 = vpack.c.b16 %v548, %v547
        %v564 = vpack.c.b16 %v550, %v549
        %v565 = vpack.c.b16 %v552, %v551
        %v566 = vpack.c.b16 %v554, %v553
        %v567 = vpack.c.b16 %v556, %v555
        %v568 = vpack.c.b16 %v558, %v557
        %v569 = vpack.c.b16 %v560, %v559
        %v570 = vpack.c.b16 %v562, %v561
        %579 = vmatprep.subr.bf16.mxu0 0
        %580 = vmatpush1.bf16.msra.mxu0 %v570
        %581 = vmatprep.subr.bf16.mxu0 0
        %582 = vmatpush1.bf16.msra.mxu0 %v569
        %583 = vmatprep.subr.bf16.mxu0 0
        %584 = vmatpush1.bf16.msra.mxu0 %v568
        %585 = vmatprep.subr.bf16.mxu0 0
        %586 = vmatpush1.bf16.msra.mxu0 %v567
        %587 = vmatprep.subr.bf16.mxu0 0
        %588 = vmatpush1.bf16.msra.mxu0 %v566
        %589 = vmatprep.subr.bf16.mxu0 0
        %590 = vmatpush1.bf16.msra.mxu0 %v565
        %591 = vmatprep.subr.bf16.mxu0 0
        %592 = vmatpush1.bf16.msra.mxu0 %v564
        %593 = vmatprep.subr.bf16.mxu0 0
        %594 = vmatpush1.bf16.msra.mxu0 %v563
        %595 = vmatprep.subr.bf16.mxu0 0
        %596 = vmatpush2.bf16.msra.mxu0 0
        %597 = vmatprep.subr.bf16.mxu0 0
        %598 = vmatpush2.bf16.msra.mxu0 0
        %599 = vmatprep.subr.bf16.mxu0 0
        %600 = vmatpush2.bf16.msra.mxu0 0
        %601 = vmatprep.subr.bf16.mxu0 0
        %602 = vmatpush2.bf16.msra.mxu0 0
        %603 = vmatprep.subr.bf16.mxu0 0
        %604 = vmatpush2.bf16.msra.mxu0 0
        %605 = vmatprep.subr.bf16.mxu0 0
        %606 = vmatpush2.bf16.msra.mxu0 0
        %607 = vmatprep.subr.bf16.mxu0 0
        %608 = vmatpush2.bf16.msra.mxu0 0
        %609 = vmatprep.subr.bf16.mxu0 0
        %610 = vmatpush2.bf16.msra.mxu0 0
        %611 = vmatprep.mubr.bf16.mxu0 0
        %612 = vmatmul.mubr.bf16.gmra.mxu0 %v504
        %v613 = vpop.f32.mrf.mxu0
        %v614 = vadd.f32 %v529, %v613
        %v615 = vpop.f32.mrf.mxu0
        %v616 = vpop.f32.mrf.mxu0
        %v617 = vadd.f32 %v529, %v616
        %v618 = vpop.f32.mrf.mxu0
        %619 = vmatprep.mubr.bf16.mxu0 0
        %620 = vmatmul.mubr.bf16.gmra.mxu0 %v505
        %v621 = vpop.f32.mrf.mxu0
        %v622 = vadd.f32 %v529, %v621
        %v623 = vpop.f32.mrf.mxu0
        %v624 = vpop.f32.mrf.mxu0
        %v625 = vadd.f32 %v529, %v624
        %v626 = vpop.f32.mrf.mxu0
        %627 = vmatprep.mubr.bf16.mxu0 0
        %628 = vmatmul.mubr.bf16.gmra.mxu0 %v506
        %v629 = vpop.f32.mrf.mxu0
        %v630 = vadd.f32 %v529, %v629
        %v631 = vpop.f32.mrf.mxu0
        %v632 = vpop.f32.mrf.mxu0
        %v633 = vadd.f32 %v529, %v632
        %v634 = vpop.f32.mrf.mxu0
        %635 = vmatprep.mubr.bf16.mxu0 0
        %636 = vmatmul.mubr.bf16.gmra.mxu0 %v507
        %v637 = vpop.f32.mrf.mxu0
        %v638 = vadd.f32 %v529, %v637
        %v639 = vpop.f32.mrf.mxu0
        %v640 = vpop.f32.mrf.mxu0
        %v641 = vadd.f32 %v529, %v640
        %v642 = vpop.f32.mrf.mxu0
        %643 = vdwg.mxu0
        %v644 = vmax.f32 %v614, 0.0
        %v645 = vmax.f32 %v617, 0.0
        %v646 = vmax.f32 %v622, 0.0
        %v647 = vmax.f32 %v625, 0.0
        %v648 = vmax.f32 %v630, 0.0
        %v649 = vmax.f32 %v633, 0.0
        %v650 = vmax.f32 %v638, 0.0
        %v651 = vmax.f32 %v641, 0.0
        %vm652 = vcmask 261120
        %653 = vst.msk [vmem:[#allocation2] sm:$0xff] %vm652, 0.0
        %654 = vst.msk [vmem:[#allocation2 + $0x8] sm:$0xff] %vm652, 0.0
        %655 = vst.msk [vmem:[#allocation2 + $0x10] sm:$0xff] %vm652, %v644
        %656 = vst.msk [vmem:[#allocation2 + $0x18] sm:$0xff] %vm652, %v645
        %657 = vst.msk [vmem:[#allocation2 + $0x20] sm:$0xff] %vm652, %v646
        %658 = vst.msk [vmem:[#allocation2 + $0x28] sm:$0xff] %vm652, %v647
        %659 = vst.msk [vmem:[#allocation2 + $0x30] sm:$0xff] %vm652, %v648
        %660 = vst.msk [vmem:[#allocation2 + $0x38] sm:$0xff] %vm652, %v649
        %661 = vst.msk [vmem:[#allocation2 + $0x40] sm:$0xff] %vm652, %v650
        %662 = vst.msk [vmem:[#allocation2 + $0x48] sm:$0xff] %vm652, %v651
        %663 = vst.msk [vmem:[#allocation2 + $0x50] sm:$0xff] %vm652, 0.0
        %664 = vst.msk [vmem:[#allocation2 + $0x58] sm:$0xff] %vm652, 0.0
        %v665 = vlaneseq
        %v666 = vshrl.u32 %v665, 7
        %v667 = vadd.s32 %v666, 8
        %v668 = vadd.s32 %v666, 16
        %v669 = vadd.s32 %v666, 24
        %v670 = vadd.s32 %v666, 32
        %v671 = vadd.s32 %v666, 40
        %v672 = vadd.s32 %v666, 48
        %v673 = vadd.s32 %v666, 56
        %vm674 = vcmp.lt.s32.totalorder %v666, 0
        %v675 = vsub.s32 0, %v666
        %v676 = vsel %vm674, %v675, %v666
        %v677 = vshrl.u32 %v676, 3
        %v678 = vand.u32 %v676, 7
        %v679 = vsub.s32 0, %v678
        %v680 = vsel %vm674, %v679, %v678
        %vm681 = vcmp.lt.s32.totalorder %v667, 0
        %v682 = vsub.s32 0, %v667
        %v683 = vsel %vm681, %v682, %v667
        %v684 = vshrl.u32 %v683, 3
        %v685 = vand.u32 %v683, 7
        %v686 = vsub.s32 0, %v685
        %v687 = vsel %vm681, %v686, %v685
        %vm688 = vcmp.lt.s32.totalorder %v668, 0
        %v689 = vsub.s32 0, %v668
        %v690 = vsel %vm688, %v689, %v668
        %v691 = vshrl.u32 %v690, 3
        %v692 = vand.u32 %v690, 7
        %v693 = vsub.s32 0, %v692
        %v694 = vsel %vm688, %v693, %v692
        %vm695 = vcmp.lt.s32.totalorder %v669, 0
        %v696 = vsub.s32 0, %v669
        %v697 = vsel %vm695, %v696, %v669
        %v698 = vshrl.u32 %v697, 3
        %v699 = vand.u32 %v697, 7
        %v700 = vsub.s32 0, %v699
        %v701 = vsel %vm695, %v700, %v699
        %vm702 = vcmp.lt.s32.totalorder %v670, 0
        %v703 = vsub.s32 0, %v670
        %v704 = vsel %vm702, %v703, %v670
        %v705 = vshrl.u32 %v704, 3
        %v706 = vand.u32 %v704, 7
        %v707 = vsub.s32 0, %v706
        %v708 = vsel %vm702, %v707, %v706
        %vm709 = vcmp.lt.s32.totalorder %v671, 0
        %v710 = vsub.s32 0, %v671
        %v711 = vsel %vm709, %v710, %v671
        %v712 = vshrl.u32 %v711, 3
        %v713 = vand.u32 %v711, 7
        %v714 = vsub.s32 0, %v713
        %v715 = vsel %vm709, %v714, %v713
        %vm716 = vcmp.lt.s32.totalorder %v672, 0
        %v717 = vsub.s32 0, %v672
        %v718 = vsel %vm716, %v717, %v672
        %v719 = vshrl.u32 %v718, 3
        %v720 = vand.u32 %v718, 7
        %v721 = vsub.s32 0, %v720
        %v722 = vsel %vm716, %v721, %v720
        %vm723 = vcmp.lt.s32.totalorder %v673, 0
        %v724 = vsub.s32 0, %v673
        %v725 = vsel %vm723, %v724, %v673
        %v726 = vshrl.u32 %v725, 3
        %v727 = vand.u32 %v725, 7
        %v728 = vsub.s32 0, %v727
        %v729 = vsel %vm723, %v728, %v727
        %vm730 = vcmp.ne.s32.totalorder %v680, 0
        %vm731 = vcmp.ne.s32.totalorder %v687, 0
        %vm732 = vcmp.ne.s32.totalorder %v694, 0
        %vm733 = vcmp.ne.s32.totalorder %v701, 0
        %vm734 = vcmp.ne.s32.totalorder %v708, 0
        %vm735 = vcmp.ne.s32.totalorder %v715, 0
        %vm736 = vcmp.ne.s32.totalorder %v722, 0
        %vm737 = vcmp.ne.s32.totalorder %v729, 0
        %vm738 = vcmp.lt.s32.totalorder %v680, 0
        %vm739 = vcmp.lt.s32.totalorder %v687, 0
        %vm740 = vcmp.lt.s32.totalorder %v694, 0
        %vm741 = vcmp.lt.s32.totalorder %v701, 0
        %vm742 = vcmp.lt.s32.totalorder %v708, 0
        %vm743 = vcmp.lt.s32.totalorder %v715, 0
        %vm744 = vcmp.lt.s32.totalorder %v722, 0
        %vm745 = vcmp.lt.s32.totalorder %v729, 0
        %vm746 = vmand %vm738, %vm730
        %vm747 = vmand %vm739, %vm731
        %vm748 = vmand %vm740, %vm732
        %vm749 = vmand %vm741, %vm733
        %vm750 = vmand %vm742, %vm734
        %vm751 = vmand %vm743, %vm735
        %vm752 = vmand %vm744, %vm736
        %vm753 = vmand %vm745, %vm737
        %v754 = vadd.s32 %v680, 8
        %v755 = vadd.s32 %v687, 8
        %v756 = vadd.s32 %v694, 8
        %v757 = vadd.s32 %v701, 8
        %v758 = vadd.s32 %v708, 8
        %v759 = vadd.s32 %v715, 8
        %v760 = vadd.s32 %v722, 8
        %v761 = vadd.s32 %v729, 8
        %v762 = vsel %vm746, %v754, %v680
        %v763 = vsel %vm747, %v755, %v687
        %v764 = vsel %vm748, %v756, %v694
        %v765 = vsel %vm749, %v757, %v701
        %v766 = vsel %vm750, %v758, %v708
        %v767 = vsel %vm751, %v759, %v715
        %v768 = vsel %vm752, %v760, %v722
        %v769 = vsel %vm753, %v761, %v729
        %vm770 = vcmp.gt.s32.totalorder %v762, 0
        %vm771 = vcmp.gt.s32.totalorder %v763, 0
        %vm772 = vcmp.gt.s32.totalorder %v764, 0
        %vm773 = vcmp.gt.s32.totalorder %v765, 0
        %vm774 = vcmp.gt.s32.totalorder %v766, 0
        %vm775 = vcmp.gt.s32.totalorder %v767, 0
        %vm776 = vcmp.gt.s32.totalorder %v768, 0
        %vm777 = vcmp.gt.s32.totalorder %v769, 0
        %v778 = vsel %vm770, 1, 0
        %v779 = vsel %vm771, 1, 0
        %v780 = vsel %vm772, 1, 0
        %v781 = vsel %vm773, 1, 0
        %v782 = vsel %vm774, 1, 0
        %v783 = vsel %vm775, 1, 0
        %v784 = vsel %vm776, 1, 0
        %v785 = vsel %vm777, 1, 0
        %v786 = vcvt.s32.f32 %v778
        %v787 = vcvt.s32.f32 %v779
        %v788 = vcvt.s32.f32 %v780
        %v789 = vcvt.s32.f32 %v781
        %v790 = vcvt.s32.f32 %v782
        %v791 = vcvt.s32.f32 %v783
        %v792 = vcvt.s32.f32 %v784
        %v793 = vcvt.s32.f32 %v785
        %vm794 = vcmp.lt.s32.totalorder %v762, 7
        %vm795 = vcmp.lt.s32.totalorder %v763, 7
        %vm796 = vcmp.lt.s32.totalorder %v764, 7
        %vm797 = vcmp.lt.s32.totalorder %v765, 7
        %vm798 = vcmp.lt.s32.totalorder %v766, 7
        %vm799 = vcmp.lt.s32.totalorder %v767, 7
        %vm800 = vcmp.lt.s32.totalorder %v768, 7
        %vm801 = vcmp.lt.s32.totalorder %v769, 7
        %v802 = vsel %vm794, 1, 0
        %v803 = vsel %vm795, 1, 0
        %v804 = vsel %vm796, 1, 0
        %v805 = vsel %vm797, 1, 0
        %v806 = vsel %vm798, 1, 0
        %v807 = vsel %vm799, 1, 0
        %v808 = vsel %vm800, 1, 0
        %v809 = vsel %vm801, 1, 0
        %v810 = vcvt.s32.f32 %v802
        %v811 = vcvt.s32.f32 %v803
        %v812 = vcvt.s32.f32 %v804
        %v813 = vcvt.s32.f32 %v805
        %v814 = vcvt.s32.f32 %v806
        %v815 = vcvt.s32.f32 %v807
        %v816 = vcvt.s32.f32 %v808
        %v817 = vcvt.s32.f32 %v809
        %v818 = vld [vmem:[#allocation2 + $0x7] sm:$0xff]
        %v819 = vld [vmem:[#allocation2 + $0xf] sm:$0xff]
        %v820 = vld [vmem:[#allocation2 + $0x17] sm:$0xff]
        %v821 = vld [vmem:[#allocation2 + $0x1f] sm:$0xff]
        %v822 = vld [vmem:[#allocation2 + $0x27] sm:$0xff]
        %v823 = vld [vmem:[#allocation2 + $0x2f] sm:$0xff]
        %v824 = vld [vmem:[#allocation2 + $0x37] sm:$0xff]
        %v825 = vld [vmem:[#allocation2 + $0x3f] sm:$0xff]
        %v826 = vmul.f32 %v818, %v786
        %v827 = vmul.f32 %v819, %v787
        %v828 = vmul.f32 %v820, %v788
        %v829 = vmul.f32 %v821, %v789
        %v830 = vmul.f32 %v822, %v790
        %v831 = vmul.f32 %v823, %v791
        %v832 = vmul.f32 %v824, %v792
        %v833 = vmul.f32 %v825, %v793
        %v834 = vpack.c.bf16 %v827, %v826
        %v835 = vpack.c.bf16 %v829, %v828
        %v836 = vpack.c.bf16 %v831, %v830
        %v837 = vpack.c.bf16 %v833, %v832
        %v838 = vld [vmem:[%s4] sm:$0xf]
        %v839 = vld [vmem:[%s4 + $0x4] sm:$0xf]
        %v840 = vld [vmem:[%s4 + $0x8] sm:$0xf]
        %v841 = vld [vmem:[%s4 + $0xc] sm:$0xf]
        %v842 = vld [vmem:[#allocation2 + $0x8] sm:$0xff]
        %v843 = vld [vmem:[#allocation2 + $0x10] sm:$0xff]
        %v844 = vld [vmem:[#allocation2 + $0x18] sm:$0xff]
        %v845 = vld [vmem:[#allocation2 + $0x20] sm:$0xff]
        %v846 = vld [vmem:[#allocation2 + $0x28] sm:$0xff]
        %v847 = vld [vmem:[#allocation2 + $0x30] sm:$0xff]
        %v848 = vld [vmem:[#allocation2 + $0x38] sm:$0xff]
        %v849 = vld [vmem:[#allocation2 + $0x40] sm:$0xff]
        %v850 = vpack.c.bf16 %v843, %v842
        %v851 = vpack.c.bf16 %v845, %v844
        %v852 = vpack.c.bf16 %v847, %v846
        %v853 = vpack.c.bf16 %v849, %v848
        %s854 = scalar_lea.vmem %s4, 16
        %v855 = vld [vmem:[%s854] sm:$0xf]
        %v856 = vld [vmem:[%s854 + $0x4] sm:$0xf]
        %v857 = vld [vmem:[%s854 + $0x8] sm:$0xf]
        %v858 = vld [vmem:[%s854 + $0xc] sm:$0xf]
        %v863 = vunpack.c.l.b16 %v855
        %v864 = vunpack.c.l.b16 %v856
        %v865 = vunpack.c.l.b16 %v857
        %v866 = vunpack.c.l.b16 %v858
        %v867 = vpack.c.b16 %v864, %v863
        %v868 = vpack.c.b16 %v866, %v865
        %v872 = vsel %vm652, %v850, 0
        %v875 = vsel %vm652, %v851, 0
        %v878 = vsel %vm652, %v852, 0
        %v881 = vsel %vm652, %v853, 0
        %883 = vmatprep.subr.bf16.mxu0 0
        %884 = vmatpush1.bf16.msra.mxu0 0
        %885 = vmatprep.subr.bf16.mxu0 0
        %886 = vmatpush1.bf16.msra.mxu0 0
        %887 = vmatprep.subr.bf16.mxu0 0
        %888 = vmatpush1.bf16.msra.mxu0 0
        %889 = vmatprep.subr.bf16.mxu0 0
        %890 = vmatpush1.bf16.msra.mxu0 0
        %891 = vmatprep.subr.bf16.mxu0 0
        %892 = vmatpush1.bf16.msra.mxu0 0
        %893 = vmatprep.subr.bf16.mxu0 0
        %894 = vmatpush1.bf16.msra.mxu0 0
        %895 = vmatprep.subr.bf16.mxu0 0
        %896 = vmatpush1.bf16.msra.mxu0 %v868
        %897 = vmatprep.subr.bf16.mxu0 0
        %898 = vmatpush1.bf16.msra.mxu0 %v867
        %899 = vmatprep.subr.bf16.mxu0 0
        %900 = vmatpush2.bf16.msra.mxu0 0
        %901 = vmatprep.subr.bf16.mxu0 0
        %902 = vmatpush2.bf16.msra.mxu0 0
        %903 = vmatprep.subr.bf16.mxu0 0
        %904 = vmatpush2.bf16.msra.mxu0 0
        %905 = vmatprep.subr.bf16.mxu0 0
        %906 = vmatpush2.bf16.msra.mxu0 0
        %907 = vmatprep.subr.bf16.mxu0 0
        %908 = vmatpush2.bf16.msra.mxu0 0
        %909 = vmatprep.subr.bf16.mxu0 0
        %910 = vmatpush2.bf16.msra.mxu0 0
        %911 = vmatprep.subr.bf16.mxu0 0
        %912 = vmatpush2.bf16.msra.mxu0 0
        %913 = vmatprep.subr.bf16.mxu0 0
        %914 = vmatpush2.bf16.msra.mxu0 0
        %915 = vmatprep.mubr.bf16.mxu0 0
        %916 = vmatmul.mubr.bf16.gmra.mxu0 %v872
        %v917 = vpop.f32.mrf.mxu0
        %v918 = vadd.f32 0.0, %v917
        %v919 = vpop.f32.mrf.mxu0
        %v920 = vpop.f32.mrf.mxu0
        %v921 = vadd.f32 0.0, %v920
        %v922 = vpop.f32.mrf.mxu0
        %923 = vmatprep.mubr.bf16.mxu0 0
        %924 = vmatmul.mubr.bf16.gmra.mxu0 %v875
        %v925 = vpop.f32.mrf.mxu0
        %v926 = vadd.f32 0.0, %v925
        %v927 = vpop.f32.mrf.mxu0
        %v928 = vpop.f32.mrf.mxu0
        %v929 = vadd.f32 0.0, %v928
        %v930 = vpop.f32.mrf.mxu0
        %931 = vmatprep.mubr.bf16.mxu0 0
        %932 = vmatmul.mubr.bf16.gmra.mxu0 %v878
        %v933 = vpop.f32.mrf.mxu0
        %v934 = vadd.f32 0.0, %v933
        %v935 = vpop.f32.mrf.mxu0
        %v936 = vpop.f32.mrf.mxu0
        %v937 = vadd.f32 0.0, %v936
        %v938 = vpop.f32.mrf.mxu0
        %939 = vmatprep.mubr.bf16.mxu0 0
        %940 = vmatmul.mubr.bf16.gmra.mxu0 %v881
        %v941 = vpop.f32.mrf.mxu0
        %v942 = vadd.f32 0.0, %v941
        %v943 = vpop.f32.mrf.mxu0
        %v944 = vpop.f32.mrf.mxu0
        %v945 = vadd.f32 0.0, %v944
        %v946 = vpop.f32.mrf.mxu0
        %947 = vdwg.mxu0
        %v952 = vunpack.c.l.b16 %v838
        %v953 = vunpack.c.l.b16 %v839
        %v954 = vunpack.c.l.b16 %v840
        %v955 = vunpack.c.l.b16 %v841
        %v956 = vpack.c.b16 %v953, %v952
        %v957 = vpack.c.b16 %v955, %v954
        %v961 = vsel %vm652, %v834, 0
        %v964 = vsel %vm652, %v835, 0
        %v967 = vsel %vm652, %v836, 0
        %v970 = vsel %vm652, %v837, 0
        %972 = vmatprep.subr.bf16.mxu0 0
        %973 = vmatpush1.bf16.msra.mxu0 0
        %974 = vmatprep.subr.bf16.mxu0 0
        %975 = vmatpush1.bf16.msra.mxu0 0
        %976 = vmatprep.subr.bf16.mxu0 0
        %977 = vmatpush1.bf16.msra.mxu0 0
        %978 = vmatprep.subr.bf16.mxu0 0
        %979 = vmatpush1.bf16.msra.mxu0 0
        %980 = vmatprep.subr.bf16.mxu0 0
        %981 = vmatpush1.bf16.msra.mxu0 0
        %982 = vmatprep.subr.bf16.mxu0 0
        %983 = vmatpush1.bf16.msra.mxu0 0
        %984 = vmatprep.subr.bf16.mxu0 0
        %985 = vmatpush1.bf16.msra.mxu0 %v957
        %986 = vmatprep.subr.bf16.mxu0 0
        %987 = vmatpush1.bf16.msra.mxu0 %v956
        %988 = vmatprep.subr.bf16.mxu0 0
        %989 = vmatpush2.bf16.msra.mxu0 0
        %990 = vmatprep.subr.bf16.mxu0 0
        %991 = vmatpush2.bf16.msra.mxu0 0
        %992 = vmatprep.subr.bf16.mxu0 0
        %993 = vmatpush2.bf16.msra.mxu0 0
        %994 = vmatprep.subr.bf16.mxu0 0
        %995 = vmatpush2.bf16.msra.mxu0 0
        %996 = vmatprep.subr.bf16.mxu0 0
        %997 = vmatpush2.bf16.msra.mxu0 0
        %998 = vmatprep.subr.bf16.mxu0 0
        %999 = vmatpush2.bf16.msra.mxu0 0
        %1000 = vmatprep.subr.bf16.mxu0 0
        %1001 = vmatpush2.bf16.msra.mxu0 0
        %1002 = vmatprep.subr.bf16.mxu0 0
        %1003 = vmatpush2.bf16.msra.mxu0 0
        %1004 = vmatprep.mubr.bf16.mxu0 0
        %1005 = vmatmul.mubr.bf16.gmra.mxu0 %v961
        %v1006 = vpop.f32.mrf.mxu0
        %v1007 = vadd.f32 %v918, %v1006
        %v1008 = vpop.f32.mrf.mxu0
        %v1009 = vpop.f32.mrf.mxu0
        %v1010 = vadd.f32 %v921, %v1009
        %v1011 = vpop.f32.mrf.mxu0
        %1012 = vmatprep.mubr.bf16.mxu0 0
        %1013 = vmatmul.mubr.bf16.gmra.mxu0 %v964
        %v1014 = vpop.f32.mrf.mxu0
        %v1015 = vadd.f32 %v926, %v1014
        %v1016 = vpop.f32.mrf.mxu0
        %v1017 = vpop.f32.mrf.mxu0
        %v1018 = vadd.f32 %v929, %v1017
        %v1019 = vpop.f32.mrf.mxu0
        %1020 = vmatprep.mubr.bf16.mxu0 0
        %1021 = vmatmul.mubr.bf16.gmra.mxu0 %v967
        %v1022 = vpop.f32.mrf.mxu0
        %v1023 = vadd.f32 %v934, %v1022
        %v1024 = vpop.f32.mrf.mxu0
        %v1025 = vpop.f32.mrf.mxu0
        %v1026 = vadd.f32 %v937, %v1025
        %v1027 = vpop.f32.mrf.mxu0
        %1028 = vmatprep.mubr.bf16.mxu0 0
        %1029 = vmatmul.mubr.bf16.gmra.mxu0 %v970
        %v1030 = vpop.f32.mrf.mxu0
        %v1031 = vadd.f32 %v942, %v1030
        %v1032 = vpop.f32.mrf.mxu0
        %v1033 = vpop.f32.mrf.mxu0
        %v1034 = vadd.f32 %v945, %v1033
        %v1035 = vpop.f32.mrf.mxu0
        %1036 = vdwg.mxu0
        %v1037 = vld [vmem:[#allocation2 + $0x9] sm:$0xff]
        %v1038 = vld [vmem:[#allocation2 + $0x11] sm:$0xff]
        %v1039 = vld [vmem:[#allocation2 + $0x19] sm:$0xff]
        %v1040 = vld [vmem:[#allocation2 + $0x21] sm:$0xff]
        %v1041 = vld [vmem:[#allocation2 + $0x29] sm:$0xff]
        %v1042 = vld [vmem:[#allocation2 + $0x31] sm:$0xff]
        %v1043 = vld [vmem:[#allocation2 + $0x39] sm:$0xff]
        %v1044 = vld [vmem:[#allocation2 + $0x41] sm:$0xff]
        %v1045 = vmul.f32 %v1037, %v810
        %v1046 = vmul.f32 %v1038, %v811
        %v1047 = vmul.f32 %v1039, %v812
        %v1048 = vmul.f32 %v1040, %v813
        %v1049 = vmul.f32 %v1041, %v814
        %v1050 = vmul.f32 %v1042, %v815
        %v1051 = vmul.f32 %v1043, %v816
        %v1052 = vmul.f32 %v1044, %v817
        %v1053 = vpack.c.bf16 %v1046, %v1045
        %v1054 = vpack.c.bf16 %v1048, %v1047
        %v1055 = vpack.c.bf16 %v1050, %v1049
        %v1056 = vpack.c.bf16 %v1052, %v1051
        %s1057 = scalar_lea.vmem %s4, 32
        %v1058 = vld [vmem:[%s1057] sm:$0xf]
        %v1059 = vld [vmem:[%s1057 + $0x4] sm:$0xf]
        %v1060 = vld [vmem:[%s1057 + $0x8] sm:$0xf]
        %v1061 = vld [vmem:[%s1057 + $0xc] sm:$0xf]
        %v1066 = vunpack.c.l.b16 %v1058
        %v1067 = vunpack.c.l.b16 %v1059
        %v1068 = vunpack.c.l.b16 %v1060
        %v1069 = vunpack.c.l.b16 %v1061
        %v1070 = vpack.c.b16 %v1067, %v1066
        %v1071 = vpack.c.b16 %v1069, %v1068
        %v1075 = vsel %vm652, %v1053, 0
        %v1078 = vsel %vm652, %v1054, 0
        %v1081 = vsel %vm652, %v1055, 0
        %v1084 = vsel %vm652, %v1056, 0
        %1086 = vmatprep.subr.bf16.mxu0 0
        %1087 = vmatpush1.bf16.msra.mxu0 0
        %1088 = vmatprep.subr.bf16.mxu0 0
        %1089 = vmatpush1.bf16.msra.mxu0 0
        %1090 = vmatprep.subr.bf16.mxu0 0
        %1091 = vmatpush1.bf16.msra.mxu0 0
        %1092 = vmatprep.subr.bf16.mxu0 0
        %1093 = vmatpush1.bf16.msra.mxu0 0
        %1094 = vmatprep.subr.bf16.mxu0 0
        %1095 = vmatpush1.bf16.msra.mxu0 0
        %1096 = vmatprep.subr.bf16.mxu0 0
        %1097 = vmatpush1.bf16.msra.mxu0 0
        %1098 = vmatprep.subr.bf16.mxu0 0
        %1099 = vmatpush1.bf16.msra.mxu0 %v1071
        %1100 = vmatprep.subr.bf16.mxu0 0
        %1101 = vmatpush1.bf16.msra.mxu0 %v1070
        %1102 = vmatprep.subr.bf16.mxu0 0
        %1103 = vmatpush2.bf16.msra.mxu0 0
        %1104 = vmatprep.subr.bf16.mxu0 0
        %1105 = vmatpush2.bf16.msra.mxu0 0
        %1106 = vmatprep.subr.bf16.mxu0 0
        %1107 = vmatpush2.bf16.msra.mxu0 0
        %1108 = vmatprep.subr.bf16.mxu0 0
        %1109 = vmatpush2.bf16.msra.mxu0 0
        %1110 = vmatprep.subr.bf16.mxu0 0
        %1111 = vmatpush2.bf16.msra.mxu0 0
        %1112 = vmatprep.subr.bf16.mxu0 0
        %1113 = vmatpush2.bf16.msra.mxu0 0
        %1114 = vmatprep.subr.bf16.mxu0 0
        %1115 = vmatpush2.bf16.msra.mxu0 0
        %1116 = vmatprep.subr.bf16.mxu0 0
        %1117 = vmatpush2.bf16.msra.mxu0 0
        %1118 = vmatprep.mubr.bf16.mxu0 0
        %1119 = vmatmul.mubr.bf16.gmra.mxu0 %v1075
        %v1120 = vpop.f32.mrf.mxu0
        %v1121 = vadd.f32 0.0, %v1120
        %v1122 = vpop.f32.mrf.mxu0
        %v1123 = vpop.f32.mrf.mxu0
        %v1124 = vadd.f32 0.0, %v1123
        %v1125 = vpop.f32.mrf.mxu0
        %1126 = vmatprep.mubr.bf16.mxu0 0
        %1127 = vmatmul.mubr.bf16.gmra.mxu0 %v1078
        %v1128 = vpop.f32.mrf.mxu0
        %v1129 = vadd.f32 0.0, %v1128
        %v1130 = vpop.f32.mrf.mxu0
        %v1131 = vpop.f32.mrf.mxu0
        %v1132 = vadd.f32 0.0, %v1131
        %v1133 = vpop.f32.mrf.mxu0
        %1134 = vmatprep.mubr.bf16.mxu0 0
        %1135 = vmatmul.mubr.bf16.gmra.mxu0 %v1081
        %v1136 = vpop.f32.mrf.mxu0
        %v1137 = vadd.f32 0.0, %v1136
        %v1138 = vpop.f32.mrf.mxu0
        %v1139 = vpop.f32.mrf.mxu0
        %v1140 = vadd.f32 0.0, %v1139
        %v1141 = vpop.f32.mrf.mxu0
        %1142 = vmatprep.mubr.bf16.mxu0 0
        %1143 = vmatmul.mubr.bf16.gmra.mxu0 %v1084
        %v1144 = vpop.f32.mrf.mxu0
        %v1145 = vadd.f32 0.0, %v1144
        %v1146 = vpop.f32.mrf.mxu0
        %v1147 = vpop.f32.mrf.mxu0
        %v1148 = vadd.f32 0.0, %v1147
        %v1149 = vpop.f32.mrf.mxu0
        %1150 = vdwg.mxu0
        %v1151 = vadd.f32 %v1007, %v1121
        %v1152 = vadd.f32 %v1010, %v1124
        %v1153 = vadd.f32 %v1015, %v1129
        %v1154 = vadd.f32 %v1018, %v1132
        %v1155 = vadd.f32 %v1023, %v1137
        %v1156 = vadd.f32 %v1026, %v1140
        %v1157 = vadd.f32 %v1031, %v1145
        %v1158 = vadd.f32 %v1034, %v1148
        %v1159 = vld [vmem:[#allocation2 + $0xf] sm:$0xff]
        %v1160 = vld [vmem:[#allocation2 + $0x17] sm:$0xff]
        %v1161 = vld [vmem:[#allocation2 + $0x1f] sm:$0xff]
        %v1162 = vld [vmem:[#allocation2 + $0x27] sm:$0xff]
        %v1163 = vld [vmem:[#allocation2 + $0x2f] sm:$0xff]
        %v1164 = vld [vmem:[#allocation2 + $0x37] sm:$0xff]
        %v1165 = vld [vmem:[#allocation2 + $0x3f] sm:$0xff]
        %v1166 = vld [vmem:[#allocation2 + $0x47] sm:$0xff]
        %v1167 = vmul.f32 %v1159, %v786
        %v1168 = vmul.f32 %v1160, %v787
        %v1169 = vmul.f32 %v1161, %v788
        %v1170 = vmul.f32 %v1162, %v789
        %v1171 = vmul.f32 %v1163, %v790
        %v1172 = vmul.f32 %v1164, %v791
        %v1173 = vmul.f32 %v1165, %v792
        %v1174 = vmul.f32 %v1166, %v793
        %v1175 = vpack.c.bf16 %v1168, %v1167
        %v1176 = vpack.c.bf16 %v1170, %v1169
        %v1177 = vpack.c.bf16 %v1172, %v1171
        %v1178 = vpack.c.bf16 %v1174, %v1173
        %s1179 = scalar_lea.vmem %s4, 48
        %v1180 = vld [vmem:[%s1179] sm:$0xf]
        %v1181 = vld [vmem:[%s1179 + $0x4] sm:$0xf]
        %v1182 = vld [vmem:[%s1179 + $0x8] sm:$0xf]
        %v1183 = vld [vmem:[%s1179 + $0xc] sm:$0xf]
        %v1188 = vunpack.c.l.b16 %v1180
        %v1189 = vunpack.c.l.b16 %v1181
        %v1190 = vunpack.c.l.b16 %v1182
        %v1191 = vunpack.c.l.b16 %v1183
        %v1192 = vpack.c.b16 %v1189, %v1188
        %v1193 = vpack.c.b16 %v1191, %v1190
        %v1197 = vsel %vm652, %v1175, 0
        %v1200 = vsel %vm652, %v1176, 0
        %v1203 = vsel %vm652, %v1177, 0
        %v1206 = vsel %vm652, %v1178, 0
        %1208 = vmatprep.subr.bf16.mxu0 0
        %1209 = vmatpush1.bf16.msra.mxu0 0
        %1210 = vmatprep.subr.bf16.mxu0 0
        %1211 = vmatpush1.bf16.msra.mxu0 0
        %1212 = vmatprep.subr.bf16.mxu0 0
        %1213 = vmatpush1.bf16.msra.mxu0 0
        %1214 = vmatprep.subr.bf16.mxu0 0
        %1215 = vmatpush1.bf16.msra.mxu0 0
        %1216 = vmatprep.subr.bf16.mxu0 0
        %1217 = vmatpush1.bf16.msra.mxu0 0
        %1218 = vmatprep.subr.bf16.mxu0 0
        %1219 = vmatpush1.bf16.msra.mxu0 0
        %1220 = vmatprep.subr.bf16.mxu0 0
        %1221 = vmatpush1.bf16.msra.mxu0 %v1193
        %1222 = vmatprep.subr.bf16.mxu0 0
        %1223 = vmatpush1.bf16.msra.mxu0 %v1192
        %1224 = vmatprep.subr.bf16.mxu0 0
        %1225 = vmatpush2.bf16.msra.mxu0 0
        %1226 = vmatprep.subr.bf16.mxu0 0
        %1227 = vmatpush2.bf16.msra.mxu0 0
        %1228 = vmatprep.subr.bf16.mxu0 0
        %1229 = vmatpush2.bf16.msra.mxu0 0
        %1230 = vmatprep.subr.bf16.mxu0 0
        %1231 = vmatpush2.bf16.msra.mxu0 0
        %1232 = vmatprep.subr.bf16.mxu0 0
        %1233 = vmatpush2.bf16.msra.mxu0 0
        %1234 = vmatprep.subr.bf16.mxu0 0
        %1235 = vmatpush2.bf16.msra.mxu0 0
        %1236 = vmatprep.subr.bf16.mxu0 0
        %1237 = vmatpush2.bf16.msra.mxu0 0
        %1238 = vmatprep.subr.bf16.mxu0 0
        %1239 = vmatpush2.bf16.msra.mxu0 0
        %1240 = vmatprep.mubr.bf16.mxu0 0
        %1241 = vmatmul.mubr.bf16.gmra.mxu0 %v1197
        %v1242 = vpop.f32.mrf.mxu0
        %v1243 = vadd.f32 0.0, %v1242
        %v1244 = vpop.f32.mrf.mxu0
        %v1245 = vpop.f32.mrf.mxu0
        %v1246 = vadd.f32 0.0, %v1245
        %v1247 = vpop.f32.mrf.mxu0
        %1248 = vmatprep.mubr.bf16.mxu0 0
        %1249 = vmatmul.mubr.bf16.gmra.mxu0 %v1200
        %v1250 = vpop.f32.mrf.mxu0
        %v1251 = vadd.f32 0.0, %v1250
        %v1252 = vpop.f32.mrf.mxu0
        %v1253 = vpop.f32.mrf.mxu0
        %v1254 = vadd.f32 0.0, %v1253
        %v1255 = vpop.f32.mrf.mxu0
        %1256 = vmatprep.mubr.bf16.mxu0 0
        %1257 = vmatmul.mubr.bf16.gmra.mxu0 %v1203
        %v1258 = vpop.f32.mrf.mxu0
        %v1259 = vadd.f32 0.0, %v1258
        %v1260 = vpop.f32.mrf.mxu0
        %v1261 = vpop.f32.mrf.mxu0
        %v1262 = vadd.f32 0.0, %v1261
        %v1263 = vpop.f32.mrf.mxu0
        %1264 = vmatprep.mubr.bf16.mxu0 0
        %1265 = vmatmul.mubr.bf16.gmra.mxu0 %v1206
        %v1266 = vpop.f32.mrf.mxu0
        %v1267 = vadd.f32 0.0, %v1266
        %v1268 = vpop.f32.mrf.mxu0
        %v1269 = vpop.f32.mrf.mxu0
        %v1270 = vadd.f32 0.0, %v1269
        %v1271 = vpop.f32.mrf.mxu0
        %1272 = vdwg.mxu0
        %v1273 = vadd.f32 %v1151, %v1243
        %v1274 = vadd.f32 %v1152, %v1246
        %v1275 = vadd.f32 %v1153, %v1251
        %v1276 = vadd.f32 %v1154, %v1254
        %v1277 = vadd.f32 %v1155, %v1259
        %v1278 = vadd.f32 %v1156, %v1262
        %v1279 = vadd.f32 %v1157, %v1267
        %v1280 = vadd.f32 %v1158, %v1270
        %v1281 = vld [vmem:[#allocation2 + $0x10] sm:$0xff]
        %v1282 = vld [vmem:[#allocation2 + $0x18] sm:$0xff]
        %v1283 = vld [vmem:[#allocation2 + $0x20] sm:$0xff]
        %v1284 = vld [vmem:[#allocation2 + $0x28] sm:$0xff]
        %v1285 = vld [vmem:[#allocation2 + $0x30] sm:$0xff]
        %v1286 = vld [vmem:[#allocation2 + $0x38] sm:$0xff]
        %v1287 = vld [vmem:[#allocation2 + $0x40] sm:$0xff]
        %v1288 = vld [vmem:[#allocation2 + $0x48] sm:$0xff]
        %v1289 = vpack.c.bf16 %v1282, %v1281
        %v1290 = vpack.c.bf16 %v1284, %v1283
        %v1291 = vpack.c.bf16 %v1286, %v1285
        %v1292 = vpack.c.bf16 %v1288, %v1287
        %s1293 = scalar_lea.vmem %s4, 64
        %v1294 = vld [vmem:[%s1293] sm:$0xf]
        %v1295 = vld [vmem:[%s1293 + $0x4] sm:$0xf]
        %v1296 = vld [vmem:[%s1293 + $0x8] sm:$0xf]
        %v1297 = vld [vmem:[%s1293 + $0xc] sm:$0xf]
        %v1302 = vunpack.c.l.b16 %v1294
        %v1303 = vunpack.c.l.b16 %v1295
        %v1304 = vunpack.c.l.b16 %v1296
        %v1305 = vunpack.c.l.b16 %v1297
        %v1306 = vpack.c.b16 %v1303, %v1302
        %v1307 = vpack.c.b16 %v1305, %v1304
        %v1311 = vsel %vm652, %v1289, 0
        %v1314 = vsel %vm652, %v1290, 0
        %v1317 = vsel %vm652, %v1291, 0
        %v1320 = vsel %vm652, %v1292, 0
        %1322 = vmatprep.subr.bf16.mxu0 0
        %1323 = vmatpush1.bf16.msra.mxu0 0
        %1324 = vmatprep.subr.bf16.mxu0 0
        %1325 = vmatpush1.bf16.msra.mxu0 0
        %1326 = vmatprep.subr.bf16.mxu0 0
        %1327 = vmatpush1.bf16.msra.mxu0 0
        %1328 = vmatprep.subr.bf16.mxu0 0
        %1329 = vmatpush1.bf16.msra.mxu0 0
        %1330 = vmatprep.subr.bf16.mxu0 0
        %1331 = vmatpush1.bf16.msra.mxu0 0
        %1332 = vmatprep.subr.bf16.mxu0 0
        %1333 = vmatpush1.bf16.msra.mxu0 0
        %1334 = vmatprep.subr.bf16.mxu0 0
        %1335 = vmatpush1.bf16.msra.mxu0 %v1307
        %1336 = vmatprep.subr.bf16.mxu0 0
        %1337 = vmatpush1.bf16.msra.mxu0 %v1306
        %1338 = vmatprep.subr.bf16.mxu0 0
        %1339 = vmatpush2.bf16.msra.mxu0 0
        %1340 = vmatprep.subr.bf16.mxu0 0
        %1341 = vmatpush2.bf16.msra.mxu0 0
        %1342 = vmatprep.subr.bf16.mxu0 0
        %1343 = vmatpush2.bf16.msra.mxu0 0
        %1344 = vmatprep.subr.bf16.mxu0 0
        %1345 = vmatpush2.bf16.msra.mxu0 0
        %1346 = vmatprep.subr.bf16.mxu0 0
        %1347 = vmatpush2.bf16.msra.mxu0 0
        %1348 = vmatprep.subr.bf16.mxu0 0
        %1349 = vmatpush2.bf16.msra.mxu0 0
        %1350 = vmatprep.subr.bf16.mxu0 0
        %1351 = vmatpush2.bf16.msra.mxu0 0
        %1352 = vmatprep.subr.bf16.mxu0 0
        %1353 = vmatpush2.bf16.msra.mxu0 0
        %1354 = vmatprep.mubr.bf16.mxu0 0
        %1355 = vmatmul.mubr.bf16.gmra.mxu0 %v1311
        %v1356 = vpop.f32.mrf.mxu0
        %v1357 = vadd.f32 0.0, %v1356
        %v1358 = vpop.f32.mrf.mxu0
        %v1359 = vpop.f32.mrf.mxu0
        %v1360 = vadd.f32 0.0, %v1359
        %v1361 = vpop.f32.mrf.mxu0
        %1362 = vmatprep.mubr.bf16.mxu0 0
        %1363 = vmatmul.mubr.bf16.gmra.mxu0 %v1314
        %v1364 = vpop.f32.mrf.mxu0
        %v1365 = vadd.f32 0.0, %v1364
        %v1366 = vpop.f32.mrf.mxu0
        %v1367 = vpop.f32.mrf.mxu0
        %v1368 = vadd.f32 0.0, %v1367
        %v1369 = vpop.f32.mrf.mxu0
        %1370 = vmatprep.mubr.bf16.mxu0 0
        %1371 = vmatmul.mubr.bf16.gmra.mxu0 %v1317
        %v1372 = vpop.f32.mrf.mxu0
        %v1373 = vadd.f32 0.0, %v1372
        %v1374 = vpop.f32.mrf.mxu0
        %v1375 = vpop.f32.mrf.mxu0
        %v1376 = vadd.f32 0.0, %v1375
        %v1377 = vpop.f32.mrf.mxu0
        %1378 = vmatprep.mubr.bf16.mxu0 0
        %1379 = vmatmul.mubr.bf16.gmra.mxu0 %v1320
        %v1380 = vpop.f32.mrf.mxu0
        %v1381 = vadd.f32 0.0, %v1380
        %v1382 = vpop.f32.mrf.mxu0
        %v1383 = vpop.f32.mrf.mxu0
        %v1384 = vadd.f32 0.0, %v1383
        %v1385 = vpop.f32.mrf.mxu0
        %1386 = vdwg.mxu0
        %v1387 = vadd.f32 %v1273, %v1357
        %v1388 = vadd.f32 %v1274, %v1360
        %v1389 = vadd.f32 %v1275, %v1365
        %v1390 = vadd.f32 %v1276, %v1368
        %v1391 = vadd.f32 %v1277, %v1373
        %v1392 = vadd.f32 %v1278, %v1376
        %v1393 = vadd.f32 %v1279, %v1381
        %v1394 = vadd.f32 %v1280, %v1384
        %v1395 = vld [vmem:[#allocation2 + $0x11] sm:$0xff]
        %v1396 = vld [vmem:[#allocation2 + $0x19] sm:$0xff]
        %v1397 = vld [vmem:[#allocation2 + $0x21] sm:$0xff]
        %v1398 = vld [vmem:[#allocation2 + $0x29] sm:$0xff]
        %v1399 = vld [vmem:[#allocation2 + $0x31] sm:$0xff]
        %v1400 = vld [vmem:[#allocation2 + $0x39] sm:$0xff]
        %v1401 = vld [vmem:[#allocation2 + $0x41] sm:$0xff]
        %v1402 = vld [vmem:[#allocation2 + $0x49] sm:$0xff]
        %v1403 = vmul.f32 %v1395, %v810
        %v1404 = vmul.f32 %v1396, %v811
        %v1405 = vmul.f32 %v1397, %v812
        %v1406 = vmul.f32 %v1398, %v813
        %v1407 = vmul.f32 %v1399, %v814
        %v1408 = vmul.f32 %v1400, %v815
        %v1409 = vmul.f32 %v1401, %v816
        %v1410 = vmul.f32 %v1402, %v817
        %v1411 = vpack.c.bf16 %v1404, %v1403
        %v1412 = vpack.c.bf16 %v1406, %v1405
        %v1413 = vpack.c.bf16 %v1408, %v1407
        %v1414 = vpack.c.bf16 %v1410, %v1409
        %s1415 = scalar_lea.vmem %s4, 80
        %v1416 = vld [vmem:[%s1415] sm:$0xf]
        %v1417 = vld [vmem:[%s1415 + $0x4] sm:$0xf]
        %v1418 = vld [vmem:[%s1415 + $0x8] sm:$0xf]
        %v1419 = vld [vmem:[%s1415 + $0xc] sm:$0xf]
        %v1424 = vunpack.c.l.b16 %v1416
        %v1425 = vunpack.c.l.b16 %v1417
        %v1426 = vunpack.c.l.b16 %v1418
        %v1427 = vunpack.c.l.b16 %v1419
        %v1428 = vpack.c.b16 %v1425, %v1424
        %v1429 = vpack.c.b16 %v1427, %v1426
        %v1433 = vsel %vm652, %v1411, 0
        %v1436 = vsel %vm652, %v1412, 0
        %v1439 = vsel %vm652, %v1413, 0
        %v1442 = vsel %vm652, %v1414, 0
        %1444 = vmatprep.subr.bf16.mxu0 0
        %1445 = vmatpush1.bf16.msra.mxu0 0
        %1446 = vmatprep.subr.bf16.mxu0 0
        %1447 = vmatpush1.bf16.msra.mxu0 0
        %1448 = vmatprep.subr.bf16.mxu0 0
        %1449 = vmatpush1.bf16.msra.mxu0 0
        %1450 = vmatprep.subr.bf16.mxu0 0
        %1451 = vmatpush1.bf16.msra.mxu0 0
        %1452 = vmatprep.subr.bf16.mxu0 0
        %1453 = vmatpush1.bf16.msra.mxu0 0
        %1454 = vmatprep.subr.bf16.mxu0 0
        %1455 = vmatpush1.bf16.msra.mxu0 0
        %1456 = vmatprep.subr.bf16.mxu0 0
        %1457 = vmatpush1.bf16.msra.mxu0 %v1429
        %1458 = vmatprep.subr.bf16.mxu0 0
        %1459 = vmatpush1.bf16.msra.mxu0 %v1428
        %1460 = vmatprep.subr.bf16.mxu0 0
        %1461 = vmatpush2.bf16.msra.mxu0 0
        %1462 = vmatprep.subr.bf16.mxu0 0
        %1463 = vmatpush2.bf16.msra.mxu0 0
        %1464 = vmatprep.subr.bf16.mxu0 0
        %1465 = vmatpush2.bf16.msra.mxu0 0
        %1466 = vmatprep.subr.bf16.mxu0 0
        %1467 = vmatpush2.bf16.msra.mxu0 0
        %1468 = vmatprep.subr.bf16.mxu0 0
        %1469 = vmatpush2.bf16.msra.mxu0 0
        %1470 = vmatprep.subr.bf16.mxu0 0
        %1471 = vmatpush2.bf16.msra.mxu0 0
        %1472 = vmatprep.subr.bf16.mxu0 0
        %1473 = vmatpush2.bf16.msra.mxu0 0
        %1474 = vmatprep.subr.bf16.mxu0 0
        %1475 = vmatpush2.bf16.msra.mxu0 0
        %1476 = vmatprep.mubr.bf16.mxu0 0
        %1477 = vmatmul.mubr.bf16.gmra.mxu0 %v1433
        %v1478 = vpop.f32.mrf.mxu0
        %v1479 = vadd.f32 0.0, %v1478
        %v1480 = vpop.f32.mrf.mxu0
        %v1481 = vpop.f32.mrf.mxu0
        %v1482 = vadd.f32 0.0, %v1481
        %v1483 = vpop.f32.mrf.mxu0
        %1484 = vmatprep.mubr.bf16.mxu0 0
        %1485 = vmatmul.mubr.bf16.gmra.mxu0 %v1436
        %v1486 = vpop.f32.mrf.mxu0
        %v1487 = vadd.f32 0.0, %v1486
        %v1488 = vpop.f32.mrf.mxu0
        %v1489 = vpop.f32.mrf.mxu0
        %v1490 = vadd.f32 0.0, %v1489
        %v1491 = vpop.f32.mrf.mxu0
        %1492 = vmatprep.mubr.bf16.mxu0 0
        %1493 = vmatmul.mubr.bf16.gmra.mxu0 %v1439
        %v1494 = vpop.f32.mrf.mxu0
        %v1495 = vadd.f32 0.0, %v1494
        %v1496 = vpop.f32.mrf.mxu0
        %v1497 = vpop.f32.mrf.mxu0
        %v1498 = vadd.f32 0.0, %v1497
        %v1499 = vpop.f32.mrf.mxu0
        %1500 = vmatprep.mubr.bf16.mxu0 0
        %1501 = vmatmul.mubr.bf16.gmra.mxu0 %v1442
        %v1502 = vpop.f32.mrf.mxu0
        %v1503 = vadd.f32 0.0, %v1502
        %v1504 = vpop.f32.mrf.mxu0
        %v1505 = vpop.f32.mrf.mxu0
        %v1506 = vadd.f32 0.0, %v1505
        %v1507 = vpop.f32.mrf.mxu0
        %1508 = vdwg.mxu0
        %v1509 = vadd.f32 %v1387, %v1479
        %v1510 = vadd.f32 %v1388, %v1482
        %v1511 = vadd.f32 %v1389, %v1487
        %v1512 = vadd.f32 %v1390, %v1490
        %v1513 = vadd.f32 %v1391, %v1495
        %v1514 = vadd.f32 %v1392, %v1498
        %v1515 = vadd.f32 %v1393, %v1503
        %v1516 = vadd.f32 %v1394, %v1506
        %v1517 = vld [vmem:[#allocation2 + $0x17] sm:$0xff]
        %v1518 = vld [vmem:[#allocation2 + $0x1f] sm:$0xff]
        %v1519 = vld [vmem:[#allocation2 + $0x27] sm:$0xff]
        %v1520 = vld [vmem:[#allocation2 + $0x2f] sm:$0xff]
        %v1521 = vld [vmem:[#allocation2 + $0x37] sm:$0xff]
        %v1522 = vld [vmem:[#allocation2 + $0x3f] sm:$0xff]
        %v1523 = vld [vmem:[#allocation2 + $0x47] sm:$0xff]
        %v1524 = vld [vmem:[#allocation2 + $0x4f] sm:$0xff]
        %v1525 = vmul.f32 %v1517, %v786
        %v1526 = vmul.f32 %v1518, %v787
        %v1527 = vmul.f32 %v1519, %v788
        %v1528 = vmul.f32 %v1520, %v789
        %v1529 = vmul.f32 %v1521, %v790
        %v1530 = vmul.f32 %v1522, %v791
        %v1531 = vmul.f32 %v1523, %v792
        %v1532 = vmul.f32 %v1524, %v793
        %v1533 = vpack.c.bf16 %v1526, %v1525
        %v1534 = vpack.c.bf16 %v1528, %v1527
        %v1535 = vpack.c.bf16 %v1530, %v1529
        %v1536 = vpack.c.bf16 %v1532, %v1531
        %s1537 = scalar_lea.vmem %s4, 96
        %v1538 = vld [vmem:[%s1537] sm:$0xf]
        %v1539 = vld [vmem:[%s1537 + $0x4] sm:$0xf]
        %v1540 = vld [vmem:[%s1537 + $0x8] sm:$0xf]
        %v1541 = vld [vmem:[%s1537 + $0xc] sm:$0xf]
        %v1546 = vunpack.c.l.b16 %v1538
        %v1547 = vunpack.c.l.b16 %v1539
        %v1548 = vunpack.c.l.b16 %v1540
        %v1549 = vunpack.c.l.b16 %v1541
        %v1550 = vpack.c.b16 %v1547, %v1546
        %v1551 = vpack.c.b16 %v1549, %v1548
        %v1555 = vsel %vm652, %v1533, 0
        %v1558 = vsel %vm652, %v1534, 0
        %v1561 = vsel %vm652, %v1535, 0
        %v1564 = vsel %vm652, %v1536, 0
        %1566 = vmatprep.subr.bf16.mxu0 0
        %1567 = vmatpush1.bf16.msra.mxu0 0
        %1568 = vmatprep.subr.bf16.mxu0 0
        %1569 = vmatpush1.bf16.msra.mxu0 0
        %1570 = vmatprep.subr.bf16.mxu0 0
        %1571 = vmatpush1.bf16.msra.mxu0 0
        %1572 = vmatprep.subr.bf16.mxu0 0
        %1573 = vmatpush1.bf16.msra.mxu0 0
        %1574 = vmatprep.subr.bf16.mxu0 0
        %1575 = vmatpush1.bf16.msra.mxu0 0
        %1576 = vmatprep.subr.bf16.mxu0 0
        %1577 = vmatpush1.bf16.msra.mxu0 0
        %1578 = vmatprep.subr.bf16.mxu0 0
        %1579 = vmatpush1.bf16.msra.mxu0 %v1551
        %1580 = vmatprep.subr.bf16.mxu0 0
        %1581 = vmatpush1.bf16.msra.mxu0 %v1550
        %1582 = vmatprep.subr.bf16.mxu0 0
        %1583 = vmatpush2.bf16.msra.mxu0 0
        %1584 = vmatprep.subr.bf16.mxu0 0
        %1585 = vmatpush2.bf16.msra.mxu0 0
        %1586 = vmatprep.subr.bf16.mxu0 0
        %1587 = vmatpush2.bf16.msra.mxu0 0
        %1588 = vmatprep.subr.bf16.mxu0 0
        %1589 = vmatpush2.bf16.msra.mxu0 0
        %1590 = vmatprep.subr.bf16.mxu0 0
        %1591 = vmatpush2.bf16.msra.mxu0 0
        %1592 = vmatprep.subr.bf16.mxu0 0
        %1593 = vmatpush2.bf16.msra.mxu0 0
        %1594 = vmatprep.subr.bf16.mxu0 0
        %1595 = vmatpush2.bf16.msra.mxu0 0
        %1596 = vmatprep.subr.bf16.mxu0 0
        %1597 = vmatpush2.bf16.msra.mxu0 0
        %1598 = vmatprep.mubr.bf16.mxu0 0
        %1599 = vmatmul.mubr.bf16.gmra.mxu0 %v1555
        %v1600 = vpop.f32.mrf.mxu0
        %v1601 = vadd.f32 0.0, %v1600
        %v1602 = vpop.f32.mrf.mxu0
        %v1603 = vpop.f32.mrf.mxu0
        %v1604 = vadd.f32 0.0, %v1603
        %v1605 = vpop.f32.mrf.mxu0
        %1606 = vmatprep.mubr.bf16.mxu0 0
        %1607 = vmatmul.mubr.bf16.gmra.mxu0 %v1558
        %v1608 = vpop.f32.mrf.mxu0
        %v1609 = vadd.f32 0.0, %v1608
        %v1610 = vpop.f32.mrf.mxu0
        %v1611 = vpop.f32.mrf.mxu0
        %v1612 = vadd.f32 0.0, %v1611
        %v1613 = vpop.f32.mrf.mxu0
        %1614 = vmatprep.mubr.bf16.mxu0 0
        %1615 = vmatmul.mubr.bf16.gmra.mxu0 %v1561
        %v1616 = vpop.f32.mrf.mxu0
        %v1617 = vadd.f32 0.0, %v1616
        %v1618 = vpop.f32.mrf.mxu0
        %v1619 = vpop.f32.mrf.mxu0
        %v1620 = vadd.f32 0.0, %v1619
        %v1621 = vpop.f32.mrf.mxu0
        %1622 = vmatprep.mubr.bf16.mxu0 0
        %1623 = vmatmul.mubr.bf16.gmra.mxu0 %v1564
        %v1624 = vpop.f32.mrf.mxu0
        %v1625 = vadd.f32 0.0, %v1624
        %v1626 = vpop.f32.mrf.mxu0
        %v1627 = vpop.f32.mrf.mxu0
        %v1628 = vadd.f32 0.0, %v1627
        %v1629 = vpop.f32.mrf.mxu0
        %1630 = vdwg.mxu0
        %v1631 = vadd.f32 %v1509, %v1601
        %v1632 = vadd.f32 %v1510, %v1604
        %v1633 = vadd.f32 %v1511, %v1609
        %v1634 = vadd.f32 %v1512, %v1612
        %v1635 = vadd.f32 %v1513, %v1617
        %v1636 = vadd.f32 %v1514, %v1620
        %v1637 = vadd.f32 %v1515, %v1625
        %v1638 = vadd.f32 %v1516, %v1628
        %v1639 = vld [vmem:[#allocation2 + $0x18] sm:$0xff]
        %v1640 = vld [vmem:[#allocation2 + $0x20] sm:$0xff]
        %v1641 = vld [vmem:[#allocation2 + $0x28] sm:$0xff]
        %v1642 = vld [vmem:[#allocation2 + $0x30] sm:$0xff]
        %v1643 = vld [vmem:[#allocation2 + $0x38] sm:$0xff]
        %v1644 = vld [vmem:[#allocation2 + $0x40] sm:$0xff]
        %v1645 = vld [vmem:[#allocation2 + $0x48] sm:$0xff]
        %v1646 = vld [vmem:[#allocation2 + $0x50] sm:$0xff]
        %v1647 = vpack.c.bf16 %v1640, %v1639
        %v1648 = vpack.c.bf16 %v1642, %v1641
        %v1649 = vpack.c.bf16 %v1644, %v1643
        %v1650 = vpack.c.bf16 %v1646, %v1645
        %s1651 = scalar_lea.vmem %s4, 112
        %v1652 = vld [vmem:[%s1651] sm:$0xf]
        %v1653 = vld [vmem:[%s1651 + $0x4] sm:$0xf]
        %v1654 = vld [vmem:[%s1651 + $0x8] sm:$0xf]
        %v1655 = vld [vmem:[%s1651 + $0xc] sm:$0xf]
        %v1660 = vunpack.c.l.b16 %v1652
        %v1661 = vunpack.c.l.b16 %v1653
        %v1662 = vunpack.c.l.b16 %v1654
        %v1663 = vunpack.c.l.b16 %v1655
        %v1664 = vpack.c.b16 %v1661, %v1660
        %v1665 = vpack.c.b16 %v1663, %v1662
        %v1669 = vsel %vm652, %v1647, 0
        %v1672 = vsel %vm652, %v1648, 0
        %v1675 = vsel %vm652, %v1649, 0
        %v1678 = vsel %vm652, %v1650, 0
        %1680 = vmatprep.subr.bf16.mxu0 0
        %1681 = vmatpush1.bf16.msra.mxu0 0
        %1682 = vmatprep.subr.bf16.mxu0 0
        %1683 = vmatpush1.bf16.msra.mxu0 0
        %1684 = vmatprep.subr.bf16.mxu0 0
        %1685 = vmatpush1.bf16.msra.mxu0 0
        %1686 = vmatprep.subr.bf16.mxu0 0
        %1687 = vmatpush1.bf16.msra.mxu0 0
        %1688 = vmatprep.subr.bf16.mxu0 0
        %1689 = vmatpush1.bf16.msra.mxu0 0
        %1690 = vmatprep.subr.bf16.mxu0 0
        %1691 = vmatpush1.bf16.msra.mxu0 0
        %1692 = vmatprep.subr.bf16.mxu0 0
        %1693 = vmatpush1.bf16.msra.mxu0 %v1665
        %1694 = vmatprep.subr.bf16.mxu0 0
        %1695 = vmatpush1.bf16.msra.mxu0 %v1664
        %1696 = vmatprep.subr.bf16.mxu0 0
        %1697 = vmatpush2.bf16.msra.mxu0 0
        %1698 = vmatprep.subr.bf16.mxu0 0
        %1699 = vmatpush2.bf16.msra.mxu0 0
        %1700 = vmatprep.subr.bf16.mxu0 0
        %1701 = vmatpush2.bf16.msra.mxu0 0
        %1702 = vmatprep.subr.bf16.mxu0 0
        %1703 = vmatpush2.bf16.msra.mxu0 0
        %1704 = vmatprep.subr.bf16.mxu0 0
        %1705 = vmatpush2.bf16.msra.mxu0 0
        %1706 = vmatprep.subr.bf16.mxu0 0
        %1707 = vmatpush2.bf16.msra.mxu0 0
        %1708 = vmatprep.subr.bf16.mxu0 0
        %1709 = vmatpush2.bf16.msra.mxu0 0
        %1710 = vmatprep.subr.bf16.mxu0 0
        %1711 = vmatpush2.bf16.msra.mxu0 0
        %1712 = vmatprep.mubr.bf16.mxu0 0
        %1713 = vmatmul.mubr.bf16.gmra.mxu0 %v1669
        %v1714 = vpop.f32.mrf.mxu0
        %v1715 = vadd.f32 0.0, %v1714
        %v1716 = vpop.f32.mrf.mxu0
        %v1717 = vpop.f32.mrf.mxu0
        %v1718 = vadd.f32 0.0, %v1717
        %v1719 = vpop.f32.mrf.mxu0
        %1720 = vmatprep.mubr.bf16.mxu0 0
        %1721 = vmatmul.mubr.bf16.gmra.mxu0 %v1672
        %v1722 = vpop.f32.mrf.mxu0
        %v1723 = vadd.f32 0.0, %v1722
        %v1724 = vpop.f32.mrf.mxu0
        %v1725 = vpop.f32.mrf.mxu0
        %v1726 = vadd.f32 0.0, %v1725
        %v1727 = vpop.f32.mrf.mxu0
        %1728 = vmatprep.mubr.bf16.mxu0 0
        %1729 = vmatmul.mubr.bf16.gmra.mxu0 %v1675
        %v1730 = vpop.f32.mrf.mxu0
        %v1731 = vadd.f32 0.0, %v1730
        %v1732 = vpop.f32.mrf.mxu0
        %v1733 = vpop.f32.mrf.mxu0
        %v1734 = vadd.f32 0.0, %v1733
        %v1735 = vpop.f32.mrf.mxu0
        %1736 = vmatprep.mubr.bf16.mxu0 0
        %1737 = vmatmul.mubr.bf16.gmra.mxu0 %v1678
        %v1738 = vpop.f32.mrf.mxu0
        %v1739 = vadd.f32 0.0, %v1738
        %v1740 = vpop.f32.mrf.mxu0
        %v1741 = vpop.f32.mrf.mxu0
        %v1742 = vadd.f32 0.0, %v1741
        %v1743 = vpop.f32.mrf.mxu0
        %1744 = vdwg.mxu0
        %v1745 = vadd.f32 %v1631, %v1715
        %v1746 = vadd.f32 %v1632, %v1718
        %v1747 = vadd.f32 %v1633, %v1723
        %v1748 = vadd.f32 %v1634, %v1726
        %v1749 = vadd.f32 %v1635, %v1731
        %v1750 = vadd.f32 %v1636, %v1734
        %v1751 = vadd.f32 %v1637, %v1739
        %v1752 = vadd.f32 %v1638, %v1742
        %v1753 = vld [vmem:[#allocation2 + $0x19] sm:$0xff]
        %v1754 = vld [vmem:[#allocation2 + $0x21] sm:$0xff]
        %v1755 = vld [vmem:[#allocation2 + $0x29] sm:$0xff]
        %v1756 = vld [vmem:[#allocation2 + $0x31] sm:$0xff]
        %v1757 = vld [vmem:[#allocation2 + $0x39] sm:$0xff]
        %v1758 = vld [vmem:[#allocation2 + $0x41] sm:$0xff]
        %v1759 = vld [vmem:[#allocation2 + $0x49] sm:$0xff]
        %v1760 = vld [vmem:[#allocation2 + $0x51] sm:$0xff]
        %v1761 = vmul.f32 %v1753, %v810
        %v1762 = vmul.f32 %v1754, %v811
        %v1763 = vmul.f32 %v1755, %v812
        %v1764 = vmul.f32 %v1756, %v813
        %v1765 = vmul.f32 %v1757, %v814
        %v1766 = vmul.f32 %v1758, %v815
        %v1767 = vmul.f32 %v1759, %v816
        %v1768 = vmul.f32 %v1760, %v817
        %v1769 = vpack.c.bf16 %v1762, %v1761
        %v1770 = vpack.c.bf16 %v1764, %v1763
        %v1771 = vpack.c.bf16 %v1766, %v1765
        %v1772 = vpack.c.bf16 %v1768, %v1767
        %s1773 = scalar_lea.vmem %s4, 128
        %v1774 = vld [vmem:[%s1773] sm:$0xf]
        %v1775 = vld [vmem:[%s1773 + $0x4] sm:$0xf]
        %v1776 = vld [vmem:[%s1773 + $0x8] sm:$0xf]
        %v1777 = vld [vmem:[%s1773 + $0xc] sm:$0xf]
        %v1782 = vunpack.c.l.b16 %v1774
        %v1783 = vunpack.c.l.b16 %v1775
        %v1784 = vunpack.c.l.b16 %v1776
        %v1785 = vunpack.c.l.b16 %v1777
        %v1786 = vpack.c.b16 %v1783, %v1782
        %v1787 = vpack.c.b16 %v1785, %v1784
        %v1791 = vsel %vm652, %v1769, 0
        %v1794 = vsel %vm652, %v1770, 0
        %v1797 = vsel %vm652, %v1771, 0
        %v1800 = vsel %vm652, %v1772, 0
        %1802 = vmatprep.subr.bf16.mxu0 0
        %1803 = vmatpush1.bf16.msra.mxu0 0
        %1804 = vmatprep.subr.bf16.mxu0 0
        %1805 = vmatpush1.bf16.msra.mxu0 0
        %1806 = vmatprep.subr.bf16.mxu0 0
        %1807 = vmatpush1.bf16.msra.mxu0 0
        %1808 = vmatprep.subr.bf16.mxu0 0
        %1809 = vmatpush1.bf16.msra.mxu0 0
        %1810 = vmatprep.subr.bf16.mxu0 0
        %1811 = vmatpush1.bf16.msra.mxu0 0
        %1812 = vmatprep.subr.bf16.mxu0 0
        %1813 = vmatpush1.bf16.msra.mxu0 0
        %1814 = vmatprep.subr.bf16.mxu0 0
        %1815 = vmatpush1.bf16.msra.mxu0 %v1787
        %1816 = vmatprep.subr.bf16.mxu0 0
        %1817 = vmatpush1.bf16.msra.mxu0 %v1786
        %1818 = vmatprep.subr.bf16.mxu0 0
        %1819 = vmatpush2.bf16.msra.mxu0 0
        %1820 = vmatprep.subr.bf16.mxu0 0
        %1821 = vmatpush2.bf16.msra.mxu0 0
        %1822 = vmatprep.subr.bf16.mxu0 0
        %1823 = vmatpush2.bf16.msra.mxu0 0
        %1824 = vmatprep.subr.bf16.mxu0 0
        %1825 = vmatpush2.bf16.msra.mxu0 0
        %1826 = vmatprep.subr.bf16.mxu0 0
        %1827 = vmatpush2.bf16.msra.mxu0 0
        %1828 = vmatprep.subr.bf16.mxu0 0
        %1829 = vmatpush2.bf16.msra.mxu0 0
        %1830 = vmatprep.subr.bf16.mxu0 0
        %1831 = vmatpush2.bf16.msra.mxu0 0
        %1832 = vmatprep.subr.bf16.mxu0 0
        %1833 = vmatpush2.bf16.msra.mxu0 0
        %1834 = vmatprep.mubr.bf16.mxu0 0
        %1835 = vmatmul.mubr.bf16.gmra.mxu0 %v1791
        %v1836 = vpop.f32.mrf.mxu0
        %v1837 = vadd.f32 0.0, %v1836
        %v1838 = vpop.f32.mrf.mxu0
        %v1839 = vpop.f32.mrf.mxu0
        %v1840 = vadd.f32 0.0, %v1839
        %v1841 = vpop.f32.mrf.mxu0
        %1842 = vmatprep.mubr.bf16.mxu0 0
        %1843 = vmatmul.mubr.bf16.gmra.mxu0 %v1794
        %v1844 = vpop.f32.mrf.mxu0
        %v1845 = vadd.f32 0.0, %v1844
        %v1846 = vpop.f32.mrf.mxu0
        %v1847 = vpop.f32.mrf.mxu0
        %v1848 = vadd.f32 0.0, %v1847
        %v1849 = vpop.f32.mrf.mxu0
        %1850 = vmatprep.mubr.bf16.mxu0 0
        %1851 = vmatmul.mubr.bf16.gmra.mxu0 %v1797
        %v1852 = vpop.f32.mrf.mxu0
        %v1853 = vadd.f32 0.0, %v1852
        %v1854 = vpop.f32.mrf.mxu0
        %v1855 = vpop.f32.mrf.mxu0
        %v1856 = vadd.f32 0.0, %v1855
        %v1857 = vpop.f32.mrf.mxu0
        %1858 = vmatprep.mubr.bf16.mxu0 0
        %1859 = vmatmul.mubr.bf16.gmra.mxu0 %v1800
        %v1860 = vpop.f32.mrf.mxu0
        %v1861 = vadd.f32 0.0, %v1860
        %v1862 = vpop.f32.mrf.mxu0
        %v1863 = vpop.f32.mrf.mxu0
        %v1864 = vadd.f32 0.0, %v1863
        %v1865 = vpop.f32.mrf.mxu0
        %1866 = vdwg.mxu0
        %v1867 = vadd.f32 %v1745, %v1837
        %v1868 = vadd.f32 %v1746, %v1840
        %v1869 = vadd.f32 %v1747, %v1845
        %v1870 = vadd.f32 %v1748, %v1848
        %v1871 = vadd.f32 %v1749, %v1853
        %v1872 = vadd.f32 %v1750, %v1856
        %v1873 = vadd.f32 %v1751, %v1861
        %v1874 = vadd.f32 %v1752, %v1864
        %v1875 = vld [vmem:[%s5] sm:$0x1]
        %v1877 = vlaneseq
        %v1878 = vshrl.u32 %v1877, 7
        %v1879 = vsub.s32 0, %v1878
        %v1880 = vrot.slane %v1875, %v1879
        %v1882 = vadd.f32 %v1867, %v1880
        %v1883 = vadd.f32 %v1868, %v1880
        %v1884 = vadd.f32 %v1869, %v1880
        %v1885 = vadd.f32 %v1870, %v1880
        %v1886 = vadd.f32 %v1871, %v1880
        %v1887 = vadd.f32 %v1872, %v1880
        %v1888 = vadd.f32 %v1873, %v1880
        %v1889 = vadd.f32 %v1874, %v1880
        %v1890 = vmax.f32 %v1882, 0.0
        %v1891 = vmax.f32 %v1883, 0.0
        %v1892 = vmax.f32 %v1884, 0.0
        %v1893 = vmax.f32 %v1885, 0.0
        %v1894 = vmax.f32 %v1886, 0.0
        %v1895 = vmax.f32 %v1887, 0.0
        %v1896 = vmax.f32 %v1888, 0.0
        %v1897 = vmax.f32 %v1889, 0.0
        %v1898 = vpack.c.bf16 %v1891, %v1890
        %v1899 = vpack.c.bf16 %v1893, %v1892
        %v1900 = vpack.c.bf16 %v1895, %v1894
        %v1901 = vpack.c.bf16 %v1897, %v1896
        %v1902 = vld [vmem:[%s10] sm:$0xf]
        %v1903 = vld [vmem:[%s10 + $0x4] sm:$0xf]
        %v1904 = vld [vmem:[%s10 + $0x8] sm:$0xf]
        %v1905 = vld [vmem:[%s10 + $0xc] sm:$0xf]
        %v1910 = vunpack.c.l.b16 %v1902
        %v1911 = vunpack.c.l.b16 %v1903
        %v1912 = vunpack.c.l.b16 %v1904
        %v1913 = vunpack.c.l.b16 %v1905
        %v1914 = vpack.c.b16 %v1911, %v1910
        %v1915 = vpack.c.b16 %v1913, %v1912
        %v1919 = vsel %vm652, %v1898, 0
        %v1922 = vsel %vm652, %v1899, 0
        %v1925 = vsel %vm652, %v1900, 0
        %v1928 = vsel %vm652, %v1901, 0
        %1930 = vmatprep.subr.bf16.mxu0 0
        %1931 = vmatpush1.bf16.msra.mxu0 0
        %1932 = vmatprep.subr.bf16.mxu0 0
        %1933 = vmatpush1.bf16.msra.mxu0 0
        %1934 = vmatprep.subr.bf16.mxu0 0
        %1935 = vmatpush1.bf16.msra.mxu0 0
        %1936 = vmatprep.subr.bf16.mxu0 0
        %1937 = vmatpush1.bf16.msra.mxu0 0
        %1938 = vmatprep.subr.bf16.mxu0 0
        %1939 = vmatpush1.bf16.msra.mxu0 0
        %1940 = vmatprep.subr.bf16.mxu0 0
        %1941 = vmatpush1.bf16.msra.mxu0 0
        %1942 = vmatprep.subr.bf16.mxu0 0
        %1943 = vmatpush1.bf16.msra.mxu0 %v1915
        %1944 = vmatprep.subr.bf16.mxu0 0
        %1945 = vmatpush1.bf16.msra.mxu0 %v1914
        %1946 = vmatprep.subr.bf16.mxu0 0
        %1947 = vmatpush2.bf16.msra.mxu0 0
        %1948 = vmatprep.subr.bf16.mxu0 0
        %1949 = vmatpush2.bf16.msra.mxu0 0
        %1950 = vmatprep.subr.bf16.mxu0 0
        %1951 = vmatpush2.bf16.msra.mxu0 0
        %1952 = vmatprep.subr.bf16.mxu0 0
        %1953 = vmatpush2.bf16.msra.mxu0 0
        %1954 = vmatprep.subr.bf16.mxu0 0
        %1955 = vmatpush2.bf16.msra.mxu0 0
        %1956 = vmatprep.subr.bf16.mxu0 0
        %1957 = vmatpush2.bf16.msra.mxu0 0
        %1958 = vmatprep.subr.bf16.mxu0 0
        %1959 = vmatpush2.bf16.msra.mxu0 0
        %1960 = vmatprep.subr.bf16.mxu0 0
        %1961 = vmatpush2.bf16.msra.mxu0 0
        %1962 = vmatprep.mubr.bf16.mxu0 0
        %1963 = vmatmul.mubr.bf16.gmra.mxu0 %v1919
        %v1964 = vpop.f32.mrf.mxu0
        %v1965 = vadd.f32 0.0, %v1964
        %v1966 = vpop.f32.mrf.mxu0
        %v1967 = vpop.f32.mrf.mxu0
        %v1968 = vadd.f32 0.0, %v1967
        %v1969 = vpop.f32.mrf.mxu0
        %1970 = vmatprep.mubr.bf16.mxu0 0
        %1971 = vmatmul.mubr.bf16.gmra.mxu0 %v1922
        %v1972 = vpop.f32.mrf.mxu0
        %v1973 = vadd.f32 0.0, %v1972
        %v1974 = vpop.f32.mrf.mxu0
        %v1975 = vpop.f32.mrf.mxu0
        %v1976 = vadd.f32 0.0, %v1975
        %v1977 = vpop.f32.mrf.mxu0
        %1978 = vmatprep.mubr.bf16.mxu0 0
        %1979 = vmatmul.mubr.bf16.gmra.mxu0 %v1925
        %v1980 = vpop.f32.mrf.mxu0
        %v1981 = vadd.f32 0.0, %v1980
        %v1982 = vpop.f32.mrf.mxu0
        %v1983 = vpop.f32.mrf.mxu0
        %v1984 = vadd.f32 0.0, %v1983
        %v1985 = vpop.f32.mrf.mxu0
        %1986 = vmatprep.mubr.bf16.mxu0 0
        %1987 = vmatmul.mubr.bf16.gmra.mxu0 %v1928
        %v1988 = vpop.f32.mrf.mxu0
        %v1989 = vadd.f32 0.0, %v1988
        %v1990 = vpop.f32.mrf.mxu0
        %v1991 = vpop.f32.mrf.mxu0
        %v1992 = vadd.f32 0.0, %v1991
        %v1993 = vpop.f32.mrf.mxu0
        %1994 = vdwg.mxu0
        %1995 = vst [vmem:[#allocation3] sm:$0xff] %v1965
        %1996 = vst [vmem:[#allocation3 + $0x8] sm:$0xff] %v1968
        %1997 = vst [vmem:[#allocation3 + $0x10] sm:$0xff] %v1973
        %1998 = vst [vmem:[#allocation3 + $0x18] sm:$0xff] %v1976
        %1999 = vst [vmem:[#allocation3 + $0x20] sm:$0xff] %v1981
        %2000 = vst [vmem:[#allocation3 + $0x28] sm:$0xff] %v1984
        %2001 = vst [vmem:[#allocation3 + $0x30] sm:$0xff] %v1989
        %2002 = vst [vmem:[#allocation3 + $0x38] sm:$0xff] %v1992
        %v2003 = vld [vmem:[%s6] sm:$0xff]
        %v2004 = vld [vmem:[%s6 + $0x8] sm:$0xff]
        %vm2005 = vcmask 523264
        %v2007 = vsel %vm2005, %v2003, 0
        %v2010 = vsel %vm2005, %v2004, 0
        %2012 = vmatprep.subr.mxu0 0.0
        %2013 = vmatpush1.msra.mxu0 0.0
        %2014 = vmatprep.subr.mxu0 0.0
        %2015 = vmatpush1.msra.mxu0 0.0
        %2016 = vmatprep.subr.mxu0 0.0
        %2017 = vmatpush1.msra.mxu0 0.0
        %2018 = vmatprep.subr.mxu0 0.0
        %2019 = vmatpush1.msra.mxu0 0.0
        %2020 = vmatprep.subr.mxu0 0.0
        %2021 = vmatpush1.msra.mxu0 0.0
        %2022 = vmatprep.subr.mxu0 0.0
        %2023 = vmatpush1.msra.mxu0 0.0
        %2024 = vmatprep.subr.mxu0 0.0
        %2025 = vmatpush1.msra.mxu0 0.0
        %2026 = vmatprep.subr.mxu0 0.0
        %2027 = vmatpush1.msra.mxu0 0.0
        %2028 = vmatprep.subr.mxu0 0.0
        %2029 = vmatpush1.msra.mxu0 %v1897
        %2030 = vmatprep.subr.mxu0 0.0
        %2031 = vmatpush1.msra.mxu0 %v1896
        %2032 = vmatprep.subr.mxu0 0.0
        %2033 = vmatpush1.msra.mxu0 %v1895
        %2034 = vmatprep.subr.mxu0 0.0
        %2035 = vmatpush1.msra.mxu0 %v1894
        %2036 = vmatprep.subr.mxu0 0.0
        %2037 = vmatpush1.msra.mxu0 %v1893
        %2038 = vmatprep.subr.mxu0 0.0
        %2039 = vmatpush1.msra.mxu0 %v1892
        %2040 = vmatprep.subr.mxu0 0.0
        %2041 = vmatpush1.msra.mxu0 %v1891
        %2042 = vmatprep.subr.mxu0 0.0
        %2043 = vmatpush1.msra.mxu0 %v1890
        %2044 = vmatprep.subr.mxu0 0.0
        %2045 = vmatpush2.msra.mxu0 0.0
        %2046 = vmatprep.subr.mxu0 0.0
        %2047 = vmatpush2.msra.mxu0 0.0
        %2048 = vmatprep.subr.mxu0 0.0
        %2049 = vmatpush2.msra.mxu0 0.0
        %2050 = vmatprep.subr.mxu0 0.0
        %2051 = vmatpush2.msra.mxu0 0.0
        %2052 = vmatprep.subr.mxu0 0.0
        %2053 = vmatpush2.msra.mxu0 0.0
        %2054 = vmatprep.subr.mxu0 0.0
        %2055 = vmatpush2.msra.mxu0 0.0
        %2056 = vmatprep.subr.mxu0 0.0
        %2057 = vmatpush2.msra.mxu0 0.0
        %2058 = vmatprep.subr.mxu0 0.0
        %2059 = vmatpush2.msra.mxu0 0.0
        %2060 = vmatprep.subr.mxu0 0.0
        %2061 = vmatpush2.msra.mxu0 0.0
        %2062 = vmatprep.subr.mxu0 0.0
        %2063 = vmatpush2.msra.mxu0 0.0
        %2064 = vmatprep.subr.mxu0 0.0
        %2065 = vmatpush2.msra.mxu0 0.0
        %2066 = vmatprep.subr.mxu0 0.0
        %2067 = vmatpush2.msra.mxu0 0.0
        %2068 = vmatprep.subr.mxu0 0.0
        %2069 = vmatpush2.msra.mxu0 0.0
        %2070 = vmatprep.subr.mxu0 0.0
        %2071 = vmatpush2.msra.mxu0 0.0
        %2072 = vmatprep.subr.mxu0 0.0
        %2073 = vmatpush2.msra.mxu0 0.0
        %2074 = vmatprep.subr.mxu0 0.0
        %2075 = vmatpush2.msra.mxu0 0.0
        %2076 = vmatprep.mubr.f32.mxu0 0.0
        %2077 = vmatmul.mubr.f32.gmra.mxu0 %v2007
        %v2078 = vpop.f32.mrf.mxu0
        %v2079 = vadd.f32 0.0, %v2078
        %v2080 = vpop.f32.mrf.mxu0
        %2081 = vmatprep.mubr.f32.mxu0 0.0
        %2082 = vmatmul.mubr.f32.gmra.mxu0 %v2010
        %v2083 = vpop.f32.mrf.mxu0
        %v2084 = vadd.f32 0.0, %v2083
        %v2085 = vpop.f32.mrf.mxu0
        %2086 = vdwg.mxu0
        %v2087 = vsel %vm652, %v2079, 0.0
        %2088 = vadd.xlane.f32.xlu0 %v2087
        %v2089 = vpop.xlane.xlu0 %2088
        %v2090 = vsel %vm652, %v2084, 0.0
        %2091 = vadd.xlane.f32.xlu0 %v2090
        %v2092 = vpop.xlane.xlu0 %2091
        %v2093 = vrcp.pop 32.0
        %v2094 = vmul.f32 %v2089, %v2093
        %v2095 = vmul.f32 %v2092, %v2093
        %v2096 = vsub.f32 %v2079, %v2094
        %v2097 = vsub.f32 %v2084, %v2095
        %v2098 = vmul.f32 %v2096, %v2096
        %v2099 = vmul.f32 %v2097, %v2097
        %v2100 = vsel %vm652, %v2098, 0.0
        %2101 = vadd.xlane.f32.xlu0 %v2100
        %v2102 = vpop.xlane.xlu0 %2101
        %v2103 = vsel %vm652, %v2099, 0.0
        %2104 = vadd.xlane.f32.xlu0 %v2103
        %v2105 = vpop.xlane.xlu0 %2104
        %v2106 = vmul.f32 %v2102, %v2093
        %v2107 = vmul.f32 %v2105, %v2093
        %v2108 = vadd.f32 %v2106, 1e-05
        %v2109 = vadd.f32 %v2107, 1e-05
        %v2110 = vrsqrt.pop %v2108
        %v2111 = vrsqrt.pop %v2109
        %v2112 = vmul.f32 %v2096, %v2110
        %v2113 = vmul.f32 %v2097, %v2111
        %v2114 = vld [vmem:[%s7] sm:$0x1]
        %v2116 = vlaneseq
        %v2117 = vshrl.u32 %v2116, 7
        %v2118 = vsub.s32 0, %v2117
        %v2119 = vrot.slane %v2114, %v2118
        %v2121 = vmul.f32 %v2112, %v2119
        %v2122 = vmul.f32 %v2113, %v2119
        %v2123 = vld [vmem:[%s8] sm:$0x1]
        %v2125 = vlaneseq
        %v2126 = vshrl.u32 %v2125, 7
        %v2127 = vsub.s32 0, %v2126
        %v2128 = vrot.slane %v2123, %v2127
        %v2130 = vadd.f32 %v2121, %v2128
        %v2131 = vadd.f32 %v2122, %v2128
        %v2132 = vpack.c.bf16 %v2131, %v2130
        %v2133 = vld [vmem:[%s9] sm:$0xf]
        %v2134 = vld [vmem:[%s9 + $0x4] sm:$0xf]
        %v2135 = vld [vmem:[%s9 + $0x8] sm:$0xf]
        %v2136 = vld [vmem:[%s9 + $0xc] sm:$0xf]
        %v2141 = vunpack.c.l.b16 %v2133
        %v2142 = vunpack.c.l.b16 %v2134
        %v2143 = vunpack.c.l.b16 %v2135
        %v2144 = vunpack.c.l.b16 %v2136
        %v2145 = vpack.c.b16 %v2142, %v2141
        %v2146 = vpack.c.b16 %v2144, %v2143
        %v2150 = vsel %vm652, %v2132, 0
        %2152 = vmatprep.subr.bf16.mxu0 0
        %2153 = vmatpush1.bf16.msra.mxu0 0
        %2154 = vmatprep.subr.bf16.mxu0 0
        %2155 = vmatpush1.bf16.msra.mxu0 0
        %2156 = vmatprep.subr.bf16.mxu0 0
        %2157 = vmatpush1.bf16.msra.mxu0 0
        %2158 = vmatprep.subr.bf16.mxu0 0
        %2159 = vmatpush1.bf16.msra.mxu0 0
        %2160 = vmatprep.subr.bf16.mxu0 0
        %2161 = vmatpush1.bf16.msra.mxu0 0
        %2162 = vmatprep.subr.bf16.mxu0 0
        %2163 = vmatpush1.bf16.msra.mxu0 0
        %2164 = vmatprep.subr.bf16.mxu0 0
        %2165 = vmatpush1.bf16.msra.mxu0 %v2146
        %2166 = vmatprep.subr.bf16.mxu0 0
        %2167 = vmatpush1.bf16.msra.mxu0 %v2145
        %2168 = vmatprep.subr.bf16.mxu0 0
        %2169 = vmatpush2.bf16.msra.mxu0 0
        %2170 = vmatprep.subr.bf16.mxu0 0
        %2171 = vmatpush2.bf16.msra.mxu0 0
        %2172 = vmatprep.subr.bf16.mxu0 0
        %2173 = vmatpush2.bf16.msra.mxu0 0
        %2174 = vmatprep.subr.bf16.mxu0 0
        %2175 = vmatpush2.bf16.msra.mxu0 0
        %2176 = vmatprep.subr.bf16.mxu0 0
        %2177 = vmatpush2.bf16.msra.mxu0 0
        %2178 = vmatprep.subr.bf16.mxu0 0
        %2179 = vmatpush2.bf16.msra.mxu0 0
        %2180 = vmatprep.subr.bf16.mxu0 0
        %2181 = vmatpush2.bf16.msra.mxu0 0
        %2182 = vmatprep.subr.bf16.mxu0 0
        %2183 = vmatpush2.bf16.msra.mxu0 0
        %2184 = vmatprep.mubr.bf16.mxu0 0
        %2185 = vmatmul.mubr.bf16.gmra.mxu0 %v2150
        %v2186 = vpop.f32.mrf.mxu0
        %v2187 = vadd.f32 0.0, %v2186
        %v2188 = vpop.f32.mrf.mxu0
        %v2189 = vpop.f32.mrf.mxu0
        %v2190 = vadd.f32 0.0, %v2189
        %v2191 = vpop.f32.mrf.mxu0
        %2192 = vdwg.mxu0
        %v2193 = vpack.c.bf16 %v2187, %v2187
        %v2194 = vpack.c.bf16 %v2190, %v2190
        %vm2195 = vcmask 257024
        %2196 = vst.msk [vmem:[#allocation4] sm:$0xf] %vm2195, %v2193
        %2197 = vst.msk [vmem:[#allocation5] sm:$0xf] %vm2195, %v2194
        %v2199 = vunpack.c.l.b16 %v2193
        %v2200 = vpack.c.b16 %v2199, %v2199
        %2201 = vrot.lane.b32.xlu0 %v2200, 32
        %v2202 = vpop.permute.xlu0 %2201
        %vm2204 = vcmask 519424
        %2205 = vst.msk [vmem:[#allocation4] sm:$0xf] %vm2204, %v2202
        %v2207 = vunpack.c.l.b16 %v2194
        %v2208 = vpack.c.b16 %v2207, %v2207
        %2209 = vrot.lane.b32.xlu0 %v2208, 32
        %v2210 = vpop.permute.xlu0 %2209
        %2212 = vst.msk [vmem:[#allocation5] sm:$0xf] %vm2204, %v2210
        %2213 = vrot.lane.b32.xlu0 %v2200, 64
        %v2214 = vpop.permute.xlu0 %2213
        %vm2216 = vcmask 781824
        %2217 = vst.msk [vmem:[#allocation4] sm:$0xf] %vm2216, %v2214
        %2218 = vrot.lane.b32.xlu0 %v2208, 64
        %v2219 = vpop.permute.xlu0 %2218
        %2221 = vst.msk [vmem:[#allocation5] sm:$0xf] %vm2216, %v2219
        %2222 = vrot.lane.b32.xlu0 %v2200, 96
        %v2223 = vpop.permute.xlu0 %2222
        %vm2225 = vcmask 1044224
        %2226 = vst.msk [vmem:[#allocation4] sm:$0xf] %vm2225, %v2223
        %2227 = vrot.lane.b32.xlu0 %v2208, 96
        %v2228 = vpop.permute.xlu0 %2227
        %2230 = vst.msk [vmem:[#allocation5] sm:$0xf] %vm2225, %v2228
      $region80: #{wave_attention.1} parent=75 // pred_fallthru
        _
      %s2231 = smul.u32 %s30, 32
      %s2232 = scalar_lea.vmem %s480, %s2231
      %v2233 = vld [vmem:[%s2232] sm:$0xff]
      %v2234 = vld [vmem:[%s2232 + $0x8] sm:$0xff]
      %v2235 = vld [vmem:[%s2232 + $0x10] sm:$0xff]
      %v2236 = vld [vmem:[%s2232 + $0x18] sm:$0xff]
      %v2237 = vpack.c.bf16 %v2234, %v2233
      %v2238 = vpack.c.bf16 %v2236, %v2235
      %v2239 = vld [vmem:[%s1] sm:$0xf]
      %v2240 = vld [vmem:[%s1 + $0x4] sm:$0xf]
      %v2241 = vld [vmem:[%s1 + $0x8] sm:$0xf]
      %v2242 = vld [vmem:[%s1 + $0xc] sm:$0xf]
      %v2243 = vld [vmem:[%s1 + $0x10] sm:$0xf]
      %v2244 = vld [vmem:[%s1 + $0x14] sm:$0xf]
      %v2245 = vld [vmem:[%s1 + $0x18] sm:$0xf]
      %v2246 = vld [vmem:[%s1 + $0x1c] sm:$0xf]
      %v2247 = vld [vmem:[%s1 + $0x20] sm:$0xf]
      %v2248 = vld [vmem:[%s1 + $0x24] sm:$0xf]
      %v2249 = vld [vmem:[%s1 + $0x28] sm:$0xf]
      %v2250 = vld [vmem:[%s1 + $0x2c] sm:$0xf]
      %v2251 = vld [vmem:[%s1 + $0x30] sm:$0xf]
      %v2252 = vld [vmem:[%s1 + $0x34] sm:$0xf]
      %v2253 = vld [vmem:[%s1 + $0x38] sm:$0xf]
      %v2254 = vld [vmem:[%s1 + $0x3c] sm:$0xf]
      %v2271 = vunpack.c.l.b16 %v2239
      %v2272 = vunpack.c.l.b16 %v2240
      %v2273 = vunpack.c.l.b16 %v2241
      %v2274 = vunpack.c.l.b16 %v2242
      %v2275 = vunpack.c.l.b16 %v2243
      %v2276 = vunpack.c.l.b16 %v2244
      %v2277 = vunpack.c.l.b16 %v2245
      %v2278 = vunpack.c.l.b16 %v2246
      %v2279 = vunpack.c.l.b16 %v2247
      %v2280 = vunpack.c.l.b16 %v2248
      %v2281 = vunpack.c.l.b16 %v2249
      %v2282 = vunpack.c.l.b16 %v2250
      %v2283 = vunpack.c.l.b16 %v2251
      %v2284 = vunpack.c.l.b16 %v2252
      %v2285 = vunpack.c.l.b16 %v2253
      %v2286 = vunpack.c.l.b16 %v2254
      %v2287 = vpack.c.b16 %v2272, %v2271
      %v2288 = vpack.c.b16 %v2274, %v2273
      %v2289 = vpack.c.b16 %v2276, %v2275
      %v2290 = vpack.c.b16 %v2278, %v2277
      %v2291 = vpack.c.b16 %v2280, %v2279
      %v2292 = vpack.c.b16 %v2282, %v2281
      %v2293 = vpack.c.b16 %v2284, %v2283
      %v2294 = vpack.c.b16 %v2286, %v2285
      %2303 = vmatprep.subr.bf16.mxu0 0
      %2304 = vmatpush1.bf16.msra.mxu0 %v2294
      %2305 = vmatprep.subr.bf16.mxu0 0
      %2306 = vmatpush1.bf16.msra.mxu0 %v2293
      %2307 = vmatprep.subr.bf16.mxu0 0
      %2308 = vmatpush1.bf16.msra.mxu0 %v2292
      %2309 = vmatprep.subr.bf16.mxu0 0
      %2310 = vmatpush1.bf16.msra.mxu0 %v2291
      %2311 = vmatprep.subr.bf16.mxu0 0
      %2312 = vmatpush1.bf16.msra.mxu0 %v2290
      %2313 = vmatprep.subr.bf16.mxu0 0
      %2314 = vmatpush1.bf16.msra.mxu0 %v2289
      %2315 = vmatprep.subr.bf16.mxu0 0
      %2316 = vmatpush1.bf16.msra.mxu0 %v2288
      %2317 = vmatprep.subr.bf16.mxu0 0
      %2318 = vmatpush1.bf16.msra.mxu0 %v2287
      %2319 = vmatprep.subr.bf16.mxu0 0
      %2320 = vmatpush2.bf16.msra.mxu0 0
      %2321 = vmatprep.subr.bf16.mxu0 0
      %2322 = vmatpush2.bf16.msra.mxu0 0
      %2323 = vmatprep.subr.bf16.mxu0 0
      %2324 = vmatpush2.bf16.msra.mxu0 0
      %2325 = vmatprep.subr.bf16.mxu0 0
      %2326 = vmatpush2.bf16.msra.mxu0 0
      %2327 = vmatprep.subr.bf16.mxu0 0
      %2328 = vmatpush2.bf16.msra.mxu0 0
      %2329 = vmatprep.subr.bf16.mxu0 0
      %2330 = vmatpush2.bf16.msra.mxu0 0
      %2331 = vmatprep.subr.bf16.mxu0 0
      %2332 = vmatpush2.bf16.msra.mxu0 0
      %2333 = vmatprep.subr.bf16.mxu0 0
      %2334 = vmatpush2.bf16.msra.mxu0 0
      %2335 = vmatprep.mubr.bf16.mxu0 0
      %2336 = vmatmul.mubr.bf16.gmra.mxu0 %v2237
      %v2337 = vpop.f32.mrf.mxu0
      %v2338 = vadd.f32 0.0, %v2337
      %v2339 = vpop.f32.mrf.mxu0
      %v2340 = vpop.f32.mrf.mxu0
      %v2341 = vadd.f32 0.0, %v2340
      %v2342 = vpop.f32.mrf.mxu0
      %2343 = vmatprep.mubr.bf16.mxu0 0
      %2344 = vmatmul.mubr.bf16.gmra.mxu0 %v2238
      %v2345 = vpop.f32.mrf.mxu0
      %v2346 = vadd.f32 0.0, %v2345
      %v2347 = vpop.f32.mrf.mxu0
      %v2348 = vpop.f32.mrf.mxu0
      %v2349 = vadd.f32 0.0, %v2348
      %v2350 = vpop.f32.mrf.mxu0
      %2351 = vdwg.mxu0
      %v2352 = vpack.c.bf16 %v2341, %v2338
      %v2353 = vpack.c.bf16 %v2349, %v2346
      %v2354 = vld [vmem:[#allocation4] sm:$0xf]
      %v2355 = vld [vmem:[#allocation5] sm:$0xf]
      %v2356 = vld [vmem:[%s11] sm:$0x1]
      %v2358 = vpack.i.b16 %v2356, %v2356
      %v2360 = vlaneseq
      %v2361 = vshrl.u32 %v2360, 7
      %v2362 = vsub.s32 0, %v2361
      %v2363 = vrot.slane %v2358, %v2362
      %v2364 = vmul.bf16 %v2354, %v2363
      %2365 = vmatprep.subr.bf16.mxu0 0
      %2366 = vmatpush1.bf16.xpose.msra.mxu0 0
      %2367 = vmatprep.subr.bf16.mxu0 0
      %2368 = vmatpush1.bf16.xpose.msra.mxu0 0
      %2369 = vmatprep.subr.bf16.mxu0 0
      %2370 = vmatpush1.bf16.xpose.msra.mxu0 0
      %2371 = vmatprep.subr.bf16.mxu0 0
      %2372 = vmatpush1.bf16.xpose.msra.mxu0 0
      %2373 = vmatprep.subr.bf16.mxu0 0
      %2374 = vmatpush1.bf16.xpose.msra.mxu0 0
      %2375 = vmatprep.subr.bf16.mxu0 0
      %2376 = vmatpush1.bf16.xpose.msra.mxu0 0
      %2377 = vmatprep.subr.bf16.mxu0 0
      %2378 = vmatpush1.bf16.xpose.msra.mxu0 0
      %2379 = vmatprep.subr.bf16.mxu0 0
      %2380 = vmatpush1.bf16.xpose.msra.mxu0 %v2364
      %2381 = vmatprep.subr.bf16.mxu0 0
      %2382 = vmatpush2.bf16.xpose.msra.mxu0 0
      %2383 = vmatprep.subr.bf16.mxu0 0
      %2384 = vmatpush2.bf16.xpose.msra.mxu0 0
      %2385 = vmatprep.subr.bf16.mxu0 0
      %2386 = vmatpush2.bf16.xpose.msra.mxu0 0
      %2387 = vmatprep.subr.bf16.mxu0 0
      %2388 = vmatpush2.bf16.xpose.msra.mxu0 0
      %2389 = vmatprep.subr.bf16.mxu0 0
      %2390 = vmatpush2.bf16.xpose.msra.mxu0 0
      %2391 = vmatprep.subr.bf16.mxu0 0
      %2392 = vmatpush2.bf16.xpose.msra.mxu0 0
      %2393 = vmatprep.subr.bf16.mxu0 0
      %2394 = vmatpush2.bf16.xpose.msra.mxu0 0
      %2395 = vmatprep.subr.bf16.mxu0 0
      %2396 = vmatpush2.bf16.xpose.msra.mxu0 0
      %2397 = vmatprep.mubr.bf16.mxu0 0
      %2398 = vmatmul.mubr.bf16.gmra.mxu0 %v2352
      %v2399 = vpop.f32.mrf.mxu0
      %v2400 = vadd.f32 0.0, %v2399
      %v2401 = vpop.f32.mrf.mxu0
      %v2402 = vpop.f32.mrf.mxu0
      %v2403 = vadd.f32 0.0, %v2402
      %v2404 = vpop.f32.mrf.mxu0
      %2405 = vmatprep.mubr.bf16.mxu0 0
      %2406 = vmatmul.mubr.bf16.gmra.mxu0 %v2353
      %v2407 = vpop.f32.mrf.mxu0
      %v2408 = vadd.f32 0.0, %v2407
      %v2409 = vpop.f32.mrf.mxu0
      %v2410 = vpop.f32.mrf.mxu0
      %v2411 = vadd.f32 0.0, %v2410
      %v2412 = vpop.f32.mrf.mxu0
      %2413 = vdwg.mxu0
      %vm2414 = vcmask 64512
      %v2415 = vsel %vm2414, %v2400, -inf
      %2416 = vmax.xlane.f32.xlu0 %v2415
      %v2417 = vpop.xlane.xlu0 %2416
      %v2418 = vsel %vm2414, %v2403, -inf
      %2419 = vmax.xlane.f32.xlu0 %v2418
      %v2420 = vpop.xlane.xlu0 %2419
      %v2421 = vsel %vm2414, %v2408, -inf
      %2422 = vmax.xlane.f32.xlu0 %v2421
      %v2423 = vpop.xlane.xlu0 %2422
      %v2424 = vsel %vm2414, %v2411, -inf
      %2425 = vmax.xlane.f32.xlu0 %v2424
      %v2426 = vpop.xlane.xlu0 %2425
      %v2427 = vsub.f32 %v2400, %v2417
      %v2428 = vsub.f32 %v2403, %v2420
      %v2429 = vsub.f32 %v2408, %v2423
      %v2430 = vsub.f32 %v2411, %v2426
      %v2431 = vmul.f32 %v2427, 1.442695
      %v2432 = vpow.pop %v2431
      %v2433 = vmul.f32 %v2428, 1.442695
      %v2434 = vpow.pop %v2433
      %v2435 = vmul.f32 %v2429, 1.442695
      %v2436 = vpow.pop %v2435
      %v2437 = vmul.f32 %v2430, 1.442695
      %v2438 = vpow.pop %v2437
      %v2439 = vsel %vm2414, %v2432, 0.0
      %2440 = vadd.xlane.f32.xlu0 %v2439
      %v2441 = vpop.xlane.xlu0 %2440
      %v2442 = vsel %vm2414, %v2434, 0.0
      %2443 = vadd.xlane.f32.xlu0 %v2442
      %v2444 = vpop.xlane.xlu0 %2443
      %v2445 = vsel %vm2414, %v2436, 0.0
      %2446 = vadd.xlane.f32.xlu0 %v2445
      %v2447 = vpop.xlane.xlu0 %2446
      %v2448 = vsel %vm2414, %v2438, 0.0
      %2449 = vadd.xlane.f32.xlu0 %v2448
      %v2450 = vpop.xlane.xlu0 %2449
      %v2451 = vrcp.pop %v2441
      %v2452 = vrcp.pop %v2444
      %v2453 = vrcp.pop %v2447
      %v2454 = vrcp.pop %v2450
      %v2455 = vmul.f32 %v2432, %v2451
      %v2456 = vmul.f32 %v2434, %v2452
      %v2457 = vmul.f32 %v2436, %v2453
      %v2458 = vmul.f32 %v2438, %v2454
      %v2459 = vpack.c.bf16 %v2456, %v2455
      %v2460 = vpack.c.bf16 %v2458, %v2457
      %v2461 = vmul.bf16 %v2355, %v2363
      %v2462 = vshrl.u32 %v2356, 16
      %v2463 = vpack.i.b16 %v2462, %v2462
      %v2465 = vlaneseq
      %v2466 = vshrl.u32 %v2465, 7
      %v2467 = vsub.s32 0, %v2466
      %v2468 = vrot.slane %v2463, %v2467
      %v2469 = vmul.bf16 %v2354, %v2468
      %2470 = vmatprep.subr.bf16.mxu0 0
      %2471 = vmatpush1.bf16.xpose.msra.mxu0 0
      %2472 = vmatprep.subr.bf16.mxu0 0
      %2473 = vmatpush1.bf16.xpose.msra.mxu0 0
      %2474 = vmatprep.subr.bf16.mxu0 0
      %2475 = vmatpush1.bf16.xpose.msra.mxu0 0
      %2476 = vmatprep.subr.bf16.mxu0 0
      %2477 = vmatpush1.bf16.xpose.msra.mxu0 0
      %2478 = vmatprep.subr.bf16.mxu0 0
      %2479 = vmatpush1.bf16.xpose.msra.mxu0 0
      %2480 = vmatprep.subr.bf16.mxu0 0
      %2481 = vmatpush1.bf16.xpose.msra.mxu0 0
      %2482 = vmatprep.subr.bf16.mxu0 0
      %2483 = vmatpush1.bf16.xpose.msra.mxu0 0
      %2484 = vmatprep.subr.bf16.mxu0 0
      %2485 = vmatpush1.bf16.xpose.msra.mxu0 %v2469
      %2486 = vmatprep.subr.bf16.mxu0 0
      %2487 = vmatpush2.bf16.xpose.msra.mxu0 0
      %2488 = vmatprep.subr.bf16.mxu0 0
      %2489 = vmatpush2.bf16.xpose.msra.mxu0 0
      %2490 = vmatprep.subr.bf16.mxu0 0
      %2491 = vmatpush2.bf16.xpose.msra.mxu0 0
      %2492 = vmatprep.subr.bf16.mxu0 0
      %2493 = vmatpush2.bf16.xpose.msra.mxu0 0
      %2494 = vmatprep.subr.bf16.mxu0 0
      %2495 = vmatpush2.bf16.xpose.msra.mxu0 0
      %2496 = vmatprep.subr.bf16.mxu0 0
      %2497 = vmatpush2.bf16.xpose.msra.mxu0 0
      %2498 = vmatprep.subr.bf16.mxu0 0
      %2499 = vmatpush2.bf16.xpose.msra.mxu0 0
      %2500 = vmatprep.subr.bf16.mxu0 0
      %2501 = vmatpush2.bf16.xpose.msra.mxu0 0
      %2502 = vmatprep.mubr.bf16.mxu0 0
      %2503 = vmatmul.mubr.bf16.gmra.mxu0 %v2352
      %v2504 = vpop.f32.mrf.mxu0
      %v2505 = vadd.f32 0.0, %v2504
      %v2506 = vpop.f32.mrf.mxu0
      %v2507 = vpop.f32.mrf.mxu0
      %v2508 = vadd.f32 0.0, %v2507
      %v2509 = vpop.f32.mrf.mxu0
      %2510 = vmatprep.mubr.bf16.mxu0 0
      %2511 = vmatmul.mubr.bf16.gmra.mxu0 %v2353
      %v2512 = vpop.f32.mrf.mxu0
      %v2513 = vadd.f32 0.0, %v2512
      %v2514 = vpop.f32.mrf.mxu0
      %v2515 = vpop.f32.mrf.mxu0
      %v2516 = vadd.f32 0.0, %v2515
      %v2517 = vpop.f32.mrf.mxu0
      %2518 = vdwg.mxu0
      %v2519 = vsel %vm2414, %v2505, -inf
      %2520 = vmax.xlane.f32.xlu0 %v2519
      %v2521 = vpop.xlane.xlu0 %2520
      %v2522 = vsel %vm2414, %v2508, -inf
      %2523 = vmax.xlane.f32.xlu0 %v2522
      %v2524 = vpop.xlane.xlu0 %2523
      %v2525 = vsel %vm2414, %v2513, -inf
      %2526 = vmax.xlane.f32.xlu0 %v2525
      %v2527 = vpop.xlane.xlu0 %2526
      %v2528 = vsel %vm2414, %v2516, -inf
      %2529 = vmax.xlane.f32.xlu0 %v2528
      %v2530 = vpop.xlane.xlu0 %2529
      %v2531 = vsub.f32 %v2505, %v2521
      %v2532 = vsub.f32 %v2508, %v2524
      %v2533 = vsub.f32 %v2513, %v2527
      %v2534 = vsub.f32 %v2516, %v2530
      %v2535 = vmul.f32 %v2531, 1.442695
      %v2536 = vpow.pop %v2535
      %v2537 = vmul.f32 %v2532, 1.442695
      %v2538 = vpow.pop %v2537
      %v2539 = vmul.f32 %v2533, 1.442695
      %v2540 = vpow.pop %v2539
      %v2541 = vmul.f32 %v2534, 1.442695
      %v2542 = vpow.pop %v2541
      %v2543 = vsel %vm2414, %v2536, 0.0
      %2544 = vadd.xlane.f32.xlu0 %v2543
      %v2545 = vpop.xlane.xlu0 %2544
      %v2546 = vsel %vm2414, %v2538, 0.0
      %2547 = vadd.xlane.f32.xlu0 %v2546
      %v2548 = vpop.xlane.xlu0 %2547
      %v2549 = vsel %vm2414, %v2540, 0.0
      %2550 = vadd.xlane.f32.xlu0 %v2549
      %v2551 = vpop.xlane.xlu0 %2550
      %v2552 = vsel %vm2414, %v2542, 0.0
      %2553 = vadd.xlane.f32.xlu0 %v2552
      %v2554 = vpop.xlane.xlu0 %2553
      %v2555 = vrcp.pop %v2545
      %v2556 = vrcp.pop %v2548
      %v2557 = vrcp.pop %v2551
      %v2558 = vrcp.pop %v2554
      %v2559 = vmul.f32 %v2536, %v2555
      %v2560 = vmul.f32 %v2538, %v2556
      %v2561 = vmul.f32 %v2540, %v2557
      %v2562 = vmul.f32 %v2542, %v2558
      %v2563 = vpack.c.bf16 %v2560, %v2559
      %v2564 = vpack.c.bf16 %v2562, %v2561
      %v2565 = vmul.bf16 %v2355, %v2468
      %v2567 = vsel %vm2414, %v2563, 0
      %v2570 = vsel %vm2414, %v2564, 0
      %vm2572 = vcmask 1043456
      %v2574 = vsel %vm2572, %v2565, 0
      %2576 = vmatprep.subr.bf16.mxu0 0
      %2577 = vmatpush1.bf16.msra.mxu0 0
      %2578 = vmatprep.subr.bf16.mxu0 0
      %2579 = vmatpush1.bf16.msra.mxu0 0
      %2580 = vmatprep.subr.bf16.mxu0 0
      %2581 = vmatpush1.bf16.msra.mxu0 0
      %2582 = vmatprep.subr.bf16.mxu0 0
      %2583 = vmatpush1.bf16.msra.mxu0 0
      %2584 = vmatprep.subr.bf16.mxu0 0
      %2585 = vmatpush1.bf16.msra.mxu0 0
      %2586 = vmatprep.subr.bf16.mxu0 0
      %2587 = vmatpush1.bf16.msra.mxu0 0
      %2588 = vmatprep.subr.bf16.mxu0 0
      %2589 = vmatpush1.bf16.msra.mxu0 0
      %2590 = vmatprep.subr.bf16.mxu0 0
      %2591 = vmatpush1.bf16.msra.mxu0 %v2574
      %2592 = vmatprep.subr.bf16.mxu0 0
      %2593 = vmatpush2.bf16.msra.mxu0 0
      %2594 = vmatprep.subr.bf16.mxu0 0
      %2595 = vmatpush2.bf16.msra.mxu0 0
      %2596 = vmatprep.subr.bf16.mxu0 0
      %2597 = vmatpush2.bf16.msra.mxu0 0
      %2598 = vmatprep.subr.bf16.mxu0 0
      %2599 = vmatpush2.bf16.msra.mxu0 0
      %2600 = vmatprep.subr.bf16.mxu0 0
      %2601 = vmatpush2.bf16.msra.mxu0 0
      %2602 = vmatprep.subr.bf16.mxu0 0
      %2603 = vmatpush2.bf16.msra.mxu0 0
      %2604 = vmatprep.subr.bf16.mxu0 0
      %2605 = vmatpush2.bf16.msra.mxu0 0
      %2606 = vmatprep.subr.bf16.mxu0 0
      %2607 = vmatpush2.bf16.msra.mxu0 0
      %2608 = vmatprep.mubr.bf16.mxu0 0
      %2609 = vmatmul.mubr.bf16.gmra.mxu0 %v2567
      %v2610 = vpop.f32.mrf.mxu0
      %v2611 = vadd.f32 0.0, %v2610
      %v2612 = vpop.f32.mrf.mxu0
      %v2613 = vpop.f32.mrf.mxu0
      %v2614 = vadd.f32 0.0, %v2613
      %v2615 = vpop.f32.mrf.mxu0
      %2616 = vmatprep.mubr.bf16.mxu0 0
      %2617 = vmatmul.mubr.bf16.gmra.mxu0 %v2570
      %v2618 = vpop.f32.mrf.mxu0
      %v2619 = vadd.f32 0.0, %v2618
      %v2620 = vpop.f32.mrf.mxu0
      %v2621 = vpop.f32.mrf.mxu0
      %v2622 = vadd.f32 0.0, %v2621
      %v2623 = vpop.f32.mrf.mxu0
      %2624 = vdwg.mxu0
      %v2626 = vsel %vm2414, %v2459, 0
      %v2629 = vsel %vm2414, %v2460, 0
      %v2632 = vsel %vm2572, %v2461, 0
      %2634 = vmatprep.subr.bf16.mxu0 0
      %2635 = vmatpush1.bf16.msra.mxu0 0
      %2636 = vmatprep.subr.bf16.mxu0 0
      %2637 = vmatpush1.bf16.msra.mxu0 0
      %2638 = vmatprep.subr.bf16.mxu0 0
      %2639 = vmatpush1.bf16.msra.mxu0 0
      %2640 = vmatprep.subr.bf16.mxu0 0
      %2641 = vmatpush1.bf16.msra.mxu0 0
      %2642 = vmatprep.subr.bf16.mxu0 0
      %2643 = vmatpush1.bf16.msra.mxu0 0
      %2644 = vmatprep.subr.bf16.mxu0 0
      %2645 = vmatpush1.bf16.msra.mxu0 0
      %2646 = vmatprep.subr.bf16.mxu0 0
      %2647 = vmatpush1.bf16.msra.mxu0 0
      %2648 = vmatprep.subr.bf16.mxu0 0
      %2649 = vmatpush1.bf16.msra.mxu0 %v2632
      %2650 = vmatprep.subr.bf16.mxu0 0
      %2651 = vmatpush2.bf16.msra.mxu0 0
      %2652 = vmatprep.subr.bf16.mxu0 0
      %2653 = vmatpush2.bf16.msra.mxu0 0
      %2654 = vmatprep.subr.bf16.mxu0 0
      %2655 = vmatpush2.bf16.msra.mxu0 0
      %2656 = vmatprep.subr.bf16.mxu0 0
      %2657 = vmatpush2.bf16.msra.mxu0 0
      %2658 = vmatprep.subr.bf16.mxu0 0
      %2659 = vmatpush2.bf16.msra.mxu0 0
      %2660 = vmatprep.subr.bf16.mxu0 0
      %2661 = vmatpush2.bf16.msra.mxu0 0
      %2662 = vmatprep.subr.bf16.mxu0 0
      %2663 = vmatpush2.bf16.msra.mxu0 0
      %2664 = vmatprep.subr.bf16.mxu0 0
      %2665 = vmatpush2.bf16.msra.mxu0 0
      %2666 = vmatprep.mubr.bf16.mxu0 0
      %2667 = vmatmul.mubr.bf16.gmra.mxu0 %v2626
      %v2668 = vpop.f32.mrf.mxu0
      %v2669 = vadd.f32 %v2611, %v2668
      %v2670 = vpop.f32.mrf.mxu0
      %v2671 = vpop.f32.mrf.mxu0
      %v2672 = vadd.f32 %v2614, %v2671
      %v2673 = vpop.f32.mrf.mxu0
      %2674 = vmatprep.mubr.bf16.mxu0 0
      %2675 = vmatmul.mubr.bf16.gmra.mxu0 %v2629
      %v2676 = vpop.f32.mrf.mxu0
      %v2677 = vadd.f32 %v2619, %v2676
      %v2678 = vpop.f32.mrf.mxu0
      %v2679 = vpop.f32.mrf.mxu0
      %v2680 = vadd.f32 %v2622, %v2679
      %v2681 = vpop.f32.mrf.mxu0
      %2682 = vdwg.mxu0
      %v2683 = vld [vmem:[%s11] sm:$0x2]
      %v2685 = vpack.i.b16 %v2683, %v2683
      %v2687 = vlaneseq
      %v2688 = vshrl.u32 %v2687, 7
      %v2689 = vsub.s32 1, %v2688
      %v2690 = vrot.slane %v2685, %v2689
      %v2691 = vmul.bf16 %v2354, %v2690
      %2692 = vmatprep.subr.bf16.mxu0 0
      %2693 = vmatpush1.bf16.xpose.msra.mxu0 0
      %2694 = vmatprep.subr.bf16.mxu0 0
      %2695 = vmatpush1.bf16.xpose.msra.mxu0 0
      %2696 = vmatprep.subr.bf16.mxu0 0
      %2697 = vmatpush1.bf16.xpose.msra.mxu0 0
      %2698 = vmatprep.subr.bf16.mxu0 0
      %2699 = vmatpush1.bf16.xpose.msra.mxu0 0
      %2700 = vmatprep.subr.bf16.mxu0 0
      %2701 = vmatpush1.bf16.xpose.msra.mxu0 0
      %2702 = vmatprep.subr.bf16.mxu0 0
      %2703 = vmatpush1.bf16.xpose.msra.mxu0 0
      %2704 = vmatprep.subr.bf16.mxu0 0
      %2705 = vmatpush1.bf16.xpose.msra.mxu0 0
      %2706 = vmatprep.subr.bf16.mxu0 0
      %2707 = vmatpush1.bf16.xpose.msra.mxu0 %v2691
      %2708 = vmatprep.subr.bf16.mxu0 0
      %2709 = vmatpush2.bf16.xpose.msra.mxu0 0
      %2710 = vmatprep.subr.bf16.mxu0 0
      %2711 = vmatpush2.bf16.xpose.msra.mxu0 0
      %2712 = vmatprep.subr.bf16.mxu0 0
      %2713 = vmatpush2.bf16.xpose.msra.mxu0 0
      %2714 = vmatprep.subr.bf16.mxu0 0
      %2715 = vmatpush2.bf16.xpose.msra.mxu0 0
      %2716 = vmatprep.subr.bf16.mxu0 0
      %2717 = vmatpush2.bf16.xpose.msra.mxu0 0
      %2718 = vmatprep.subr.bf16.mxu0 0
      %2719 = vmatpush2.bf16.xpose.msra.mxu0 0
      %2720 = vmatprep.subr.bf16.mxu0 0
      %2721 = vmatpush2.bf16.xpose.msra.mxu0 0
      %2722 = vmatprep.subr.bf16.mxu0 0
      %2723 = vmatpush2.bf16.xpose.msra.mxu0 0
      %2724 = vmatprep.mubr.bf16.mxu0 0
      %2725 = vmatmul.mubr.bf16.gmra.mxu0 %v2352
      %v2726 = vpop.f32.mrf.mxu0
      %v2727 = vadd.f32 0.0, %v2726
      %v2728 = vpop.f32.mrf.mxu0
      %v2729 = vpop.f32.mrf.mxu0
      %v2730 = vadd.f32 0.0, %v2729
      %v2731 = vpop.f32.mrf.mxu0
      %2732 = vmatprep.mubr.bf16.mxu0 0
      %2733 = vmatmul.mubr.bf16.gmra.mxu0 %v2353
      %v2734 = vpop.f32.mrf.mxu0
      %v2735 = vadd.f32 0.0, %v2734
      %v2736 = vpop.f32.mrf.mxu0
      %v2737 = vpop.f32.mrf.mxu0
      %v2738 = vadd.f32 0.0, %v2737
      %v2739 = vpop.f32.mrf.mxu0
      %2740 = vdwg.mxu0
      %v2741 = vsel %vm2414, %v2727, -inf
      %2742 = vmax.xlane.f32.xlu0 %v2741
      %v2743 = vpop.xlane.xlu0 %2742
      %v2744 = vsel %vm2414, %v2730, -inf
      %2745 = vmax.xlane.f32.xlu0 %v2744
      %v2746 = vpop.xlane.xlu0 %2745
      %v2747 = vsel %vm2414, %v2735, -inf
      %2748 = vmax.xlane.f32.xlu0 %v2747
      %v2749 = vpop.xlane.xlu0 %2748
      %v2750 = vsel %vm2414, %v2738, -inf
      %2751 = vmax.xlane.f32.xlu0 %v2750
      %v2752 = vpop.xlane.xlu0 %2751
      %v2753 = vsub.f32 %v2727, %v2743
      %v2754 = vsub.f32 %v2730, %v2746
      %v2755 = vsub.f32 %v2735, %v2749
      %v2756 = vsub.f32 %v2738, %v2752
      %v2757 = vmul.f32 %v2753, 1.442695
      %v2758 = vpow.pop %v2757
      %v2759 = vmul.f32 %v2754, 1.442695
      %v2760 = vpow.pop %v2759
      %v2761 = vmul.f32 %v2755, 1.442695
      %v2762 = vpow.pop %v2761
      %v2763 = vmul.f32 %v2756, 1.442695
      %v2764 = vpow.pop %v2763
      %v2765 = vsel %vm2414, %v2758, 0.0
      %2766 = vadd.xlane.f32.xlu0 %v2765
      %v2767 = vpop.xlane.xlu0 %2766
      %v2768 = vsel %vm2414, %v2760, 0.0
      %2769 = vadd.xlane.f32.xlu0 %v2768
      %v2770 = vpop.xlane.xlu0 %2769
      %v2771 = vsel %vm2414, %v2762, 0.0
      %2772 = vadd.xlane.f32.xlu0 %v2771
      %v2773 = vpop.xlane.xlu0 %2772
      %v2774 = vsel %vm2414, %v2764, 0.0
      %2775 = vadd.xlane.f32.xlu0 %v2774
      %v2776 = vpop.xlane.xlu0 %2775
      %v2777 = vrcp.pop %v2767
      %v2778 = vrcp.pop %v2770
      %v2779 = vrcp.pop %v2773
      %v2780 = vrcp.pop %v2776
      %v2781 = vmul.f32 %v2758, %v2777
      %v2782 = vmul.f32 %v2760, %v2778
      %v2783 = vmul.f32 %v2762, %v2779
      %v2784 = vmul.f32 %v2764, %v2780
      %v2785 = vpack.c.bf16 %v2782, %v2781
      %v2786 = vpack.c.bf16 %v2784, %v2783
      %v2787 = vmul.bf16 %v2355, %v2690
      %v2789 = vsel %vm2414, %v2785, 0
      %v2792 = vsel %vm2414, %v2786, 0
      %v2795 = vsel %vm2572, %v2787, 0
      %2797 = vmatprep.subr.bf16.mxu0 0
      %2798 = vmatpush1.bf16.msra.mxu0 0
      %2799 = vmatprep.subr.bf16.mxu0 0
      %2800 = vmatpush1.bf16.msra.mxu0 0
      %2801 = vmatprep.subr.bf16.mxu0 0
      %2802 = vmatpush1.bf16.msra.mxu0 0
      %2803 = vmatprep.subr.bf16.mxu0 0
      %2804 = vmatpush1.bf16.msra.mxu0 0
      %2805 = vmatprep.subr.bf16.mxu0 0
      %2806 = vmatpush1.bf16.msra.mxu0 0
      %2807 = vmatprep.subr.bf16.mxu0 0
      %2808 = vmatpush1.bf16.msra.mxu0 0
      %2809 = vmatprep.subr.bf16.mxu0 0
      %2810 = vmatpush1.bf16.msra.mxu0 0
      %2811 = vmatprep.subr.bf16.mxu0 0
      %2812 = vmatpush1.bf16.msra.mxu0 %v2795
      %2813 = vmatprep.subr.bf16.mxu0 0
      %2814 = vmatpush2.bf16.msra.mxu0 0
      %2815 = vmatprep.subr.bf16.mxu0 0
      %2816 = vmatpush2.bf16.msra.mxu0 0
      %2817 = vmatprep.subr.bf16.mxu0 0
      %2818 = vmatpush2.bf16.msra.mxu0 0
      %2819 = vmatprep.subr.bf16.mxu0 0
      %2820 = vmatpush2.bf16.msra.mxu0 0
      %2821 = vmatprep.subr.bf16.mxu0 0
      %2822 = vmatpush2.bf16.msra.mxu0 0
      %2823 = vmatprep.subr.bf16.mxu0 0
      %2824 = vmatpush2.bf16.msra.mxu0 0
      %2825 = vmatprep.subr.bf16.mxu0 0
      %2826 = vmatpush2.bf16.msra.mxu0 0
      %2827 = vmatprep.subr.bf16.mxu0 0
      %2828 = vmatpush2.bf16.msra.mxu0 0
      %2829 = vmatprep.mubr.bf16.mxu0 0
      %2830 = vmatmul.mubr.bf16.gmra.mxu0 %v2789
      %v2831 = vpop.f32.mrf.mxu0
      %v2832 = vadd.f32 0.0, %v2831
      %v2833 = vpop.f32.mrf.mxu0
      %v2834 = vpop.f32.mrf.mxu0
      %v2835 = vadd.f32 0.0, %v2834
      %v2836 = vpop.f32.mrf.mxu0
      %2837 = vmatprep.mubr.bf16.mxu0 0
      %2838 = vmatmul.mubr.bf16.gmra.mxu0 %v2792
      %v2839 = vpop.f32.mrf.mxu0
      %v2840 = vadd.f32 0.0, %v2839
      %v2841 = vpop.f32.mrf.mxu0
      %v2842 = vpop.f32.mrf.mxu0
      %v2843 = vadd.f32 0.0, %v2842
      %v2844 = vpop.f32.mrf.mxu0
      %2845 = vdwg.mxu0
      %v2846 = vadd.f32 %v2669, %v2832
      %v2847 = vadd.f32 %v2672, %v2835
      %v2848 = vadd.f32 %v2677, %v2840
      %v2849 = vadd.f32 %v2680, %v2843
      %v2850 = vshrl.u32 %v2683, 16
      %v2851 = vpack.i.b16 %v2850, %v2850
      %v2853 = vlaneseq
      %v2854 = vshrl.u32 %v2853, 7
      %v2855 = vsub.s32 1, %v2854
      %v2856 = vrot.slane %v2851, %v2855
      %v2857 = vmul.bf16 %v2354, %v2856
      %2858 = vmatprep.subr.bf16.mxu0 0
      %2859 = vmatpush1.bf16.xpose.msra.mxu0 0
      %2860 = vmatprep.subr.bf16.mxu0 0
      %2861 = vmatpush1.bf16.xpose.msra.mxu0 0
      %2862 = vmatprep.subr.bf16.mxu0 0
      %2863 = vmatpush1.bf16.xpose.msra.mxu0 0
      %2864 = vmatprep.subr.bf16.mxu0 0
      %2865 = vmatpush1.bf16.xpose.msra.mxu0 0
      %2866 = vmatprep.subr.bf16.mxu0 0
      %2867 = vmatpush1.bf16.xpose.msra.mxu0 0
      %2868 = vmatprep.subr.bf16.mxu0 0
      %2869 = vmatpush1.bf16.xpose.msra.mxu0 0
      %2870 = vmatprep.subr.bf16.mxu0 0
      %2871 = vmatpush1.bf16.xpose.msra.mxu0 0
      %2872 = vmatprep.subr.bf16.mxu0 0
      %2873 = vmatpush1.bf16.xpose.msra.mxu0 %v2857
      %2874 = vmatprep.subr.bf16.mxu0 0
      %2875 = vmatpush2.bf16.xpose.msra.mxu0 0
      %2876 = vmatprep.subr.bf16.mxu0 0
      %2877 = vmatpush2.bf16.xpose.msra.mxu0 0
      %2878 = vmatprep.subr.bf16.mxu0 0
      %2879 = vmatpush2.bf16.xpose.msra.mxu0 0
      %2880 = vmatprep.subr.bf16.mxu0 0
      %2881 = vmatpush2.bf16.xpose.msra.mxu0 0
      %2882 = vmatprep.subr.bf16.mxu0 0
      %2883 = vmatpush2.bf16.xpose.msra.mxu0 0
      %2884 = vmatprep.subr.bf16.mxu0 0
      %2885 = vmatpush2.bf16.xpose.msra.mxu0 0
      %2886 = vmatprep.subr.bf16.mxu0 0
      %2887 = vmatpush2.bf16.xpose.msra.mxu0 0
      %2888 = vmatprep.subr.bf16.mxu0 0
      %2889 = vmatpush2.bf16.xpose.msra.mxu0 0
      %2890 = vmatprep.mubr.bf16.mxu0 0
      %2891 = vmatmul.mubr.bf16.gmra.mxu0 %v2352
      %v2892 = vpop.f32.mrf.mxu0
      %v2893 = vadd.f32 0.0, %v2892
      %v2894 = vpop.f32.mrf.mxu0
      %v2895 = vpop.f32.mrf.mxu0
      %v2896 = vadd.f32 0.0, %v2895
      %v2897 = vpop.f32.mrf.mxu0
      %2898 = vmatprep.mubr.bf16.mxu0 0
      %2899 = vmatmul.mubr.bf16.gmra.mxu0 %v2353
      %v2900 = vpop.f32.mrf.mxu0
      %v2901 = vadd.f32 0.0, %v2900
      %v2902 = vpop.f32.mrf.mxu0
      %v2903 = vpop.f32.mrf.mxu0
      %v2904 = vadd.f32 0.0, %v2903
      %v2905 = vpop.f32.mrf.mxu0
      %2906 = vdwg.mxu0
      %v2907 = vsel %vm2414, %v2893, -inf
      %2908 = vmax.xlane.f32.xlu0 %v2907
      %v2909 = vpop.xlane.xlu0 %2908
      %v2910 = vsel %vm2414, %v2896, -inf
      %2911 = vmax.xlane.f32.xlu0 %v2910
      %v2912 = vpop.xlane.xlu0 %2911
      %v2913 = vsel %vm2414, %v2901, -inf
      %2914 = vmax.xlane.f32.xlu0 %v2913
      %v2915 = vpop.xlane.xlu0 %2914
      %v2916 = vsel %vm2414, %v2904, -inf
      %2917 = vmax.xlane.f32.xlu0 %v2916
      %v2918 = vpop.xlane.xlu0 %2917
      %v2919 = vsub.f32 %v2893, %v2909
      %v2920 = vsub.f32 %v2896, %v2912
      %v2921 = vsub.f32 %v2901, %v2915
      %v2922 = vsub.f32 %v2904, %v2918
      %v2923 = vmul.f32 %v2919, 1.442695
      %v2924 = vpow.pop %v2923
      %v2925 = vmul.f32 %v2920, 1.442695
      %v2926 = vpow.pop %v2925
      %v2927 = vmul.f32 %v2921, 1.442695
      %v2928 = vpow.pop %v2927
      %v2929 = vmul.f32 %v2922, 1.442695
      %v2930 = vpow.pop %v2929
      %v2931 = vsel %vm2414, %v2924, 0.0
      %2932 = vadd.xlane.f32.xlu0 %v2931
      %v2933 = vpop.xlane.xlu0 %2932
      %v2934 = vsel %vm2414, %v2926, 0.0
      %2935 = vadd.xlane.f32.xlu0 %v2934
      %v2936 = vpop.xlane.xlu0 %2935
      %v2937 = vsel %vm2414, %v2928, 0.0
      %2938 = vadd.xlane.f32.xlu0 %v2937
      %v2939 = vpop.xlane.xlu0 %2938
      %v2940 = vsel %vm2414, %v2930, 0.0
      %2941 = vadd.xlane.f32.xlu0 %v2940
      %v2942 = vpop.xlane.xlu0 %2941
      %v2943 = vrcp.pop %v2933
      %v2944 = vrcp.pop %v2936
      %v2945 = vrcp.pop %v2939
      %v2946 = vrcp.pop %v2942
      %v2947 = vmul.f32 %v2924, %v2943
      %v2948 = vmul.f32 %v2926, %v2944
      %v2949 = vmul.f32 %v2928, %v2945
      %v2950 = vmul.f32 %v2930, %v2946
      %v2951 = vpack.c.bf16 %v2948, %v2947
      %v2952 = vpack.c.bf16 %v2950, %v2949
      %v2953 = vmul.bf16 %v2355, %v2856
      %v2955 = vsel %vm2414, %v2951, 0
      %v2958 = vsel %vm2414, %v2952, 0
      %v2961 = vsel %vm2572, %v2953, 0
      %2963 = vmatprep.subr.bf16.mxu0 0
      %2964 = vmatpush1.bf16.msra.mxu0 0
      %2965 = vmatprep.subr.bf16.mxu0 0
      %2966 = vmatpush1.bf16.msra.mxu0 0
      %2967 = vmatprep.subr.bf16.mxu0 0
      %2968 = vmatpush1.bf16.msra.mxu0 0
      %2969 = vmatprep.subr.bf16.mxu0 0
      %2970 = vmatpush1.bf16.msra.mxu0 0
      %2971 = vmatprep.subr.bf16.mxu0 0
      %2972 = vmatpush1.bf16.msra.mxu0 0
      %2973 = vmatprep.subr.bf16.mxu0 0
      %2974 = vmatpush1.bf16.msra.mxu0 0
      %2975 = vmatprep.subr.bf16.mxu0 0
      %2976 = vmatpush1.bf16.msra.mxu0 0
      %2977 = vmatprep.subr.bf16.mxu0 0
      %2978 = vmatpush1.bf16.msra.mxu0 %v2961
      %2979 = vmatprep.subr.bf16.mxu0 0
      %2980 = vmatpush2.bf16.msra.mxu0 0
      %2981 = vmatprep.subr.bf16.mxu0 0
      %2982 = vmatpush2.bf16.msra.mxu0 0
      %2983 = vmatprep.subr.bf16.mxu0 0
      %2984 = vmatpush2.bf16.msra.mxu0 0
      %2985 = vmatprep.subr.bf16.mxu0 0
      %2986 = vmatpush2.bf16.msra.mxu0 0
      %2987 = vmatprep.subr.bf16.mxu0 0
      %2988 = vmatpush2.bf16.msra.mxu0 0
      %2989 = vmatprep.subr.bf16.mxu0 0
      %2990 = vmatpush2.bf16.msra.mxu0 0
      %2991 = vmatprep.subr.bf16.mxu0 0
      %2992 = vmatpush2.bf16.msra.mxu0 0
      %2993 = vmatprep.subr.bf16.mxu0 0
      %2994 = vmatpush2.bf16.msra.mxu0 0
      %2995 = vmatprep.mubr.bf16.mxu0 0
      %2996 = vmatmul.mubr.bf16.gmra.mxu0 %v2955
      %v2997 = vpop.f32.mrf.mxu0
      %v2998 = vadd.f32 0.0, %v2997
      %v2999 = vpop.f32.mrf.mxu0
      %v3000 = vpop.f32.mrf.mxu0
      %v3001 = vadd.f32 0.0, %v3000
      %v3002 = vpop.f32.mrf.mxu0
      %3003 = vmatprep.mubr.bf16.mxu0 0
      %3004 = vmatmul.mubr.bf16.gmra.mxu0 %v2958
      %v3005 = vpop.f32.mrf.mxu0
      %v3006 = vadd.f32 0.0, %v3005
      %v3007 = vpop.f32.mrf.mxu0
      %v3008 = vpop.f32.mrf.mxu0
      %v3009 = vadd.f32 0.0, %v3008
      %v3010 = vpop.f32.mrf.mxu0
      %3011 = vdwg.mxu0
      %v3012 = vadd.f32 %v2846, %v2998
      %v3013 = vadd.f32 %v2847, %v3001
      %v3014 = vadd.f32 %v2848, %v3006
      %v3015 = vadd.f32 %v2849, %v3009
      %v3016 = vld [vmem:[%s11] sm:$0x4]
      %v3018 = vpack.i.b16 %v3016, %v3016
      %v3020 = vlaneseq
      %v3021 = vshrl.u32 %v3020, 7
      %v3022 = vsub.s32 2, %v3021
      %v3023 = vrot.slane %v3018, %v3022
      %v3024 = vmul.bf16 %v2354, %v3023
      %3025 = vmatprep.subr.bf16.mxu0 0
      %3026 = vmatpush1.bf16.xpose.msra.mxu0 0
      %3027 = vmatprep.subr.bf16.mxu0 0
      %3028 = vmatpush1.bf16.xpose.msra.mxu0 0
      %3029 = vmatprep.subr.bf16.mxu0 0
      %3030 = vmatpush1.bf16.xpose.msra.mxu0 0
      %3031 = vmatprep.subr.bf16.mxu0 0
      %3032 = vmatpush1.bf16.xpose.msra.mxu0 0
      %3033 = vmatprep.subr.bf16.mxu0 0
      %3034 = vmatpush1.bf16.xpose.msra.mxu0 0
      %3035 = vmatprep.subr.bf16.mxu0 0
      %3036 = vmatpush1.bf16.xpose.msra.mxu0 0
      %3037 = vmatprep.subr.bf16.mxu0 0
      %3038 = vmatpush1.bf16.xpose.msra.mxu0 0
      %3039 = vmatprep.subr.bf16.mxu0 0
      %3040 = vmatpush1.bf16.xpose.msra.mxu0 %v3024
      %3041 = vmatprep.subr.bf16.mxu0 0
      %3042 = vmatpush2.bf16.xpose.msra.mxu0 0
      %3043 = vmatprep.subr.bf16.mxu0 0
      %3044 = vmatpush2.bf16.xpose.msra.mxu0 0
      %3045 = vmatprep.subr.bf16.mxu0 0
      %3046 = vmatpush2.bf16.xpose.msra.mxu0 0
      %3047 = vmatprep.subr.bf16.mxu0 0
      %3048 = vmatpush2.bf16.xpose.msra.mxu0 0
      %3049 = vmatprep.subr.bf16.mxu0 0
      %3050 = vmatpush2.bf16.xpose.msra.mxu0 0
      %3051 = vmatprep.subr.bf16.mxu0 0
      %3052 = vmatpush2.bf16.xpose.msra.mxu0 0
      %3053 = vmatprep.subr.bf16.mxu0 0
      %3054 = vmatpush2.bf16.xpose.msra.mxu0 0
      %3055 = vmatprep.subr.bf16.mxu0 0
      %3056 = vmatpush2.bf16.xpose.msra.mxu0 0
      %3057 = vmatprep.mubr.bf16.mxu0 0
      %3058 = vmatmul.mubr.bf16.gmra.mxu0 %v2352
      %v3059 = vpop.f32.mrf.mxu0
      %v3060 = vadd.f32 0.0, %v3059
      %v3061 = vpop.f32.mrf.mxu0
      %v3062 = vpop.f32.mrf.mxu0
      %v3063 = vadd.f32 0.0, %v3062
      %v3064 = vpop.f32.mrf.mxu0
      %3065 = vmatprep.mubr.bf16.mxu0 0
      %3066 = vmatmul.mubr.bf16.gmra.mxu0 %v2353
      %v3067 = vpop.f32.mrf.mxu0
      %v3068 = vadd.f32 0.0, %v3067
      %v3069 = vpop.f32.mrf.mxu0
      %v3070 = vpop.f32.mrf.mxu0
      %v3071 = vadd.f32 0.0, %v3070
      %v3072 = vpop.f32.mrf.mxu0
      %3073 = vdwg.mxu0
      %v3074 = vsel %vm2414, %v3060, -inf
      %3075 = vmax.xlane.f32.xlu0 %v3074
      %v3076 = vpop.xlane.xlu0 %3075
      %v3077 = vsel %vm2414, %v3063, -inf
      %3078 = vmax.xlane.f32.xlu0 %v3077
      %v3079 = vpop.xlane.xlu0 %3078
      %v3080 = vsel %vm2414, %v3068, -inf
      %3081 = vmax.xlane.f32.xlu0 %v3080
      %v3082 = vpop.xlane.xlu0 %3081
      %v3083 = vsel %vm2414, %v3071, -inf
      %3084 = vmax.xlane.f32.xlu0 %v3083
      %v3085 = vpop.xlane.xlu0 %3084
      %v3086 = vsub.f32 %v3060, %v3076
      %v3087 = vsub.f32 %v3063, %v3079
      %v3088 = vsub.f32 %v3068, %v3082
      %v3089 = vsub.f32 %v3071, %v3085
      %v3090 = vmul.f32 %v3086, 1.442695
      %v3091 = vpow.pop %v3090
      %v3092 = vmul.f32 %v3087, 1.442695
      %v3093 = vpow.pop %v3092
      %v3094 = vmul.f32 %v3088, 1.442695
      %v3095 = vpow.pop %v3094
      %v3096 = vmul.f32 %v3089, 1.442695
      %v3097 = vpow.pop %v3096
      %v3098 = vsel %vm2414, %v3091, 0.0
      %3099 = vadd.xlane.f32.xlu0 %v3098
      %v3100 = vpop.xlane.xlu0 %3099
      %v3101 = vsel %vm2414, %v3093, 0.0
      %3102 = vadd.xlane.f32.xlu0 %v3101
      %v3103 = vpop.xlane.xlu0 %3102
      %v3104 = vsel %vm2414, %v3095, 0.0
      %3105 = vadd.xlane.f32.xlu0 %v3104
      %v3106 = vpop.xlane.xlu0 %3105
      %v3107 = vsel %vm2414, %v3097, 0.0
      %3108 = vadd.xlane.f32.xlu0 %v3107
      %v3109 = vpop.xlane.xlu0 %3108
      %v3110 = vrcp.pop %v3100
      %v3111 = vrcp.pop %v3103
      %v3112 = vrcp.pop %v3106
      %v3113 = vrcp.pop %v3109
      %v3114 = vmul.f32 %v3091, %v3110
      %v3115 = vmul.f32 %v3093, %v3111
      %v3116 = vmul.f32 %v3095, %v3112
      %v3117 = vmul.f32 %v3097, %v3113
      %v3118 = vpack.c.bf16 %v3115, %v3114
      %v3119 = vpack.c.bf16 %v3117, %v3116
      %v3120 = vmul.bf16 %v2355, %v3023
      %v3122 = vsel %vm2414, %v3118, 0
      %v3125 = vsel %vm2414, %v3119, 0
      %v3128 = vsel %vm2572, %v3120, 0
      %3130 = vmatprep.subr.bf16.mxu0 0
      %3131 = vmatpush1.bf16.msra.mxu0 0
      %3132 = vmatprep.subr.bf16.mxu0 0
      %3133 = vmatpush1.bf16.msra.mxu0 0
      %3134 = vmatprep.subr.bf16.mxu0 0
      %3135 = vmatpush1.bf16.msra.mxu0 0
      %3136 = vmatprep.subr.bf16.mxu0 0
      %3137 = vmatpush1.bf16.msra.mxu0 0
      %3138 = vmatprep.subr.bf16.mxu0 0
      %3139 = vmatpush1.bf16.msra.mxu0 0
      %3140 = vmatprep.subr.bf16.mxu0 0
      %3141 = vmatpush1.bf16.msra.mxu0 0
      %3142 = vmatprep.subr.bf16.mxu0 0
      %3143 = vmatpush1.bf16.msra.mxu0 0
      %3144 = vmatprep.subr.bf16.mxu0 0
      %3145 = vmatpush1.bf16.msra.mxu0 %v3128
      %3146 = vmatprep.subr.bf16.mxu0 0
      %3147 = vmatpush2.bf16.msra.mxu0 0
      %3148 = vmatprep.subr.bf16.mxu0 0
      %3149 = vmatpush2.bf16.msra.mxu0 0
      %3150 = vmatprep.subr.bf16.mxu0 0
      %3151 = vmatpush2.bf16.msra.mxu0 0
      %3152 = vmatprep.subr.bf16.mxu0 0
      %3153 = vmatpush2.bf16.msra.mxu0 0
      %3154 = vmatprep.subr.bf16.mxu0 0
      %3155 = vmatpush2.bf16.msra.mxu0 0
      %3156 = vmatprep.subr.bf16.mxu0 0
      %3157 = vmatpush2.bf16.msra.mxu0 0
      %3158 = vmatprep.subr.bf16.mxu0 0
      %3159 = vmatpush2.bf16.msra.mxu0 0
      %3160 = vmatprep.subr.bf16.mxu0 0
      %3161 = vmatpush2.bf16.msra.mxu0 0
      %3162 = vmatprep.mubr.bf16.mxu0 0
      %3163 = vmatmul.mubr.bf16.gmra.mxu0 %v3122
      %v3164 = vpop.f32.mrf.mxu0
      %v3165 = vadd.f32 0.0, %v3164
      %v3166 = vpop.f32.mrf.mxu0
      %v3167 = vpop.f32.mrf.mxu0
      %v3168 = vadd.f32 0.0, %v3167
      %v3169 = vpop.f32.mrf.mxu0
      %3170 = vmatprep.mubr.bf16.mxu0 0
      %3171 = vmatmul.mubr.bf16.gmra.mxu0 %v3125
      %v3172 = vpop.f32.mrf.mxu0
      %v3173 = vadd.f32 0.0, %v3172
      %v3174 = vpop.f32.mrf.mxu0
      %v3175 = vpop.f32.mrf.mxu0
      %v3176 = vadd.f32 0.0, %v3175
      %v3177 = vpop.f32.mrf.mxu0
      %3178 = vdwg.mxu0
      %v3179 = vadd.f32 %v3012, %v3165
      %v3180 = vadd.f32 %v3013, %v3168
      %v3181 = vadd.f32 %v3014, %v3173
      %v3182 = vadd.f32 %v3015, %v3176
      %v3183 = vshrl.u32 %v3016, 16
      %v3184 = vpack.i.b16 %v3183, %v3183
      %v3186 = vlaneseq
      %v3187 = vshrl.u32 %v3186, 7
      %v3188 = vsub.s32 2, %v3187
      %v3189 = vrot.slane %v3184, %v3188
      %v3190 = vmul.bf16 %v2354, %v3189
      %3191 = vmatprep.subr.bf16.mxu0 0
      %3192 = vmatpush1.bf16.xpose.msra.mxu0 0
      %3193 = vmatprep.subr.bf16.mxu0 0
      %3194 = vmatpush1.bf16.xpose.msra.mxu0 0
      %3195 = vmatprep.subr.bf16.mxu0 0
      %3196 = vmatpush1.bf16.xpose.msra.mxu0 0
      %3197 = vmatprep.subr.bf16.mxu0 0
      %3198 = vmatpush1.bf16.xpose.msra.mxu0 0
      %3199 = vmatprep.subr.bf16.mxu0 0
      %3200 = vmatpush1.bf16.xpose.msra.mxu0 0
      %3201 = vmatprep.subr.bf16.mxu0 0
      %3202 = vmatpush1.bf16.xpose.msra.mxu0 0
      %3203 = vmatprep.subr.bf16.mxu0 0
      %3204 = vmatpush1.bf16.xpose.msra.mxu0 0
      %3205 = vmatprep.subr.bf16.mxu0 0
      %3206 = vmatpush1.bf16.xpose.msra.mxu0 %v3190
      %3207 = vmatprep.subr.bf16.mxu0 0
      %3208 = vmatpush2.bf16.xpose.msra.mxu0 0
      %3209 = vmatprep.subr.bf16.mxu0 0
      %3210 = vmatpush2.bf16.xpose.msra.mxu0 0
      %3211 = vmatprep.subr.bf16.mxu0 0
      %3212 = vmatpush2.bf16.xpose.msra.mxu0 0
      %3213 = vmatprep.subr.bf16.mxu0 0
      %3214 = vmatpush2.bf16.xpose.msra.mxu0 0
      %3215 = vmatprep.subr.bf16.mxu0 0
      %3216 = vmatpush2.bf16.xpose.msra.mxu0 0
      %3217 = vmatprep.subr.bf16.mxu0 0
      %3218 = vmatpush2.bf16.xpose.msra.mxu0 0
      %3219 = vmatprep.subr.bf16.mxu0 0
      %3220 = vmatpush2.bf16.xpose.msra.mxu0 0
      %3221 = vmatprep.subr.bf16.mxu0 0
      %3222 = vmatpush2.bf16.xpose.msra.mxu0 0
      %3223 = vmatprep.mubr.bf16.mxu0 0
      %3224 = vmatmul.mubr.bf16.gmra.mxu0 %v2352
      %v3225 = vpop.f32.mrf.mxu0
      %v3226 = vadd.f32 0.0, %v3225
      %v3227 = vpop.f32.mrf.mxu0
      %v3228 = vpop.f32.mrf.mxu0
      %v3229 = vadd.f32 0.0, %v3228
      %v3230 = vpop.f32.mrf.mxu0
      %3231 = vmatprep.mubr.bf16.mxu0 0
      %3232 = vmatmul.mubr.bf16.gmra.mxu0 %v2353
      %v3233 = vpop.f32.mrf.mxu0
      %v3234 = vadd.f32 0.0, %v3233
      %v3235 = vpop.f32.mrf.mxu0
      %v3236 = vpop.f32.mrf.mxu0
      %v3237 = vadd.f32 0.0, %v3236
      %v3238 = vpop.f32.mrf.mxu0
      %3239 = vdwg.mxu0
      %v3240 = vsel %vm2414, %v3226, -inf
      %3241 = vmax.xlane.f32.xlu0 %v3240
      %v3242 = vpop.xlane.xlu0 %3241
      %v3243 = vsel %vm2414, %v3229, -inf
      %3244 = vmax.xlane.f32.xlu0 %v3243
      %v3245 = vpop.xlane.xlu0 %3244
      %v3246 = vsel %vm2414, %v3234, -inf
      %3247 = vmax.xlane.f32.xlu0 %v3246
      %v3248 = vpop.xlane.xlu0 %3247
      %v3249 = vsel %vm2414, %v3237, -inf
      %3250 = vmax.xlane.f32.xlu0 %v3249
      %v3251 = vpop.xlane.xlu0 %3250
      %v3252 = vsub.f32 %v3226, %v3242
      %v3253 = vsub.f32 %v3229, %v3245
      %v3254 = vsub.f32 %v3234, %v3248
      %v3255 = vsub.f32 %v3237, %v3251
      %v3256 = vmul.f32 %v3252, 1.442695
      %v3257 = vpow.pop %v3256
      %v3258 = vmul.f32 %v3253, 1.442695
      %v3259 = vpow.pop %v3258
      %v3260 = vmul.f32 %v3254, 1.442695
      %v3261 = vpow.pop %v3260
      %v3262 = vmul.f32 %v3255, 1.442695
      %v3263 = vpow.pop %v3262
      %v3264 = vsel %vm2414, %v3257, 0.0
      %3265 = vadd.xlane.f32.xlu0 %v3264
      %v3266 = vpop.xlane.xlu0 %3265
      %v3267 = vsel %vm2414, %v3259, 0.0
      %3268 = vadd.xlane.f32.xlu0 %v3267
      %v3269 = vpop.xlane.xlu0 %3268
      %v3270 = vsel %vm2414, %v3261, 0.0
      %3271 = vadd.xlane.f32.xlu0 %v3270
      %v3272 = vpop.xlane.xlu0 %3271
      %v3273 = vsel %vm2414, %v3263, 0.0
      %3274 = vadd.xlane.f32.xlu0 %v3273
      %v3275 = vpop.xlane.xlu0 %3274
      %v3276 = vrcp.pop %v3266
      %v3277 = vrcp.pop %v3269
      %v3278 = vrcp.pop %v3272
      %v3279 = vrcp.pop %v3275
      %v3280 = vmul.f32 %v3257, %v3276
      %v3281 = vmul.f32 %v3259, %v3277
      %v3282 = vmul.f32 %v3261, %v3278
      %v3283 = vmul.f32 %v3263, %v3279
      %v3284 = vpack.c.bf16 %v3281, %v3280
      %v3285 = vpack.c.bf16 %v3283, %v3282
      %v3286 = vmul.bf16 %v2355, %v3189
      %v3288 = vsel %vm2414, %v3284, 0
      %v3291 = vsel %vm2414, %v3285, 0
      %v3294 = vsel %vm2572, %v3286, 0
      %3296 = vmatprep.subr.bf16.mxu0 0
      %3297 = vmatpush1.bf16.msra.mxu0 0
      %3298 = vmatprep.subr.bf16.mxu0 0
      %3299 = vmatpush1.bf16.msra.mxu0 0
      %3300 = vmatprep.subr.bf16.mxu0 0
      %3301 = vmatpush1.bf16.msra.mxu0 0
      %3302 = vmatprep.subr.bf16.mxu0 0
      %3303 = vmatpush1.bf16.msra.mxu0 0
      %3304 = vmatprep.subr.bf16.mxu0 0
      %3305 = vmatpush1.bf16.msra.mxu0 0
      %3306 = vmatprep.subr.bf16.mxu0 0
      %3307 = vmatpush1.bf16.msra.mxu0 0
      %3308 = vmatprep.subr.bf16.mxu0 0
      %3309 = vmatpush1.bf16.msra.mxu0 0
      %3310 = vmatprep.subr.bf16.mxu0 0
      %3311 = vmatpush1.bf16.msra.mxu0 %v3294
      %3312 = vmatprep.subr.bf16.mxu0 0
      %3313 = vmatpush2.bf16.msra.mxu0 0
      %3314 = vmatprep.subr.bf16.mxu0 0
      %3315 = vmatpush2.bf16.msra.mxu0 0
      %3316 = vmatprep.subr.bf16.mxu0 0
      %3317 = vmatpush2.bf16.msra.mxu0 0
      %3318 = vmatprep.subr.bf16.mxu0 0
      %3319 = vmatpush2.bf16.msra.mxu0 0
      %3320 = vmatprep.subr.bf16.mxu0 0
      %3321 = vmatpush2.bf16.msra.mxu0 0
      %3322 = vmatprep.subr.bf16.mxu0 0
      %3323 = vmatpush2.bf16.msra.mxu0 0
      %3324 = vmatprep.subr.bf16.mxu0 0
      %3325 = vmatpush2.bf16.msra.mxu0 0
      %3326 = vmatprep.subr.bf16.mxu0 0
      %3327 = vmatpush2.bf16.msra.mxu0 0
      %3328 = vmatprep.mubr.bf16.mxu0 0
      %3329 = vmatmul.mubr.bf16.gmra.mxu0 %v3288
      %v3330 = vpop.f32.mrf.mxu0
      %v3331 = vadd.f32 0.0, %v3330
      %v3332 = vpop.f32.mrf.mxu0
      %v3333 = vpop.f32.mrf.mxu0
      %v3334 = vadd.f32 0.0, %v3333
      %v3335 = vpop.f32.mrf.mxu0
      %3336 = vmatprep.mubr.bf16.mxu0 0
      %3337 = vmatmul.mubr.bf16.gmra.mxu0 %v3291
      %v3338 = vpop.f32.mrf.mxu0
      %v3339 = vadd.f32 0.0, %v3338
      %v3340 = vpop.f32.mrf.mxu0
      %v3341 = vpop.f32.mrf.mxu0
      %v3342 = vadd.f32 0.0, %v3341
      %v3343 = vpop.f32.mrf.mxu0
      %3344 = vdwg.mxu0
      %v3345 = vadd.f32 %v3179, %v3331
      %v3346 = vadd.f32 %v3180, %v3334
      %v3347 = vadd.f32 %v3181, %v3339
      %v3348 = vadd.f32 %v3182, %v3342
      %v3349 = vld [vmem:[%s11] sm:$0x8]
      %v3351 = vpack.i.b16 %v3349, %v3349
      %v3353 = vlaneseq
      %v3354 = vshrl.u32 %v3353, 7
      %v3355 = vsub.s32 3, %v3354
      %v3356 = vrot.slane %v3351, %v3355
      %v3357 = vmul.bf16 %v2354, %v3356
      %3358 = vmatprep.subr.bf16.mxu0 0
      %3359 = vmatpush1.bf16.xpose.msra.mxu0 0
      %3360 = vmatprep.subr.bf16.mxu0 0
      %3361 = vmatpush1.bf16.xpose.msra.mxu0 0
      %3362 = vmatprep.subr.bf16.mxu0 0
      %3363 = vmatpush1.bf16.xpose.msra.mxu0 0
      %3364 = vmatprep.subr.bf16.mxu0 0
      %3365 = vmatpush1.bf16.xpose.msra.mxu0 0
      %3366 = vmatprep.subr.bf16.mxu0 0
      %3367 = vmatpush1.bf16.xpose.msra.mxu0 0
      %3368 = vmatprep.subr.bf16.mxu0 0
      %3369 = vmatpush1.bf16.xpose.msra.mxu0 0
      %3370 = vmatprep.subr.bf16.mxu0 0
      %3371 = vmatpush1.bf16.xpose.msra.mxu0 0
      %3372 = vmatprep.subr.bf16.mxu0 0
      %3373 = vmatpush1.bf16.xpose.msra.mxu0 %v3357
      %3374 = vmatprep.subr.bf16.mxu0 0
      %3375 = vmatpush2.bf16.xpose.msra.mxu0 0
      %3376 = vmatprep.subr.bf16.mxu0 0
      %3377 = vmatpush2.bf16.xpose.msra.mxu0 0
      %3378 = vmatprep.subr.bf16.mxu0 0
      %3379 = vmatpush2.bf16.xpose.msra.mxu0 0
      %3380 = vmatprep.subr.bf16.mxu0 0
      %3381 = vmatpush2.bf16.xpose.msra.mxu0 0
      %3382 = vmatprep.subr.bf16.mxu0 0
      %3383 = vmatpush2.bf16.xpose.msra.mxu0 0
      %3384 = vmatprep.subr.bf16.mxu0 0
      %3385 = vmatpush2.bf16.xpose.msra.mxu0 0
      %3386 = vmatprep.subr.bf16.mxu0 0
      %3387 = vmatpush2.bf16.xpose.msra.mxu0 0
      %3388 = vmatprep.subr.bf16.mxu0 0
      %3389 = vmatpush2.bf16.xpose.msra.mxu0 0
      %3390 = vmatprep.mubr.bf16.mxu0 0
      %3391 = vmatmul.mubr.bf16.gmra.mxu0 %v2352
      %v3392 = vpop.f32.mrf.mxu0
      %v3393 = vadd.f32 0.0, %v3392
      %v3394 = vpop.f32.mrf.mxu0
      %v3395 = vpop.f32.mrf.mxu0
      %v3396 = vadd.f32 0.0, %v3395
      %v3397 = vpop.f32.mrf.mxu0
      %3398 = vmatprep.mubr.bf16.mxu0 0
      %3399 = vmatmul.mubr.bf16.gmra.mxu0 %v2353
      %v3400 = vpop.f32.mrf.mxu0
      %v3401 = vadd.f32 0.0, %v3400
      %v3402 = vpop.f32.mrf.mxu0
      %v3403 = vpop.f32.mrf.mxu0
      %v3404 = vadd.f32 0.0, %v3403
      %v3405 = vpop.f32.mrf.mxu0
      %3406 = vdwg.mxu0
      %v3407 = vsel %vm2414, %v3393, -inf
      %3408 = vmax.xlane.f32.xlu0 %v3407
      %v3409 = vpop.xlane.xlu0 %3408
      %v3410 = vsel %vm2414, %v3396, -inf
      %3411 = vmax.xlane.f32.xlu0 %v3410
      %v3412 = vpop.xlane.xlu0 %3411
      %v3413 = vsel %vm2414, %v3401, -inf
      %3414 = vmax.xlane.f32.xlu0 %v3413
      %v3415 = vpop.xlane.xlu0 %3414
      %v3416 = vsel %vm2414, %v3404, -inf
      %3417 = vmax.xlane.f32.xlu0 %v3416
      %v3418 = vpop.xlane.xlu0 %3417
      %v3419 = vsub.f32 %v3393, %v3409
      %v3420 = vsub.f32 %v3396, %v3412
      %v3421 = vsub.f32 %v3401, %v3415
      %v3422 = vsub.f32 %v3404, %v3418
      %v3423 = vmul.f32 %v3419, 1.442695
      %v3424 = vpow.pop %v3423
      %v3425 = vmul.f32 %v3420, 1.442695
      %v3426 = vpow.pop %v3425
      %v3427 = vmul.f32 %v3421, 1.442695
      %v3428 = vpow.pop %v3427
      %v3429 = vmul.f32 %v3422, 1.442695
      %v3430 = vpow.pop %v3429
      %v3431 = vsel %vm2414, %v3424, 0.0
      %3432 = vadd.xlane.f32.xlu0 %v3431
      %v3433 = vpop.xlane.xlu0 %3432
      %v3434 = vsel %vm2414, %v3426, 0.0
      %3435 = vadd.xlane.f32.xlu0 %v3434
      %v3436 = vpop.xlane.xlu0 %3435
      %v3437 = vsel %vm2414, %v3428, 0.0
      %3438 = vadd.xlane.f32.xlu0 %v3437
      %v3439 = vpop.xlane.xlu0 %3438
      %v3440 = vsel %vm2414, %v3430, 0.0
      %3441 = vadd.xlane.f32.xlu0 %v3440
      %v3442 = vpop.xlane.xlu0 %3441
      %v3443 = vrcp.pop %v3433
      %v3444 = vrcp.pop %v3436
      %v3445 = vrcp.pop %v3439
      %v3446 = vrcp.pop %v3442
      %v3447 = vmul.f32 %v3424, %v3443
      %v3448 = vmul.f32 %v3426, %v3444
      %v3449 = vmul.f32 %v3428, %v3445
      %v3450 = vmul.f32 %v3430, %v3446
      %v3451 = vpack.c.bf16 %v3448, %v3447
      %v3452 = vpack.c.bf16 %v3450, %v3449
      %v3453 = vmul.bf16 %v2355, %v3356
      %v3455 = vsel %vm2414, %v3451, 0
      %v3458 = vsel %vm2414, %v3452, 0
      %v3461 = vsel %vm2572, %v3453, 0
      %3463 = vmatprep.subr.bf16.mxu0 0
      %3464 = vmatpush1.bf16.msra.mxu0 0
      %3465 = vmatprep.subr.bf16.mxu0 0
      %3466 = vmatpush1.bf16.msra.mxu0 0
      %3467 = vmatprep.subr.bf16.mxu0 0
      %3468 = vmatpush1.bf16.msra.mxu0 0
      %3469 = vmatprep.subr.bf16.mxu0 0
      %3470 = vmatpush1.bf16.msra.mxu0 0
      %3471 = vmatprep.subr.bf16.mxu0 0
      %3472 = vmatpush1.bf16.msra.mxu0 0
      %3473 = vmatprep.subr.bf16.mxu0 0
      %3474 = vmatpush1.bf16.msra.mxu0 0
      %3475 = vmatprep.subr.bf16.mxu0 0
      %3476 = vmatpush1.bf16.msra.mxu0 0
      %3477 = vmatprep.subr.bf16.mxu0 0
      %3478 = vmatpush1.bf16.msra.mxu0 %v3461
      %3479 = vmatprep.subr.bf16.mxu0 0
      %3480 = vmatpush2.bf16.msra.mxu0 0
      %3481 = vmatprep.subr.bf16.mxu0 0
      %3482 = vmatpush2.bf16.msra.mxu0 0
      %3483 = vmatprep.subr.bf16.mxu0 0
      %3484 = vmatpush2.bf16.msra.mxu0 0
      %3485 = vmatprep.subr.bf16.mxu0 0
      %3486 = vmatpush2.bf16.msra.mxu0 0
      %3487 = vmatprep.subr.bf16.mxu0 0
      %3488 = vmatpush2.bf16.msra.mxu0 0
      %3489 = vmatprep.subr.bf16.mxu0 0
      %3490 = vmatpush2.bf16.msra.mxu0 0
      %3491 = vmatprep.subr.bf16.mxu0 0
      %3492 = vmatpush2.bf16.msra.mxu0 0
      %3493 = vmatprep.subr.bf16.mxu0 0
      %3494 = vmatpush2.bf16.msra.mxu0 0
      %3495 = vmatprep.mubr.bf16.mxu0 0
      %3496 = vmatmul.mubr.bf16.gmra.mxu0 %v3455
      %v3497 = vpop.f32.mrf.mxu0
      %v3498 = vadd.f32 0.0, %v3497
      %v3499 = vpop.f32.mrf.mxu0
      %v3500 = vpop.f32.mrf.mxu0
      %v3501 = vadd.f32 0.0, %v3500
      %v3502 = vpop.f32.mrf.mxu0
      %3503 = vmatprep.mubr.bf16.mxu0 0
      %3504 = vmatmul.mubr.bf16.gmra.mxu0 %v3458
      %v3505 = vpop.f32.mrf.mxu0
      %v3506 = vadd.f32 0.0, %v3505
      %v3507 = vpop.f32.mrf.mxu0
      %v3508 = vpop.f32.mrf.mxu0
      %v3509 = vadd.f32 0.0, %v3508
      %v3510 = vpop.f32.mrf.mxu0
      %3511 = vdwg.mxu0
      %v3512 = vadd.f32 %v3345, %v3498
      %v3513 = vadd.f32 %v3346, %v3501
      %v3514 = vadd.f32 %v3347, %v3506
      %v3515 = vadd.f32 %v3348, %v3509
      %v3516 = vshrl.u32 %v3349, 16
      %v3517 = vpack.i.b16 %v3516, %v3516
      %v3519 = vlaneseq
      %v3520 = vshrl.u32 %v3519, 7
      %v3521 = vsub.s32 3, %v3520
      %v3522 = vrot.slane %v3517, %v3521
      %v3523 = vmul.bf16 %v2354, %v3522
      %3524 = vmatprep.subr.bf16.mxu0 0
      %3525 = vmatpush1.bf16.xpose.msra.mxu0 0
      %3526 = vmatprep.subr.bf16.mxu0 0
      %3527 = vmatpush1.bf16.xpose.msra.mxu0 0
      %3528 = vmatprep.subr.bf16.mxu0 0
      %3529 = vmatpush1.bf16.xpose.msra.mxu0 0
      %3530 = vmatprep.subr.bf16.mxu0 0
      %3531 = vmatpush1.bf16.xpose.msra.mxu0 0
      %3532 = vmatprep.subr.bf16.mxu0 0
      %3533 = vmatpush1.bf16.xpose.msra.mxu0 0
      %3534 = vmatprep.subr.bf16.mxu0 0
      %3535 = vmatpush1.bf16.xpose.msra.mxu0 0
      %3536 = vmatprep.subr.bf16.mxu0 0
      %3537 = vmatpush1.bf16.xpose.msra.mxu0 0
      %3538 = vmatprep.subr.bf16.mxu0 0
      %3539 = vmatpush1.bf16.xpose.msra.mxu0 %v3523
      %3540 = vmatprep.subr.bf16.mxu0 0
      %3541 = vmatpush2.bf16.xpose.msra.mxu0 0
      %3542 = vmatprep.subr.bf16.mxu0 0
      %3543 = vmatpush2.bf16.xpose.msra.mxu0 0
      %3544 = vmatprep.subr.bf16.mxu0 0
      %3545 = vmatpush2.bf16.xpose.msra.mxu0 0
      %3546 = vmatprep.subr.bf16.mxu0 0
      %3547 = vmatpush2.bf16.xpose.msra.mxu0 0
      %3548 = vmatprep.subr.bf16.mxu0 0
      %3549 = vmatpush2.bf16.xpose.msra.mxu0 0
      %3550 = vmatprep.subr.bf16.mxu0 0
      %3551 = vmatpush2.bf16.xpose.msra.mxu0 0
      %3552 = vmatprep.subr.bf16.mxu0 0
      %3553 = vmatpush2.bf16.xpose.msra.mxu0 0
      %3554 = vmatprep.subr.bf16.mxu0 0
      %3555 = vmatpush2.bf16.xpose.msra.mxu0 0
      %3556 = vmatprep.mubr.bf16.mxu0 0
      %3557 = vmatmul.mubr.bf16.gmra.mxu0 %v2352
      %v3558 = vpop.f32.mrf.mxu0
      %v3559 = vadd.f32 0.0, %v3558
      %v3560 = vpop.f32.mrf.mxu0
      %v3561 = vpop.f32.mrf.mxu0
      %v3562 = vadd.f32 0.0, %v3561
      %v3563 = vpop.f32.mrf.mxu0
      %3564 = vmatprep.mubr.bf16.mxu0 0
      %3565 = vmatmul.mubr.bf16.gmra.mxu0 %v2353
      %v3566 = vpop.f32.mrf.mxu0
      %v3567 = vadd.f32 0.0, %v3566
      %v3568 = vpop.f32.mrf.mxu0
      %v3569 = vpop.f32.mrf.mxu0
      %v3570 = vadd.f32 0.0, %v3569
      %v3571 = vpop.f32.mrf.mxu0
      %3572 = vdwg.mxu0
      %v3573 = vsel %vm2414, %v3559, -inf
      %3574 = vmax.xlane.f32.xlu0 %v3573
      %v3575 = vpop.xlane.xlu0 %3574
      %v3576 = vsel %vm2414, %v3562, -inf
      %3577 = vmax.xlane.f32.xlu0 %v3576
      %v3578 = vpop.xlane.xlu0 %3577
      %v3579 = vsel %vm2414, %v3567, -inf
      %3580 = vmax.xlane.f32.xlu0 %v3579
      %v3581 = vpop.xlane.xlu0 %3580
      %v3582 = vsel %vm2414, %v3570, -inf
      %3583 = vmax.xlane.f32.xlu0 %v3582
      %v3584 = vpop.xlane.xlu0 %3583
      %v3585 = vsub.f32 %v3559, %v3575
      %v3586 = vsub.f32 %v3562, %v3578
      %v3587 = vsub.f32 %v3567, %v3581
      %v3588 = vsub.f32 %v3570, %v3584
      %v3589 = vmul.f32 %v3585, 1.442695
      %v3590 = vpow.pop %v3589
      %v3591 = vmul.f32 %v3586, 1.442695
      %v3592 = vpow.pop %v3591
      %v3593 = vmul.f32 %v3587, 1.442695
      %v3594 = vpow.pop %v3593
      %v3595 = vmul.f32 %v3588, 1.442695
      %v3596 = vpow.pop %v3595
      %v3597 = vsel %vm2414, %v3590, 0.0
      %3598 = vadd.xlane.f32.xlu0 %v3597
      %v3599 = vpop.xlane.xlu0 %3598
      %v3600 = vsel %vm2414, %v3592, 0.0
      %3601 = vadd.xlane.f32.xlu0 %v3600
      %v3602 = vpop.xlane.xlu0 %3601
      %v3603 = vsel %vm2414, %v3594, 0.0
      %3604 = vadd.xlane.f32.xlu0 %v3603
      %v3605 = vpop.xlane.xlu0 %3604
      %v3606 = vsel %vm2414, %v3596, 0.0
      %3607 = vadd.xlane.f32.xlu0 %v3606
      %v3608 = vpop.xlane.xlu0 %3607
      %v3609 = vrcp.pop %v3599
      %v3610 = vrcp.pop %v3602
      %v3611 = vrcp.pop %v3605
      %v3612 = vrcp.pop %v3608
      %v3613 = vmul.f32 %v3590, %v3609
      %v3614 = vmul.f32 %v3592, %v3610
      %v3615 = vmul.f32 %v3594, %v3611
      %v3616 = vmul.f32 %v3596, %v3612
      %v3617 = vpack.c.bf16 %v3614, %v3613
      %v3618 = vpack.c.bf16 %v3616, %v3615
      %v3619 = vmul.bf16 %v2355, %v3522
      %v3621 = vsel %vm2414, %v3617, 0
      %v3624 = vsel %vm2414, %v3618, 0
      %v3627 = vsel %vm2572, %v3619, 0
      %3629 = vmatprep.subr.bf16.mxu0 0
      %3630 = vmatpush1.bf16.msra.mxu0 0
      %3631 = vmatprep.subr.bf16.mxu0 0
      %3632 = vmatpush1.bf16.msra.mxu0 0
      %3633 = vmatprep.subr.bf16.mxu0 0
      %3634 = vmatpush1.bf16.msra.mxu0 0
      %3635 = vmatprep.subr.bf16.mxu0 0
      %3636 = vmatpush1.bf16.msra.mxu0 0
      %3637 = vmatprep.subr.bf16.mxu0 0
      %3638 = vmatpush1.bf16.msra.mxu0 0
      %3639 = vmatprep.subr.bf16.mxu0 0
      %3640 = vmatpush1.bf16.msra.mxu0 0
      %3641 = vmatprep.subr.bf16.mxu0 0
      %3642 = vmatpush1.bf16.msra.mxu0 0
      %3643 = vmatprep.subr.bf16.mxu0 0
      %3644 = vmatpush1.bf16.msra.mxu0 %v3627
      %3645 = vmatprep.subr.bf16.mxu0 0
      %3646 = vmatpush2.bf16.msra.mxu0 0
      %3647 = vmatprep.subr.bf16.mxu0 0
      %3648 = vmatpush2.bf16.msra.mxu0 0
      %3649 = vmatprep.subr.bf16.mxu0 0
      %3650 = vmatpush2.bf16.msra.mxu0 0
      %3651 = vmatprep.subr.bf16.mxu0 0
      %3652 = vmatpush2.bf16.msra.mxu0 0
      %3653 = vmatprep.subr.bf16.mxu0 0
      %3654 = vmatpush2.bf16.msra.mxu0 0
      %3655 = vmatprep.subr.bf16.mxu0 0
      %3656 = vmatpush2.bf16.msra.mxu0 0
      %3657 = vmatprep.subr.bf16.mxu0 0
      %3658 = vmatpush2.bf16.msra.mxu0 0
      %3659 = vmatprep.subr.bf16.mxu0 0
      %3660 = vmatpush2.bf16.msra.mxu0 0
      %3661 = vmatprep.mubr.bf16.mxu0 0
      %3662 = vmatmul.mubr.bf16.gmra.mxu0 %v3621
      %v3663 = vpop.f32.mrf.mxu0
      %v3664 = vadd.f32 0.0, %v3663
      %v3665 = vpop.f32.mrf.mxu0
      %v3666 = vpop.f32.mrf.mxu0
      %v3667 = vadd.f32 0.0, %v3666
      %v3668 = vpop.f32.mrf.mxu0
      %3669 = vmatprep.mubr.bf16.mxu0 0
      %3670 = vmatmul.mubr.bf16.gmra.mxu0 %v3624
      %v3671 = vpop.f32.mrf.mxu0
      %v3672 = vadd.f32 0.0, %v3671
      %v3673 = vpop.f32.mrf.mxu0
      %v3674 = vpop.f32.mrf.mxu0
      %v3675 = vadd.f32 0.0, %v3674
      %v3676 = vpop.f32.mrf.mxu0
      %3677 = vdwg.mxu0
      %v3678 = vadd.f32 %v3512, %v3664
      %v3679 = vadd.f32 %v3513, %v3667
      %v3680 = vadd.f32 %v3514, %v3672
      %v3681 = vadd.f32 %v3515, %v3675
      %v3682 = vld [vmem:[%s11 + $0x4] sm:$0x1]
      %v3684 = vpack.i.b16 %v3682, %v3682
      %v3686 = vlaneseq
      %v3687 = vshrl.u32 %v3686, 7
      %v3688 = vsub.s32 0, %v3687
      %v3689 = vrot.slane %v3684, %v3688
      %v3690 = vmul.bf16 %v2354, %v3689
      %3691 = vmatprep.subr.bf16.mxu0 0
      %3692 = vmatpush1.bf16.xpose.msra.mxu0 0
      %3693 = vmatprep.subr.bf16.mxu0 0
      %3694 = vmatpush1.bf16.xpose.msra.mxu0 0
      %3695 = vmatprep.subr.bf16.mxu0 0
      %3696 = vmatpush1.bf16.xpose.msra.mxu0 0
      %3697 = vmatprep.subr.bf16.mxu0 0
      %3698 = vmatpush1.bf16.xpose.msra.mxu0 0
      %3699 = vmatprep.subr.bf16.mxu0 0
      %3700 = vmatpush1.bf16.xpose.msra.mxu0 0
      %3701 = vmatprep.subr.bf16.mxu0 0
      %3702 = vmatpush1.bf16.xpose.msra.mxu0 0
      %3703 = vmatprep.subr.bf16.mxu0 0
      %3704 = vmatpush1.bf16.xpose.msra.mxu0 0
      %3705 = vmatprep.subr.bf16.mxu0 0
      %3706 = vmatpush1.bf16.xpose.msra.mxu0 %v3690
      %3707 = vmatprep.subr.bf16.mxu0 0
      %3708 = vmatpush2.bf16.xpose.msra.mxu0 0
      %3709 = vmatprep.subr.bf16.mxu0 0
      %3710 = vmatpush2.bf16.xpose.msra.mxu0 0
      %3711 = vmatprep.subr.bf16.mxu0 0
      %3712 = vmatpush2.bf16.xpose.msra.mxu0 0
      %3713 = vmatprep.subr.bf16.mxu0 0
      %3714 = vmatpush2.bf16.xpose.msra.mxu0 0
      %3715 = vmatprep.subr.bf16.mxu0 0
      %3716 = vmatpush2.bf16.xpose.msra.mxu0 0
      %3717 = vmatprep.subr.bf16.mxu0 0
      %3718 = vmatpush2.bf16.xpose.msra.mxu0 0
      %3719 = vmatprep.subr.bf16.mxu0 0
      %3720 = vmatpush2.bf16.xpose.msra.mxu0 0
      %3721 = vmatprep.subr.bf16.mxu0 0
      %3722 = vmatpush2.bf16.xpose.msra.mxu0 0
      %3723 = vmatprep.mubr.bf16.mxu0 0
      %3724 = vmatmul.mubr.bf16.gmra.mxu0 %v2352
      %v3725 = vpop.f32.mrf.mxu0
      %v3726 = vadd.f32 0.0, %v3725
      %v3727 = vpop.f32.mrf.mxu0
      %v3728 = vpop.f32.mrf.mxu0
      %v3729 = vadd.f32 0.0, %v3728
      %v3730 = vpop.f32.mrf.mxu0
      %3731 = vmatprep.mubr.bf16.mxu0 0
      %3732 = vmatmul.mubr.bf16.gmra.mxu0 %v2353
      %v3733 = vpop.f32.mrf.mxu0
      %v3734 = vadd.f32 0.0, %v3733
      %v3735 = vpop.f32.mrf.mxu0
      %v3736 = vpop.f32.mrf.mxu0
      %v3737 = vadd.f32 0.0, %v3736
      %v3738 = vpop.f32.mrf.mxu0
      %3739 = vdwg.mxu0
      %v3740 = vsel %vm2414, %v3726, -inf
      %3741 = vmax.xlane.f32.xlu0 %v3740
      %v3742 = vpop.xlane.xlu0 %3741
      %v3743 = vsel %vm2414, %v3729, -inf
      %3744 = vmax.xlane.f32.xlu0 %v3743
      %v3745 = vpop.xlane.xlu0 %3744
      %v3746 = vsel %vm2414, %v3734, -inf
      %3747 = vmax.xlane.f32.xlu0 %v3746
      %v3748 = vpop.xlane.xlu0 %3747
      %v3749 = vsel %vm2414, %v3737, -inf
      %3750 = vmax.xlane.f32.xlu0 %v3749
      %v3751 = vpop.xlane.xlu0 %3750
      %v3752 = vsub.f32 %v3726, %v3742
      %v3753 = vsub.f32 %v3729, %v3745
      %v3754 = vsub.f32 %v3734, %v3748
      %v3755 = vsub.f32 %v3737, %v3751
      %v3756 = vmul.f32 %v3752, 1.442695
      %v3757 = vpow.pop %v3756
      %v3758 = vmul.f32 %v3753, 1.442695
      %v3759 = vpow.pop %v3758
      %v3760 = vmul.f32 %v3754, 1.442695
      %v3761 = vpow.pop %v3760
      %v3762 = vmul.f32 %v3755, 1.442695
      %v3763 = vpow.pop %v3762
      %v3764 = vsel %vm2414, %v3757, 0.0
      %3765 = vadd.xlane.f32.xlu0 %v3764
      %v3766 = vpop.xlane.xlu0 %3765
      %v3767 = vsel %vm2414, %v3759, 0.0
      %3768 = vadd.xlane.f32.xlu0 %v3767
      %v3769 = vpop.xlane.xlu0 %3768
      %v3770 = vsel %vm2414, %v3761, 0.0
      %3771 = vadd.xlane.f32.xlu0 %v3770
      %v3772 = vpop.xlane.xlu0 %3771
      %v3773 = vsel %vm2414, %v3763, 0.0
      %3774 = vadd.xlane.f32.xlu0 %v3773
      %v3775 = vpop.xlane.xlu0 %3774
      %v3776 = vrcp.pop %v3766
      %v3777 = vrcp.pop %v3769
      %v3778 = vrcp.pop %v3772
      %v3779 = vrcp.pop %v3775
      %v3780 = vmul.f32 %v3757, %v3776
      %v3781 = vmul.f32 %v3759, %v3777
      %v3782 = vmul.f32 %v3761, %v3778
      %v3783 = vmul.f32 %v3763, %v3779
      %v3784 = vpack.c.bf16 %v3781, %v3780
      %v3785 = vpack.c.bf16 %v3783, %v3782
      %v3786 = vmul.bf16 %v2355, %v3689
      %v3788 = vsel %vm2414, %v3784, 0
      %v3791 = vsel %vm2414, %v3785, 0
      %v3794 = vsel %vm2572, %v3786, 0
      %3796 = vmatprep.subr.bf16.mxu0 0
      %3797 = vmatpush1.bf16.msra.mxu0 0
      %3798 = vmatprep.subr.bf16.mxu0 0
      %3799 = vmatpush1.bf16.msra.mxu0 0
      %3800 = vmatprep.subr.bf16.mxu0 0
      %3801 = vmatpush1.bf16.msra.mxu0 0
      %3802 = vmatprep.subr.bf16.mxu0 0
      %3803 = vmatpush1.bf16.msra.mxu0 0
      %3804 = vmatprep.subr.bf16.mxu0 0
      %3805 = vmatpush1.bf16.msra.mxu0 0
      %3806 = vmatprep.subr.bf16.mxu0 0
      %3807 = vmatpush1.bf16.msra.mxu0 0
      %3808 = vmatprep.subr.bf16.mxu0 0
      %3809 = vmatpush1.bf16.msra.mxu0 0
      %3810 = vmatprep.subr.bf16.mxu0 0
      %3811 = vmatpush1.bf16.msra.mxu0 %v3794
      %3812 = vmatprep.subr.bf16.mxu0 0
      %3813 = vmatpush2.bf16.msra.mxu0 0
      %3814 = vmatprep.subr.bf16.mxu0 0
      %3815 = vmatpush2.bf16.msra.mxu0 0
      %3816 = vmatprep.subr.bf16.mxu0 0
      %3817 = vmatpush2.bf16.msra.mxu0 0
      %3818 = vmatprep.subr.bf16.mxu0 0
      %3819 = vmatpush2.bf16.msra.mxu0 0
      %3820 = vmatprep.subr.bf16.mxu0 0
      %3821 = vmatpush2.bf16.msra.mxu0 0
      %3822 = vmatprep.subr.bf16.mxu0 0
      %3823 = vmatpush2.bf16.msra.mxu0 0
      %3824 = vmatprep.subr.bf16.mxu0 0
      %3825 = vmatpush2.bf16.msra.mxu0 0
      %3826 = vmatprep.subr.bf16.mxu0 0
      %3827 = vmatpush2.bf16.msra.mxu0 0
      %3828 = vmatprep.mubr.bf16.mxu0 0
      %3829 = vmatmul.mubr.bf16.gmra.mxu0 %v3788
      %v3830 = vpop.f32.mrf.mxu0
      %v3831 = vadd.f32 0.0, %v3830
      %v3832 = vpop.f32.mrf.mxu0
      %v3833 = vpop.f32.mrf.mxu0
      %v3834 = vadd.f32 0.0, %v3833
      %v3835 = vpop.f32.mrf.mxu0
      %3836 = vmatprep.mubr.bf16.mxu0 0
      %3837 = vmatmul.mubr.bf16.gmra.mxu0 %v3791
      %v3838 = vpop.f32.mrf.mxu0
      %v3839 = vadd.f32 0.0, %v3838
      %v3840 = vpop.f32.mrf.mxu0
      %v3841 = vpop.f32.mrf.mxu0
      %v3842 = vadd.f32 0.0, %v3841
      %v3843 = vpop.f32.mrf.mxu0
      %3844 = vdwg.mxu0
      %v3845 = vadd.f32 %v3678, %v3831
      %v3846 = vadd.f32 %v3679, %v3834
      %v3847 = vadd.f32 %v3680, %v3839
      %v3848 = vadd.f32 %v3681, %v3842
      %v3849 = vshrl.u32 %v3682, 16
      %v3850 = vpack.i.b16 %v3849, %v3849
      %v3852 = vlaneseq
      %v3853 = vshrl.u32 %v3852, 7
      %v3854 = vsub.s32 0, %v3853
      %v3855 = vrot.slane %v3850, %v3854
      %v3856 = vmul.bf16 %v2354, %v3855
      %3857 = vmatprep.subr.bf16.mxu0 0
      %3858 = vmatpush1.bf16.xpose.msra.mxu0 0
      %3859 = vmatprep.subr.bf16.mxu0 0
      %3860 = vmatpush1.bf16.xpose.msra.mxu0 0
      %3861 = vmatprep.subr.bf16.mxu0 0
      %3862 = vmatpush1.bf16.xpose.msra.mxu0 0
      %3863 = vmatprep.subr.bf16.mxu0 0
      %3864 = vmatpush1.bf16.xpose.msra.mxu0 0
      %3865 = vmatprep.subr.bf16.mxu0 0
      %3866 = vmatpush1.bf16.xpose.msra.mxu0 0
      %3867 = vmatprep.subr.bf16.mxu0 0
      %3868 = vmatpush1.bf16.xpose.msra.mxu0 0
      %3869 = vmatprep.subr.bf16.mxu0 0
      %3870 = vmatpush1.bf16.xpose.msra.mxu0 0
      %3871 = vmatprep.subr.bf16.mxu0 0
      %3872 = vmatpush1.bf16.xpose.msra.mxu0 %v3856
      %3873 = vmatprep.subr.bf16.mxu0 0
      %3874 = vmatpush2.bf16.xpose.msra.mxu0 0
      %3875 = vmatprep.subr.bf16.mxu0 0
      %3876 = vmatpush2.bf16.xpose.msra.mxu0 0
      %3877 = vmatprep.subr.bf16.mxu0 0
      %3878 = vmatpush2.bf16.xpose.msra.mxu0 0
      %3879 = vmatprep.subr.bf16.mxu0 0
      %3880 = vmatpush2.bf16.xpose.msra.mxu0 0
      %3881 = vmatprep.subr.bf16.mxu0 0
      %3882 = vmatpush2.bf16.xpose.msra.mxu0 0
      %3883 = vmatprep.subr.bf16.mxu0 0
      %3884 = vmatpush2.bf16.xpose.msra.mxu0 0
      %3885 = vmatprep.subr.bf16.mxu0 0
      %3886 = vmatpush2.bf16.xpose.msra.mxu0 0
      %3887 = vmatprep.subr.bf16.mxu0 0
      %3888 = vmatpush2.bf16.xpose.msra.mxu0 0
      %3889 = vmatprep.mubr.bf16.mxu0 0
      %3890 = vmatmul.mubr.bf16.gmra.mxu0 %v2352
      %v3891 = vpop.f32.mrf.mxu0
      %v3892 = vadd.f32 0.0, %v3891
      %v3893 = vpop.f32.mrf.mxu0
      %v3894 = vpop.f32.mrf.mxu0
      %v3895 = vadd.f32 0.0, %v3894
      %v3896 = vpop.f32.mrf.mxu0
      %3897 = vmatprep.mubr.bf16.mxu0 0
      %3898 = vmatmul.mubr.bf16.gmra.mxu0 %v2353
      %v3899 = vpop.f32.mrf.mxu0
      %v3900 = vadd.f32 0.0, %v3899
      %v3901 = vpop.f32.mrf.mxu0
      %v3902 = vpop.f32.mrf.mxu0
      %v3903 = vadd.f32 0.0, %v3902
      %v3904 = vpop.f32.mrf.mxu0
      %3905 = vdwg.mxu0
      %v3906 = vsel %vm2414, %v3892, -inf
      %3907 = vmax.xlane.f32.xlu0 %v3906
      %v3908 = vpop.xlane.xlu0 %3907
      %v3909 = vsel %vm2414, %v3895, -inf
      %3910 = vmax.xlane.f32.xlu0 %v3909
      %v3911 = vpop.xlane.xlu0 %3910
      %v3912 = vsel %vm2414, %v3900, -inf
      %3913 = vmax.xlane.f32.xlu0 %v3912
      %v3914 = vpop.xlane.xlu0 %3913
      %v3915 = vsel %vm2414, %v3903, -inf
      %3916 = vmax.xlane.f32.xlu0 %v3915
      %v3917 = vpop.xlane.xlu0 %3916
      %v3918 = vsub.f32 %v3892, %v3908
      %v3919 = vsub.f32 %v3895, %v3911
      %v3920 = vsub.f32 %v3900, %v3914
      %v3921 = vsub.f32 %v3903, %v3917
      %v3922 = vmul.f32 %v3918, 1.442695
      %v3923 = vpow.pop %v3922
      %v3924 = vmul.f32 %v3919, 1.442695
      %v3925 = vpow.pop %v3924
      %v3926 = vmul.f32 %v3920, 1.442695
      %v3927 = vpow.pop %v3926
      %v3928 = vmul.f32 %v3921, 1.442695
      %v3929 = vpow.pop %v3928
      %v3930 = vsel %vm2414, %v3923, 0.0
      %3931 = vadd.xlane.f32.xlu0 %v3930
      %v3932 = vpop.xlane.xlu0 %3931
      %v3933 = vsel %vm2414, %v3925, 0.0
      %3934 = vadd.xlane.f32.xlu0 %v3933
      %v3935 = vpop.xlane.xlu0 %3934
      %v3936 = vsel %vm2414, %v3927, 0.0
      %3937 = vadd.xlane.f32.xlu0 %v3936
      %v3938 = vpop.xlane.xlu0 %3937
      %v3939 = vsel %vm2414, %v3929, 0.0
      %3940 = vadd.xlane.f32.xlu0 %v3939
      %v3941 = vpop.xlane.xlu0 %3940
      %v3942 = vrcp.pop %v3932
      %v3943 = vrcp.pop %v3935
      %v3944 = vrcp.pop %v3938
      %v3945 = vrcp.pop %v3941
      %v3946 = vmul.f32 %v3923, %v3942
      %v3947 = vmul.f32 %v3925, %v3943
      %v3948 = vmul.f32 %v3927, %v3944
      %v3949 = vmul.f32 %v3929, %v3945
      %v3950 = vpack.c.bf16 %v3947, %v3946
      %v3951 = vpack.c.bf16 %v3949, %v3948
      %v3952 = vmul.bf16 %v2355, %v3855
      %v3954 = vsel %vm2414, %v3950, 0
      %v3957 = vsel %vm2414, %v3951, 0
      %v3960 = vsel %vm2572, %v3952, 0
      %3962 = vmatprep.subr.bf16.mxu0 0
      %3963 = vmatpush1.bf16.msra.mxu0 0
      %3964 = vmatprep.subr.bf16.mxu0 0
      %3965 = vmatpush1.bf16.msra.mxu0 0
      %3966 = vmatprep.subr.bf16.mxu0 0
      %3967 = vmatpush1.bf16.msra.mxu0 0
      %3968 = vmatprep.subr.bf16.mxu0 0
      %3969 = vmatpush1.bf16.msra.mxu0 0
      %3970 = vmatprep.subr.bf16.mxu0 0
      %3971 = vmatpush1.bf16.msra.mxu0 0
      %3972 = vmatprep.subr.bf16.mxu0 0
      %3973 = vmatpush1.bf16.msra.mxu0 0
      %3974 = vmatprep.subr.bf16.mxu0 0
      %3975 = vmatpush1.bf16.msra.mxu0 0
      %3976 = vmatprep.subr.bf16.mxu0 0
      %3977 = vmatpush1.bf16.msra.mxu0 %v3960
      %3978 = vmatprep.subr.bf16.mxu0 0
      %3979 = vmatpush2.bf16.msra.mxu0 0
      %3980 = vmatprep.subr.bf16.mxu0 0
      %3981 = vmatpush2.bf16.msra.mxu0 0
      %3982 = vmatprep.subr.bf16.mxu0 0
      %3983 = vmatpush2.bf16.msra.mxu0 0
      %3984 = vmatprep.subr.bf16.mxu0 0
      %3985 = vmatpush2.bf16.msra.mxu0 0
      %3986 = vmatprep.subr.bf16.mxu0 0
      %3987 = vmatpush2.bf16.msra.mxu0 0
      %3988 = vmatprep.subr.bf16.mxu0 0
      %3989 = vmatpush2.bf16.msra.mxu0 0
      %3990 = vmatprep.subr.bf16.mxu0 0
      %3991 = vmatpush2.bf16.msra.mxu0 0
      %3992 = vmatprep.subr.bf16.mxu0 0
      %3993 = vmatpush2.bf16.msra.mxu0 0
      %3994 = vmatprep.mubr.bf16.mxu0 0
      %3995 = vmatmul.mubr.bf16.gmra.mxu0 %v3954
      %v3996 = vpop.f32.mrf.mxu0
      %v3997 = vadd.f32 0.0, %v3996
      %v3998 = vpop.f32.mrf.mxu0
      %v3999 = vpop.f32.mrf.mxu0
      %v4000 = vadd.f32 0.0, %v3999
      %v4001 = vpop.f32.mrf.mxu0
      %4002 = vmatprep.mubr.bf16.mxu0 0
      %4003 = vmatmul.mubr.bf16.gmra.mxu0 %v3957
      %v4004 = vpop.f32.mrf.mxu0
      %v4005 = vadd.f32 0.0, %v4004
      %v4006 = vpop.f32.mrf.mxu0
      %v4007 = vpop.f32.mrf.mxu0
      %v4008 = vadd.f32 0.0, %v4007
      %v4009 = vpop.f32.mrf.mxu0
      %4010 = vdwg.mxu0
      %v4011 = vadd.f32 %v3845, %v3997
      %v4012 = vadd.f32 %v3846, %v4000
      %v4013 = vadd.f32 %v3847, %v4005
      %v4014 = vadd.f32 %v3848, %v4008
      %v4015 = vld [vmem:[%s11 + $0x4] sm:$0x2]
      %v4017 = vpack.i.b16 %v4015, %v4015
      %v4019 = vlaneseq
      %v4020 = vshrl.u32 %v4019, 7
      %v4021 = vsub.s32 1, %v4020
      %v4022 = vrot.slane %v4017, %v4021
      %v4023 = vmul.bf16 %v2354, %v4022
      %4024 = vmatprep.subr.bf16.mxu0 0
      %4025 = vmatpush1.bf16.xpose.msra.mxu0 0
      %4026 = vmatprep.subr.bf16.mxu0 0
      %4027 = vmatpush1.bf16.xpose.msra.mxu0 0
      %4028 = vmatprep.subr.bf16.mxu0 0
      %4029 = vmatpush1.bf16.xpose.msra.mxu0 0
      %4030 = vmatprep.subr.bf16.mxu0 0
      %4031 = vmatpush1.bf16.xpose.msra.mxu0 0
      %4032 = vmatprep.subr.bf16.mxu0 0
      %4033 = vmatpush1.bf16.xpose.msra.mxu0 0
      %4034 = vmatprep.subr.bf16.mxu0 0
      %4035 = vmatpush1.bf16.xpose.msra.mxu0 0
      %4036 = vmatprep.subr.bf16.mxu0 0
      %4037 = vmatpush1.bf16.xpose.msra.mxu0 0
      %4038 = vmatprep.subr.bf16.mxu0 0
      %4039 = vmatpush1.bf16.xpose.msra.mxu0 %v4023
      %4040 = vmatprep.subr.bf16.mxu0 0
      %4041 = vmatpush2.bf16.xpose.msra.mxu0 0
      %4042 = vmatprep.subr.bf16.mxu0 0
      %4043 = vmatpush2.bf16.xpose.msra.mxu0 0
      %4044 = vmatprep.subr.bf16.mxu0 0
      %4045 = vmatpush2.bf16.xpose.msra.mxu0 0
      %4046 = vmatprep.subr.bf16.mxu0 0
      %4047 = vmatpush2.bf16.xpose.msra.mxu0 0
      %4048 = vmatprep.subr.bf16.mxu0 0
      %4049 = vmatpush2.bf16.xpose.msra.mxu0 0
      %4050 = vmatprep.subr.bf16.mxu0 0
      %4051 = vmatpush2.bf16.xpose.msra.mxu0 0
      %4052 = vmatprep.subr.bf16.mxu0 0
      %4053 = vmatpush2.bf16.xpose.msra.mxu0 0
      %4054 = vmatprep.subr.bf16.mxu0 0
      %4055 = vmatpush2.bf16.xpose.msra.mxu0 0
      %4056 = vmatprep.mubr.bf16.mxu0 0
      %4057 = vmatmul.mubr.bf16.gmra.mxu0 %v2352
      %v4058 = vpop.f32.mrf.mxu0
      %v4059 = vadd.f32 0.0, %v4058
      %v4060 = vpop.f32.mrf.mxu0
      %v4061 = vpop.f32.mrf.mxu0
      %v4062 = vadd.f32 0.0, %v4061
      %v4063 = vpop.f32.mrf.mxu0
      %4064 = vmatprep.mubr.bf16.mxu0 0
      %4065 = vmatmul.mubr.bf16.gmra.mxu0 %v2353
      %v4066 = vpop.f32.mrf.mxu0
      %v4067 = vadd.f32 0.0, %v4066
      %v4068 = vpop.f32.mrf.mxu0
      %v4069 = vpop.f32.mrf.mxu0
      %v4070 = vadd.f32 0.0, %v4069
      %v4071 = vpop.f32.mrf.mxu0
      %4072 = vdwg.mxu0
      %v4073 = vsel %vm2414, %v4059, -inf
      %4074 = vmax.xlane.f32.xlu0 %v4073
      %v4075 = vpop.xlane.xlu0 %4074
      %v4076 = vsel %vm2414, %v4062, -inf
      %4077 = vmax.xlane.f32.xlu0 %v4076
      %v4078 = vpop.xlane.xlu0 %4077
      %v4079 = vsel %vm2414, %v4067, -inf
      %4080 = vmax.xlane.f32.xlu0 %v4079
      %v4081 = vpop.xlane.xlu0 %4080
      %v4082 = vsel %vm2414, %v4070, -inf
      %4083 = vmax.xlane.f32.xlu0 %v4082
      %v4084 = vpop.xlane.xlu0 %4083
      %v4085 = vsub.f32 %v4059, %v4075
      %v4086 = vsub.f32 %v4062, %v4078
      %v4087 = vsub.f32 %v4067, %v4081
      %v4088 = vsub.f32 %v4070, %v4084
      %v4089 = vmul.f32 %v4085, 1.442695
      %v4090 = vpow.pop %v4089
      %v4091 = vmul.f32 %v4086, 1.442695
      %v4092 = vpow.pop %v4091
      %v4093 = vmul.f32 %v4087, 1.442695
      %v4094 = vpow.pop %v4093
      %v4095 = vmul.f32 %v4088, 1.442695
      %v4096 = vpow.pop %v4095
      %v4097 = vsel %vm2414, %v4090, 0.0
      %4098 = vadd.xlane.f32.xlu0 %v4097
      %v4099 = vpop.xlane.xlu0 %4098
      %v4100 = vsel %vm2414, %v4092, 0.0
      %4101 = vadd.xlane.f32.xlu0 %v4100
      %v4102 = vpop.xlane.xlu0 %4101
      %v4103 = vsel %vm2414, %v4094, 0.0
      %4104 = vadd.xlane.f32.xlu0 %v4103
      %v4105 = vpop.xlane.xlu0 %4104
      %v4106 = vsel %vm2414, %v4096, 0.0
      %4107 = vadd.xlane.f32.xlu0 %v4106
      %v4108 = vpop.xlane.xlu0 %4107
      %v4109 = vrcp.pop %v4099
      %v4110 = vrcp.pop %v4102
      %v4111 = vrcp.pop %v4105
      %v4112 = vrcp.pop %v4108
      %v4113 = vmul.f32 %v4090, %v4109
      %v4114 = vmul.f32 %v4092, %v4110
      %v4115 = vmul.f32 %v4094, %v4111
      %v4116 = vmul.f32 %v4096, %v4112
      %v4117 = vpack.c.bf16 %v4114, %v4113
      %v4118 = vpack.c.bf16 %v4116, %v4115
      %v4119 = vmul.bf16 %v2355, %v4022
      %v4121 = vsel %vm2414, %v4117, 0
      %v4124 = vsel %vm2414, %v4118, 0
      %v4127 = vsel %vm2572, %v4119, 0
      %4129 = vmatprep.subr.bf16.mxu0 0
      %4130 = vmatpush1.bf16.msra.mxu0 0
      %4131 = vmatprep.subr.bf16.mxu0 0
      %4132 = vmatpush1.bf16.msra.mxu0 0
      %4133 = vmatprep.subr.bf16.mxu0 0
      %4134 = vmatpush1.bf16.msra.mxu0 0
      %4135 = vmatprep.subr.bf16.mxu0 0
      %4136 = vmatpush1.bf16.msra.mxu0 0
      %4137 = vmatprep.subr.bf16.mxu0 0
      %4138 = vmatpush1.bf16.msra.mxu0 0
      %4139 = vmatprep.subr.bf16.mxu0 0
      %4140 = vmatpush1.bf16.msra.mxu0 0
      %4141 = vmatprep.subr.bf16.mxu0 0
      %4142 = vmatpush1.bf16.msra.mxu0 0
      %4143 = vmatprep.subr.bf16.mxu0 0
      %4144 = vmatpush1.bf16.msra.mxu0 %v4127
      %4145 = vmatprep.subr.bf16.mxu0 0
      %4146 = vmatpush2.bf16.msra.mxu0 0
      %4147 = vmatprep.subr.bf16.mxu0 0
      %4148 = vmatpush2.bf16.msra.mxu0 0
      %4149 = vmatprep.subr.bf16.mxu0 0
      %4150 = vmatpush2.bf16.msra.mxu0 0
      %4151 = vmatprep.subr.bf16.mxu0 0
      %4152 = vmatpush2.bf16.msra.mxu0 0
      %4153 = vmatprep.subr.bf16.mxu0 0
      %4154 = vmatpush2.bf16.msra.mxu0 0
      %4155 = vmatprep.subr.bf16.mxu0 0
      %4156 = vmatpush2.bf16.msra.mxu0 0
      %4157 = vmatprep.subr.bf16.mxu0 0
      %4158 = vmatpush2.bf16.msra.mxu0 0
      %4159 = vmatprep.subr.bf16.mxu0 0
      %4160 = vmatpush2.bf16.msra.mxu0 0
      %4161 = vmatprep.mubr.bf16.mxu0 0
      %4162 = vmatmul.mubr.bf16.gmra.mxu0 %v4121
      %v4163 = vpop.f32.mrf.mxu0
      %v4164 = vadd.f32 0.0, %v4163
      %v4165 = vpop.f32.mrf.mxu0
      %v4166 = vpop.f32.mrf.mxu0
      %v4167 = vadd.f32 0.0, %v4166
      %v4168 = vpop.f32.mrf.mxu0
      %4169 = vmatprep.mubr.bf16.mxu0 0
      %4170 = vmatmul.mubr.bf16.gmra.mxu0 %v4124
      %v4171 = vpop.f32.mrf.mxu0
      %v4172 = vadd.f32 0.0, %v4171
      %v4173 = vpop.f32.mrf.mxu0
      %v4174 = vpop.f32.mrf.mxu0
      %v4175 = vadd.f32 0.0, %v4174
      %v4176 = vpop.f32.mrf.mxu0
      %4177 = vdwg.mxu0
      %v4178 = vadd.f32 %v4011, %v4164
      %v4179 = vadd.f32 %v4012, %v4167
      %v4180 = vadd.f32 %v4013, %v4172
      %v4181 = vadd.f32 %v4014, %v4175
      %v4182 = vshrl.u32 %v4015, 16
      %v4183 = vpack.i.b16 %v4182, %v4182
      %v4185 = vlaneseq
      %v4186 = vshrl.u32 %v4185, 7
      %v4187 = vsub.s32 1, %v4186
      %v4188 = vrot.slane %v4183, %v4187
      %v4189 = vmul.bf16 %v2354, %v4188
      %4190 = vmatprep.subr.bf16.mxu0 0
      %4191 = vmatpush1.bf16.xpose.msra.mxu0 0
      %4192 = vmatprep.subr.bf16.mxu0 0
      %4193 = vmatpush1.bf16.xpose.msra.mxu0 0
      %4194 = vmatprep.subr.bf16.mxu0 0
      %4195 = vmatpush1.bf16.xpose.msra.mxu0 0
      %4196 = vmatprep.subr.bf16.mxu0 0
      %4197 = vmatpush1.bf16.xpose.msra.mxu0 0
      %4198 = vmatprep.subr.bf16.mxu0 0
      %4199 = vmatpush1.bf16.xpose.msra.mxu0 0
      %4200 = vmatprep.subr.bf16.mxu0 0
      %4201 = vmatpush1.bf16.xpose.msra.mxu0 0
      %4202 = vmatprep.subr.bf16.mxu0 0
      %4203 = vmatpush1.bf16.xpose.msra.mxu0 0
      %4204 = vmatprep.subr.bf16.mxu0 0
      %4205 = vmatpush1.bf16.xpose.msra.mxu0 %v4189
      %4206 = vmatprep.subr.bf16.mxu0 0
      %4207 = vmatpush2.bf16.xpose.msra.mxu0 0
      %4208 = vmatprep.subr.bf16.mxu0 0
      %4209 = vmatpush2.bf16.xpose.msra.mxu0 0
      %4210 = vmatprep.subr.bf16.mxu0 0
      %4211 = vmatpush2.bf16.xpose.msra.mxu0 0
      %4212 = vmatprep.subr.bf16.mxu0 0
      %4213 = vmatpush2.bf16.xpose.msra.mxu0 0
      %4214 = vmatprep.subr.bf16.mxu0 0
      %4215 = vmatpush2.bf16.xpose.msra.mxu0 0
      %4216 = vmatprep.subr.bf16.mxu0 0
      %4217 = vmatpush2.bf16.xpose.msra.mxu0 0
      %4218 = vmatprep.subr.bf16.mxu0 0
      %4219 = vmatpush2.bf16.xpose.msra.mxu0 0
      %4220 = vmatprep.subr.bf16.mxu0 0
      %4221 = vmatpush2.bf16.xpose.msra.mxu0 0
      %4222 = vmatprep.mubr.bf16.mxu0 0
      %4223 = vmatmul.mubr.bf16.gmra.mxu0 %v2352
      %v4224 = vpop.f32.mrf.mxu0
      %v4225 = vadd.f32 0.0, %v4224
      %v4226 = vpop.f32.mrf.mxu0
      %v4227 = vpop.f32.mrf.mxu0
      %v4228 = vadd.f32 0.0, %v4227
      %v4229 = vpop.f32.mrf.mxu0
      %4230 = vmatprep.mubr.bf16.mxu0 0
      %4231 = vmatmul.mubr.bf16.gmra.mxu0 %v2353
      %v4232 = vpop.f32.mrf.mxu0
      %v4233 = vadd.f32 0.0, %v4232
      %v4234 = vpop.f32.mrf.mxu0
      %v4235 = vpop.f32.mrf.mxu0
      %v4236 = vadd.f32 0.0, %v4235
      %v4237 = vpop.f32.mrf.mxu0
      %4238 = vdwg.mxu0
      %v4239 = vsel %vm2414, %v4225, -inf
      %4240 = vmax.xlane.f32.xlu0 %v4239
      %v4241 = vpop.xlane.xlu0 %4240
      %v4242 = vsel %vm2414, %v4228, -inf
      %4243 = vmax.xlane.f32.xlu0 %v4242
      %v4244 = vpop.xlane.xlu0 %4243
      %v4245 = vsel %vm2414, %v4233, -inf
      %4246 = vmax.xlane.f32.xlu0 %v4245
      %v4247 = vpop.xlane.xlu0 %4246
      %v4248 = vsel %vm2414, %v4236, -inf
      %4249 = vmax.xlane.f32.xlu0 %v4248
      %v4250 = vpop.xlane.xlu0 %4249
      %v4251 = vsub.f32 %v4225, %v4241
      %v4252 = vsub.f32 %v4228, %v4244
      %v4253 = vsub.f32 %v4233, %v4247
      %v4254 = vsub.f32 %v4236, %v4250
      %v4255 = vmul.f32 %v4251, 1.442695
      %v4256 = vpow.pop %v4255
      %v4257 = vmul.f32 %v4252, 1.442695
      %v4258 = vpow.pop %v4257
      %v4259 = vmul.f32 %v4253, 1.442695
      %v4260 = vpow.pop %v4259
      %v4261 = vmul.f32 %v4254, 1.442695
      %v4262 = vpow.pop %v4261
      %v4263 = vsel %vm2414, %v4256, 0.0
      %4264 = vadd.xlane.f32.xlu0 %v4263
      %v4265 = vpop.xlane.xlu0 %4264
      %v4266 = vsel %vm2414, %v4258, 0.0
      %4267 = vadd.xlane.f32.xlu0 %v4266
      %v4268 = vpop.xlane.xlu0 %4267
      %v4269 = vsel %vm2414, %v4260, 0.0
      %4270 = vadd.xlane.f32.xlu0 %v4269
      %v4271 = vpop.xlane.xlu0 %4270
      %v4272 = vsel %vm2414, %v4262, 0.0
      %4273 = vadd.xlane.f32.xlu0 %v4272
      %v4274 = vpop.xlane.xlu0 %4273
      %v4275 = vrcp.pop %v4265
      %v4276 = vrcp.pop %v4268
      %v4277 = vrcp.pop %v4271
      %v4278 = vrcp.pop %v4274
      %v4279 = vmul.f32 %v4256, %v4275
      %v4280 = vmul.f32 %v4258, %v4276
      %v4281 = vmul.f32 %v4260, %v4277
      %v4282 = vmul.f32 %v4262, %v4278
      %v4283 = vpack.c.bf16 %v4280, %v4279
      %v4284 = vpack.c.bf16 %v4282, %v4281
      %v4285 = vmul.bf16 %v2355, %v4188
      %v4287 = vsel %vm2414, %v4283, 0
      %v4290 = vsel %vm2414, %v4284, 0
      %v4293 = vsel %vm2572, %v4285, 0
      %4295 = vmatprep.subr.bf16.mxu0 0
      %4296 = vmatpush1.bf16.msra.mxu0 0
      %4297 = vmatprep.subr.bf16.mxu0 0
      %4298 = vmatpush1.bf16.msra.mxu0 0
      %4299 = vmatprep.subr.bf16.mxu0 0
      %4300 = vmatpush1.bf16.msra.mxu0 0
      %4301 = vmatprep.subr.bf16.mxu0 0
      %4302 = vmatpush1.bf16.msra.mxu0 0
      %4303 = vmatprep.subr.bf16.mxu0 0
      %4304 = vmatpush1.bf16.msra.mxu0 0
      %4305 = vmatprep.subr.bf16.mxu0 0
      %4306 = vmatpush1.bf16.msra.mxu0 0
      %4307 = vmatprep.subr.bf16.mxu0 0
      %4308 = vmatpush1.bf16.msra.mxu0 0
      %4309 = vmatprep.subr.bf16.mxu0 0
      %4310 = vmatpush1.bf16.msra.mxu0 %v4293
      %4311 = vmatprep.subr.bf16.mxu0 0
      %4312 = vmatpush2.bf16.msra.mxu0 0
      %4313 = vmatprep.subr.bf16.mxu0 0
      %4314 = vmatpush2.bf16.msra.mxu0 0
      %4315 = vmatprep.subr.bf16.mxu0 0
      %4316 = vmatpush2.bf16.msra.mxu0 0
      %4317 = vmatprep.subr.bf16.mxu0 0
      %4318 = vmatpush2.bf16.msra.mxu0 0
      %4319 = vmatprep.subr.bf16.mxu0 0
      %4320 = vmatpush2.bf16.msra.mxu0 0
      %4321 = vmatprep.subr.bf16.mxu0 0
      %4322 = vmatpush2.bf16.msra.mxu0 0
      %4323 = vmatprep.subr.bf16.mxu0 0
      %4324 = vmatpush2.bf16.msra.mxu0 0
      %4325 = vmatprep.subr.bf16.mxu0 0
      %4326 = vmatpush2.bf16.msra.mxu0 0
      %4327 = vmatprep.mubr.bf16.mxu0 0
      %4328 = vmatmul.mubr.bf16.gmra.mxu0 %v4287
      %v4329 = vpop.f32.mrf.mxu0
      %v4330 = vadd.f32 0.0, %v4329
      %v4331 = vpop.f32.mrf.mxu0
      %v4332 = vpop.f32.mrf.mxu0
      %v4333 = vadd.f32 0.0, %v4332
      %v4334 = vpop.f32.mrf.mxu0
      %4335 = vmatprep.mubr.bf16.mxu0 0
      %4336 = vmatmul.mubr.bf16.gmra.mxu0 %v4290
      %v4337 = vpop.f32.mrf.mxu0
      %v4338 = vadd.f32 0.0, %v4337
      %v4339 = vpop.f32.mrf.mxu0
      %v4340 = vpop.f32.mrf.mxu0
      %v4341 = vadd.f32 0.0, %v4340
      %v4342 = vpop.f32.mrf.mxu0
      %4343 = vdwg.mxu0
      %v4344 = vadd.f32 %v4178, %v4330
      %v4345 = vadd.f32 %v4179, %v4333
      %v4346 = vadd.f32 %v4180, %v4338
      %v4347 = vadd.f32 %v4181, %v4341
      %v4348 = vld [vmem:[%s11 + $0x4] sm:$0x4]
      %v4350 = vpack.i.b16 %v4348, %v4348
      %v4352 = vlaneseq
      %v4353 = vshrl.u32 %v4352, 7
      %v4354 = vsub.s32 2, %v4353
      %v4355 = vrot.slane %v4350, %v4354
      %v4356 = vmul.bf16 %v2354, %v4355
      %4357 = vmatprep.subr.bf16.mxu0 0
      %4358 = vmatpush1.bf16.xpose.msra.mxu0 0
      %4359 = vmatprep.subr.bf16.mxu0 0
      %4360 = vmatpush1.bf16.xpose.msra.mxu0 0
      %4361 = vmatprep.subr.bf16.mxu0 0
      %4362 = vmatpush1.bf16.xpose.msra.mxu0 0
      %4363 = vmatprep.subr.bf16.mxu0 0
      %4364 = vmatpush1.bf16.xpose.msra.mxu0 0
      %4365 = vmatprep.subr.bf16.mxu0 0
      %4366 = vmatpush1.bf16.xpose.msra.mxu0 0
      %4367 = vmatprep.subr.bf16.mxu0 0
      %4368 = vmatpush1.bf16.xpose.msra.mxu0 0
      %4369 = vmatprep.subr.bf16.mxu0 0
      %4370 = vmatpush1.bf16.xpose.msra.mxu0 0
      %4371 = vmatprep.subr.bf16.mxu0 0
      %4372 = vmatpush1.bf16.xpose.msra.mxu0 %v4356
      %4373 = vmatprep.subr.bf16.mxu0 0
      %4374 = vmatpush2.bf16.xpose.msra.mxu0 0
      %4375 = vmatprep.subr.bf16.mxu0 0
      %4376 = vmatpush2.bf16.xpose.msra.mxu0 0
      %4377 = vmatprep.subr.bf16.mxu0 0
      %4378 = vmatpush2.bf16.xpose.msra.mxu0 0
      %4379 = vmatprep.subr.bf16.mxu0 0
      %4380 = vmatpush2.bf16.xpose.msra.mxu0 0
      %4381 = vmatprep.subr.bf16.mxu0 0
      %4382 = vmatpush2.bf16.xpose.msra.mxu0 0
      %4383 = vmatprep.subr.bf16.mxu0 0
      %4384 = vmatpush2.bf16.xpose.msra.mxu0 0
      %4385 = vmatprep.subr.bf16.mxu0 0
      %4386 = vmatpush2.bf16.xpose.msra.mxu0 0
      %4387 = vmatprep.subr.bf16.mxu0 0
      %4388 = vmatpush2.bf16.xpose.msra.mxu0 0
      %4389 = vmatprep.mubr.bf16.mxu0 0
      %4390 = vmatmul.mubr.bf16.gmra.mxu0 %v2352
      %v4391 = vpop.f32.mrf.mxu0
      %v4392 = vadd.f32 0.0, %v4391
      %v4393 = vpop.f32.mrf.mxu0
      %v4394 = vpop.f32.mrf.mxu0
      %v4395 = vadd.f32 0.0, %v4394
      %v4396 = vpop.f32.mrf.mxu0
      %4397 = vmatprep.mubr.bf16.mxu0 0
      %4398 = vmatmul.mubr.bf16.gmra.mxu0 %v2353
      %v4399 = vpop.f32.mrf.mxu0
      %v4400 = vadd.f32 0.0, %v4399
      %v4401 = vpop.f32.mrf.mxu0
      %v4402 = vpop.f32.mrf.mxu0
      %v4403 = vadd.f32 0.0, %v4402
      %v4404 = vpop.f32.mrf.mxu0
      %4405 = vdwg.mxu0
      %v4406 = vsel %vm2414, %v4392, -inf
      %4407 = vmax.xlane.f32.xlu0 %v4406
      %v4408 = vpop.xlane.xlu0 %4407
      %v4409 = vsel %vm2414, %v4395, -inf
      %4410 = vmax.xlane.f32.xlu0 %v4409
      %v4411 = vpop.xlane.xlu0 %4410
      %v4412 = vsel %vm2414, %v4400, -inf
      %4413 = vmax.xlane.f32.xlu0 %v4412
      %v4414 = vpop.xlane.xlu0 %4413
      %v4415 = vsel %vm2414, %v4403, -inf
      %4416 = vmax.xlane.f32.xlu0 %v4415
      %v4417 = vpop.xlane.xlu0 %4416
      %v4418 = vsub.f32 %v4392, %v4408
      %v4419 = vsub.f32 %v4395, %v4411
      %v4420 = vsub.f32 %v4400, %v4414
      %v4421 = vsub.f32 %v4403, %v4417
      %v4422 = vmul.f32 %v4418, 1.442695
      %v4423 = vpow.pop %v4422
      %v4424 = vmul.f32 %v4419, 1.442695
      %v4425 = vpow.pop %v4424
      %v4426 = vmul.f32 %v4420, 1.442695
      %v4427 = vpow.pop %v4426
      %v4428 = vmul.f32 %v4421, 1.442695
      %v4429 = vpow.pop %v4428
      %v4430 = vsel %vm2414, %v4423, 0.0
      %4431 = vadd.xlane.f32.xlu0 %v4430
      %v4432 = vpop.xlane.xlu0 %4431
      %v4433 = vsel %vm2414, %v4425, 0.0
      %4434 = vadd.xlane.f32.xlu0 %v4433
      %v4435 = vpop.xlane.xlu0 %4434
      %v4436 = vsel %vm2414, %v4427, 0.0
      %4437 = vadd.xlane.f32.xlu0 %v4436
      %v4438 = vpop.xlane.xlu0 %4437
      %v4439 = vsel %vm2414, %v4429, 0.0
      %4440 = vadd.xlane.f32.xlu0 %v4439
      %v4441 = vpop.xlane.xlu0 %4440
      %v4442 = vrcp.pop %v4432
      %v4443 = vrcp.pop %v4435
      %v4444 = vrcp.pop %v4438
      %v4445 = vrcp.pop %v4441
      %v4446 = vmul.f32 %v4423, %v4442
      %v4447 = vmul.f32 %v4425, %v4443
      %v4448 = vmul.f32 %v4427, %v4444
      %v4449 = vmul.f32 %v4429, %v4445
      %v4450 = vpack.c.bf16 %v4447, %v4446
      %v4451 = vpack.c.bf16 %v4449, %v4448
      %v4452 = vmul.bf16 %v2355, %v4355
      %v4454 = vsel %vm2414, %v4450, 0
      %v4457 = vsel %vm2414, %v4451, 0
      %v4460 = vsel %vm2572, %v4452, 0
      %4462 = vmatprep.subr.bf16.mxu0 0
      %4463 = vmatpush1.bf16.msra.mxu0 0
      %4464 = vmatprep.subr.bf16.mxu0 0
      %4465 = vmatpush1.bf16.msra.mxu0 0
      %4466 = vmatprep.subr.bf16.mxu0 0
      %4467 = vmatpush1.bf16.msra.mxu0 0
      %4468 = vmatprep.subr.bf16.mxu0 0
      %4469 = vmatpush1.bf16.msra.mxu0 0
      %4470 = vmatprep.subr.bf16.mxu0 0
      %4471 = vmatpush1.bf16.msra.mxu0 0
      %4472 = vmatprep.subr.bf16.mxu0 0
      %4473 = vmatpush1.bf16.msra.mxu0 0
      %4474 = vmatprep.subr.bf16.mxu0 0
      %4475 = vmatpush1.bf16.msra.mxu0 0
      %4476 = vmatprep.subr.bf16.mxu0 0
      %4477 = vmatpush1.bf16.msra.mxu0 %v4460
      %4478 = vmatprep.subr.bf16.mxu0 0
      %4479 = vmatpush2.bf16.msra.mxu0 0
      %4480 = vmatprep.subr.bf16.mxu0 0
      %4481 = vmatpush2.bf16.msra.mxu0 0
      %4482 = vmatprep.subr.bf16.mxu0 0
      %4483 = vmatpush2.bf16.msra.mxu0 0
      %4484 = vmatprep.subr.bf16.mxu0 0
      %4485 = vmatpush2.bf16.msra.mxu0 0
      %4486 = vmatprep.subr.bf16.mxu0 0
      %4487 = vmatpush2.bf16.msra.mxu0 0
      %4488 = vmatprep.subr.bf16.mxu0 0
      %4489 = vmatpush2.bf16.msra.mxu0 0
      %4490 = vmatprep.subr.bf16.mxu0 0
      %4491 = vmatpush2.bf16.msra.mxu0 0
      %4492 = vmatprep.subr.bf16.mxu0 0
      %4493 = vmatpush2.bf16.msra.mxu0 0
      %4494 = vmatprep.mubr.bf16.mxu0 0
      %4495 = vmatmul.mubr.bf16.gmra.mxu0 %v4454
      %v4496 = vpop.f32.mrf.mxu0
      %v4497 = vadd.f32 0.0, %v4496
      %v4498 = vpop.f32.mrf.mxu0
      %v4499 = vpop.f32.mrf.mxu0
      %v4500 = vadd.f32 0.0, %v4499
      %v4501 = vpop.f32.mrf.mxu0
      %4502 = vmatprep.mubr.bf16.mxu0 0
      %4503 = vmatmul.mubr.bf16.gmra.mxu0 %v4457
      %v4504 = vpop.f32.mrf.mxu0
      %v4505 = vadd.f32 0.0, %v4504
      %v4506 = vpop.f32.mrf.mxu0
      %v4507 = vpop.f32.mrf.mxu0
      %v4508 = vadd.f32 0.0, %v4507
      %v4509 = vpop.f32.mrf.mxu0
      %4510 = vdwg.mxu0
      %v4511 = vadd.f32 %v4344, %v4497
      %v4512 = vadd.f32 %v4345, %v4500
      %v4513 = vadd.f32 %v4346, %v4505
      %v4514 = vadd.f32 %v4347, %v4508
      %v4515 = vshrl.u32 %v4348, 16
      %v4516 = vpack.i.b16 %v4515, %v4515
      %v4518 = vlaneseq
      %v4519 = vshrl.u32 %v4518, 7
      %v4520 = vsub.s32 2, %v4519
      %v4521 = vrot.slane %v4516, %v4520
      %v4522 = vmul.bf16 %v2354, %v4521
      %4523 = vmatprep.subr.bf16.mxu0 0
      %4524 = vmatpush1.bf16.xpose.msra.mxu0 0
      %4525 = vmatprep.subr.bf16.mxu0 0
      %4526 = vmatpush1.bf16.xpose.msra.mxu0 0
      %4527 = vmatprep.subr.bf16.mxu0 0
      %4528 = vmatpush1.bf16.xpose.msra.mxu0 0
      %4529 = vmatprep.subr.bf16.mxu0 0
      %4530 = vmatpush1.bf16.xpose.msra.mxu0 0
      %4531 = vmatprep.subr.bf16.mxu0 0
      %4532 = vmatpush1.bf16.xpose.msra.mxu0 0
      %4533 = vmatprep.subr.bf16.mxu0 0
      %4534 = vmatpush1.bf16.xpose.msra.mxu0 0
      %4535 = vmatprep.subr.bf16.mxu0 0
      %4536 = vmatpush1.bf16.xpose.msra.mxu0 0
      %4537 = vmatprep.subr.bf16.mxu0 0
      %4538 = vmatpush1.bf16.xpose.msra.mxu0 %v4522
      %4539 = vmatprep.subr.bf16.mxu0 0
      %4540 = vmatpush2.bf16.xpose.msra.mxu0 0
      %4541 = vmatprep.subr.bf16.mxu0 0
      %4542 = vmatpush2.bf16.xpose.msra.mxu0 0
      %4543 = vmatprep.subr.bf16.mxu0 0
      %4544 = vmatpush2.bf16.xpose.msra.mxu0 0
      %4545 = vmatprep.subr.bf16.mxu0 0
      %4546 = vmatpush2.bf16.xpose.msra.mxu0 0
      %4547 = vmatprep.subr.bf16.mxu0 0
      %4548 = vmatpush2.bf16.xpose.msra.mxu0 0
      %4549 = vmatprep.subr.bf16.mxu0 0
      %4550 = vmatpush2.bf16.xpose.msra.mxu0 0
      %4551 = vmatprep.subr.bf16.mxu0 0
      %4552 = vmatpush2.bf16.xpose.msra.mxu0 0
      %4553 = vmatprep.subr.bf16.mxu0 0
      %4554 = vmatpush2.bf16.xpose.msra.mxu0 0
      %4555 = vmatprep.mubr.bf16.mxu0 0
      %4556 = vmatmul.mubr.bf16.gmra.mxu0 %v2352
      %v4557 = vpop.f32.mrf.mxu0
      %v4558 = vadd.f32 0.0, %v4557
      %v4559 = vpop.f32.mrf.mxu0
      %v4560 = vpop.f32.mrf.mxu0
      %v4561 = vadd.f32 0.0, %v4560
      %v4562 = vpop.f32.mrf.mxu0
      %4563 = vmatprep.mubr.bf16.mxu0 0
      %4564 = vmatmul.mubr.bf16.gmra.mxu0 %v2353
      %v4565 = vpop.f32.mrf.mxu0
      %v4566 = vadd.f32 0.0, %v4565
      %v4567 = vpop.f32.mrf.mxu0
      %v4568 = vpop.f32.mrf.mxu0
      %v4569 = vadd.f32 0.0, %v4568
      %v4570 = vpop.f32.mrf.mxu0
      %4571 = vdwg.mxu0
      %v4572 = vsel %vm2414, %v4558, -inf
      %4573 = vmax.xlane.f32.xlu0 %v4572
      %v4574 = vpop.xlane.xlu0 %4573
      %v4575 = vsel %vm2414, %v4561, -inf
      %4576 = vmax.xlane.f32.xlu0 %v4575
      %v4577 = vpop.xlane.xlu0 %4576
      %v4578 = vsel %vm2414, %v4566, -inf
      %4579 = vmax.xlane.f32.xlu0 %v4578
      %v4580 = vpop.xlane.xlu0 %4579
      %v4581 = vsel %vm2414, %v4569, -inf
      %4582 = vmax.xlane.f32.xlu0 %v4581
      %v4583 = vpop.xlane.xlu0 %4582
      %v4584 = vsub.f32 %v4558, %v4574
      %v4585 = vsub.f32 %v4561, %v4577
      %v4586 = vsub.f32 %v4566, %v4580
      %v4587 = vsub.f32 %v4569, %v4583
      %v4588 = vmul.f32 %v4584, 1.442695
      %v4589 = vpow.pop %v4588
      %v4590 = vmul.f32 %v4585, 1.442695
      %v4591 = vpow.pop %v4590
      %v4592 = vmul.f32 %v4586, 1.442695
      %v4593 = vpow.pop %v4592
      %v4594 = vmul.f32 %v4587, 1.442695
      %v4595 = vpow.pop %v4594
      %v4596 = vsel %vm2414, %v4589, 0.0
      %4597 = vadd.xlane.f32.xlu0 %v4596
      %v4598 = vpop.xlane.xlu0 %4597
      %v4599 = vsel %vm2414, %v4591, 0.0
      %4600 = vadd.xlane.f32.xlu0 %v4599
      %v4601 = vpop.xlane.xlu0 %4600
      %v4602 = vsel %vm2414, %v4593, 0.0
      %4603 = vadd.xlane.f32.xlu0 %v4602
      %v4604 = vpop.xlane.xlu0 %4603
      %v4605 = vsel %vm2414, %v4595, 0.0
      %4606 = vadd.xlane.f32.xlu0 %v4605
      %v4607 = vpop.xlane.xlu0 %4606
      %v4608 = vrcp.pop %v4598
      %v4609 = vrcp.pop %v4601
      %v4610 = vrcp.pop %v4604
      %v4611 = vrcp.pop %v4607
      %v4612 = vmul.f32 %v4589, %v4608
      %v4613 = vmul.f32 %v4591, %v4609
      %v4614 = vmul.f32 %v4593, %v4610
      %v4615 = vmul.f32 %v4595, %v4611
      %v4616 = vpack.c.bf16 %v4613, %v4612
      %v4617 = vpack.c.bf16 %v4615, %v4614
      %v4618 = vmul.bf16 %v2355, %v4521
      %v4620 = vsel %vm2414, %v4616, 0
      %v4623 = vsel %vm2414, %v4617, 0
      %v4626 = vsel %vm2572, %v4618, 0
      %4628 = vmatprep.subr.bf16.mxu0 0
      %4629 = vmatpush1.bf16.msra.mxu0 0
      %4630 = vmatprep.subr.bf16.mxu0 0
      %4631 = vmatpush1.bf16.msra.mxu0 0
      %4632 = vmatprep.subr.bf16.mxu0 0
      %4633 = vmatpush1.bf16.msra.mxu0 0
      %4634 = vmatprep.subr.bf16.mxu0 0
      %4635 = vmatpush1.bf16.msra.mxu0 0
      %4636 = vmatprep.subr.bf16.mxu0 0
      %4637 = vmatpush1.bf16.msra.mxu0 0
      %4638 = vmatprep.subr.bf16.mxu0 0
      %4639 = vmatpush1.bf16.msra.mxu0 0
      %4640 = vmatprep.subr.bf16.mxu0 0
      %4641 = vmatpush1.bf16.msra.mxu0 0
      %4642 = vmatprep.subr.bf16.mxu0 0
      %4643 = vmatpush1.bf16.msra.mxu0 %v4626
      %4644 = vmatprep.subr.bf16.mxu0 0
      %4645 = vmatpush2.bf16.msra.mxu0 0
      %4646 = vmatprep.subr.bf16.mxu0 0
      %4647 = vmatpush2.bf16.msra.mxu0 0
      %4648 = vmatprep.subr.bf16.mxu0 0
      %4649 = vmatpush2.bf16.msra.mxu0 0
      %4650 = vmatprep.subr.bf16.mxu0 0
      %4651 = vmatpush2.bf16.msra.mxu0 0
      %4652 = vmatprep.subr.bf16.mxu0 0
      %4653 = vmatpush2.bf16.msra.mxu0 0
      %4654 = vmatprep.subr.bf16.mxu0 0
      %4655 = vmatpush2.bf16.msra.mxu0 0
      %4656 = vmatprep.subr.bf16.mxu0 0
      %4657 = vmatpush2.bf16.msra.mxu0 0
      %4658 = vmatprep.subr.bf16.mxu0 0
      %4659 = vmatpush2.bf16.msra.mxu0 0
      %4660 = vmatprep.mubr.bf16.mxu0 0
      %4661 = vmatmul.mubr.bf16.gmra.mxu0 %v4620
      %v4662 = vpop.f32.mrf.mxu0
      %v4663 = vadd.f32 0.0, %v4662
      %v4664 = vpop.f32.mrf.mxu0
      %v4665 = vpop.f32.mrf.mxu0
      %v4666 = vadd.f32 0.0, %v4665
      %v4667 = vpop.f32.mrf.mxu0
      %4668 = vmatprep.mubr.bf16.mxu0 0
      %4669 = vmatmul.mubr.bf16.gmra.mxu0 %v4623
      %v4670 = vpop.f32.mrf.mxu0
      %v4671 = vadd.f32 0.0, %v4670
      %v4672 = vpop.f32.mrf.mxu0
      %v4673 = vpop.f32.mrf.mxu0
      %v4674 = vadd.f32 0.0, %v4673
      %v4675 = vpop.f32.mrf.mxu0
      %4676 = vdwg.mxu0
      %v4677 = vadd.f32 %v4511, %v4663
      %v4678 = vadd.f32 %v4512, %v4666
      %v4679 = vadd.f32 %v4513, %v4671
      %v4680 = vadd.f32 %v4514, %v4674
      %v4681 = vld [vmem:[%s11 + $0x4] sm:$0x8]
      %v4683 = vpack.i.b16 %v4681, %v4681
      %v4685 = vlaneseq
      %v4686 = vshrl.u32 %v4685, 7
      %v4687 = vsub.s32 3, %v4686
      %v4688 = vrot.slane %v4683, %v4687
      %v4689 = vmul.bf16 %v2354, %v4688
      %4690 = vmatprep.subr.bf16.mxu0 0
      %4691 = vmatpush1.bf16.xpose.msra.mxu0 0
      %4692 = vmatprep.subr.bf16.mxu0 0
      %4693 = vmatpush1.bf16.xpose.msra.mxu0 0
      %4694 = vmatprep.subr.bf16.mxu0 0
      %4695 = vmatpush1.bf16.xpose.msra.mxu0 0
      %4696 = vmatprep.subr.bf16.mxu0 0
      %4697 = vmatpush1.bf16.xpose.msra.mxu0 0
      %4698 = vmatprep.subr.bf16.mxu0 0
      %4699 = vmatpush1.bf16.xpose.msra.mxu0 0
      %4700 = vmatprep.subr.bf16.mxu0 0
      %4701 = vmatpush1.bf16.xpose.msra.mxu0 0
      %4702 = vmatprep.subr.bf16.mxu0 0
      %4703 = vmatpush1.bf16.xpose.msra.mxu0 0
      %4704 = vmatprep.subr.bf16.mxu0 0
      %4705 = vmatpush1.bf16.xpose.msra.mxu0 %v4689
      %4706 = vmatprep.subr.bf16.mxu0 0
      %4707 = vmatpush2.bf16.xpose.msra.mxu0 0
      %4708 = vmatprep.subr.bf16.mxu0 0
      %4709 = vmatpush2.bf16.xpose.msra.mxu0 0
      %4710 = vmatprep.subr.bf16.mxu0 0
      %4711 = vmatpush2.bf16.xpose.msra.mxu0 0
      %4712 = vmatprep.subr.bf16.mxu0 0
      %4713 = vmatpush2.bf16.xpose.msra.mxu0 0
      %4714 = vmatprep.subr.bf16.mxu0 0
      %4715 = vmatpush2.bf16.xpose.msra.mxu0 0
      %4716 = vmatprep.subr.bf16.mxu0 0
      %4717 = vmatpush2.bf16.xpose.msra.mxu0 0
      %4718 = vmatprep.subr.bf16.mxu0 0
      %4719 = vmatpush2.bf16.xpose.msra.mxu0 0
      %4720 = vmatprep.subr.bf16.mxu0 0
      %4721 = vmatpush2.bf16.xpose.msra.mxu0 0
      %4722 = vmatprep.mubr.bf16.mxu0 0
      %4723 = vmatmul.mubr.bf16.gmra.mxu0 %v2352
      %v4724 = vpop.f32.mrf.mxu0
      %v4725 = vadd.f32 0.0, %v4724
      %v4726 = vpop.f32.mrf.mxu0
      %v4727 = vpop.f32.mrf.mxu0
      %v4728 = vadd.f32 0.0, %v4727
      %v4729 = vpop.f32.mrf.mxu0
      %4730 = vmatprep.mubr.bf16.mxu0 0
      %4731 = vmatmul.mubr.bf16.gmra.mxu0 %v2353
      %v4732 = vpop.f32.mrf.mxu0
      %v4733 = vadd.f32 0.0, %v4732
      %v4734 = vpop.f32.mrf.mxu0
      %v4735 = vpop.f32.mrf.mxu0
      %v4736 = vadd.f32 0.0, %v4735
      %v4737 = vpop.f32.mrf.mxu0
      %4738 = vdwg.mxu0
      %v4739 = vsel %vm2414, %v4725, -inf
      %4740 = vmax.xlane.f32.xlu0 %v4739
      %v4741 = vpop.xlane.xlu0 %4740
      %v4742 = vsel %vm2414, %v4728, -inf
      %4743 = vmax.xlane.f32.xlu0 %v4742
      %v4744 = vpop.xlane.xlu0 %4743
      %v4745 = vsel %vm2414, %v4733, -inf
      %4746 = vmax.xlane.f32.xlu0 %v4745
      %v4747 = vpop.xlane.xlu0 %4746
      %v4748 = vsel %vm2414, %v4736, -inf
      %4749 = vmax.xlane.f32.xlu0 %v4748
      %v4750 = vpop.xlane.xlu0 %4749
      %v4751 = vsub.f32 %v4725, %v4741
      %v4752 = vsub.f32 %v4728, %v4744
      %v4753 = vsub.f32 %v4733, %v4747
      %v4754 = vsub.f32 %v4736, %v4750
      %v4755 = vmul.f32 %v4751, 1.442695
      %v4756 = vpow.pop %v4755
      %v4757 = vmul.f32 %v4752, 1.442695
      %v4758 = vpow.pop %v4757
      %v4759 = vmul.f32 %v4753, 1.442695
      %v4760 = vpow.pop %v4759
      %v4761 = vmul.f32 %v4754, 1.442695
      %v4762 = vpow.pop %v4761
      %v4763 = vsel %vm2414, %v4756, 0.0
      %4764 = vadd.xlane.f32.xlu0 %v4763
      %v4765 = vpop.xlane.xlu0 %4764
      %v4766 = vsel %vm2414, %v4758, 0.0
      %4767 = vadd.xlane.f32.xlu0 %v4766
      %v4768 = vpop.xlane.xlu0 %4767
      %v4769 = vsel %vm2414, %v4760, 0.0
      %4770 = vadd.xlane.f32.xlu0 %v4769
      %v4771 = vpop.xlane.xlu0 %4770
      %v4772 = vsel %vm2414, %v4762, 0.0
      %4773 = vadd.xlane.f32.xlu0 %v4772
      %v4774 = vpop.xlane.xlu0 %4773
      %v4775 = vrcp.pop %v4765
      %v4776 = vrcp.pop %v4768
      %v4777 = vrcp.pop %v4771
      %v4778 = vrcp.pop %v4774
      %v4779 = vmul.f32 %v4756, %v4775
      %v4780 = vmul.f32 %v4758, %v4776
      %v4781 = vmul.f32 %v4760, %v4777
      %v4782 = vmul.f32 %v4762, %v4778
      %v4783 = vpack.c.bf16 %v4780, %v4779
      %v4784 = vpack.c.bf16 %v4782, %v4781
      %v4785 = vmul.bf16 %v2355, %v4688
      %v4787 = vsel %vm2414, %v4783, 0
      %v4790 = vsel %vm2414, %v4784, 0
      %v4793 = vsel %vm2572, %v4785, 0
      %4795 = vmatprep.subr.bf16.mxu0 0
      %4796 = vmatpush1.bf16.msra.mxu0 0
      %4797 = vmatprep.subr.bf16.mxu0 0
      %4798 = vmatpush1.bf16.msra.mxu0 0
      %4799 = vmatprep.subr.bf16.mxu0 0
      %4800 = vmatpush1.bf16.msra.mxu0 0
      %4801 = vmatprep.subr.bf16.mxu0 0
      %4802 = vmatpush1.bf16.msra.mxu0 0
      %4803 = vmatprep.subr.bf16.mxu0 0
      %4804 = vmatpush1.bf16.msra.mxu0 0
      %4805 = vmatprep.subr.bf16.mxu0 0
      %4806 = vmatpush1.bf16.msra.mxu0 0
      %4807 = vmatprep.subr.bf16.mxu0 0
      %4808 = vmatpush1.bf16.msra.mxu0 0
      %4809 = vmatprep.subr.bf16.mxu0 0
      %4810 = vmatpush1.bf16.msra.mxu0 %v4793
      %4811 = vmatprep.subr.bf16.mxu0 0
      %4812 = vmatpush2.bf16.msra.mxu0 0
      %4813 = vmatprep.subr.bf16.mxu0 0
      %4814 = vmatpush2.bf16.msra.mxu0 0
      %4815 = vmatprep.subr.bf16.mxu0 0
      %4816 = vmatpush2.bf16.msra.mxu0 0
      %4817 = vmatprep.subr.bf16.mxu0 0
      %4818 = vmatpush2.bf16.msra.mxu0 0
      %4819 = vmatprep.subr.bf16.mxu0 0
      %4820 = vmatpush2.bf16.msra.mxu0 0
      %4821 = vmatprep.subr.bf16.mxu0 0
      %4822 = vmatpush2.bf16.msra.mxu0 0
      %4823 = vmatprep.subr.bf16.mxu0 0
      %4824 = vmatpush2.bf16.msra.mxu0 0
      %4825 = vmatprep.subr.bf16.mxu0 0
      %4826 = vmatpush2.bf16.msra.mxu0 0
      %4827 = vmatprep.mubr.bf16.mxu0 0
      %4828 = vmatmul.mubr.bf16.gmra.mxu0 %v4787
      %v4829 = vpop.f32.mrf.mxu0
      %v4830 = vadd.f32 0.0, %v4829
      %v4831 = vpop.f32.mrf.mxu0
      %v4832 = vpop.f32.mrf.mxu0
      %v4833 = vadd.f32 0.0, %v4832
      %v4834 = vpop.f32.mrf.mxu0
      %4835 = vmatprep.mubr.bf16.mxu0 0
      %4836 = vmatmul.mubr.bf16.gmra.mxu0 %v4790
      %v4837 = vpop.f32.mrf.mxu0
      %v4838 = vadd.f32 0.0, %v4837
      %v4839 = vpop.f32.mrf.mxu0
      %v4840 = vpop.f32.mrf.mxu0
      %v4841 = vadd.f32 0.0, %v4840
      %v4842 = vpop.f32.mrf.mxu0
      %4843 = vdwg.mxu0
      %v4844 = vadd.f32 %v4677, %v4830
      %v4845 = vadd.f32 %v4678, %v4833
      %v4846 = vadd.f32 %v4679, %v4838
      %v4847 = vadd.f32 %v4680, %v4841
      %v4848 = vshrl.u32 %v4681, 16
      %v4849 = vpack.i.b16 %v4848, %v4848
      %v4851 = vlaneseq
      %v4852 = vshrl.u32 %v4851, 7
      %v4853 = vsub.s32 3, %v4852
      %v4854 = vrot.slane %v4849, %v4853
      %v4855 = vmul.bf16 %v2354, %v4854
      %4856 = vmatprep.subr.bf16.mxu0 0
      %4857 = vmatpush1.bf16.xpose.msra.mxu0 0
      %4858 = vmatprep.subr.bf16.mxu0 0
      %4859 = vmatpush1.bf16.xpose.msra.mxu0 0
      %4860 = vmatprep.subr.bf16.mxu0 0
      %4861 = vmatpush1.bf16.xpose.msra.mxu0 0
      %4862 = vmatprep.subr.bf16.mxu0 0
      %4863 = vmatpush1.bf16.xpose.msra.mxu0 0
      %4864 = vmatprep.subr.bf16.mxu0 0
      %4865 = vmatpush1.bf16.xpose.msra.mxu0 0
      %4866 = vmatprep.subr.bf16.mxu0 0
      %4867 = vmatpush1.bf16.xpose.msra.mxu0 0
      %4868 = vmatprep.subr.bf16.mxu0 0
      %4869 = vmatpush1.bf16.xpose.msra.mxu0 0
      %4870 = vmatprep.subr.bf16.mxu0 0
      %4871 = vmatpush1.bf16.xpose.msra.mxu0 %v4855
      %4872 = vmatprep.subr.bf16.mxu0 0
      %4873 = vmatpush2.bf16.xpose.msra.mxu0 0
      %4874 = vmatprep.subr.bf16.mxu0 0
      %4875 = vmatpush2.bf16.xpose.msra.mxu0 0
      %4876 = vmatprep.subr.bf16.mxu0 0
      %4877 = vmatpush2.bf16.xpose.msra.mxu0 0
      %4878 = vmatprep.subr.bf16.mxu0 0
      %4879 = vmatpush2.bf16.xpose.msra.mxu0 0
      %4880 = vmatprep.subr.bf16.mxu0 0
      %4881 = vmatpush2.bf16.xpose.msra.mxu0 0
      %4882 = vmatprep.subr.bf16.mxu0 0
      %4883 = vmatpush2.bf16.xpose.msra.mxu0 0
      %4884 = vmatprep.subr.bf16.mxu0 0
      %4885 = vmatpush2.bf16.xpose.msra.mxu0 0
      %4886 = vmatprep.subr.bf16.mxu0 0
      %4887 = vmatpush2.bf16.xpose.msra.mxu0 0
      %4888 = vmatprep.mubr.bf16.mxu0 0
      %4889 = vmatmul.mubr.bf16.gmra.mxu0 %v2352
      %v4890 = vpop.f32.mrf.mxu0
      %v4891 = vadd.f32 0.0, %v4890
      %v4892 = vpop.f32.mrf.mxu0
      %v4893 = vpop.f32.mrf.mxu0
      %v4894 = vadd.f32 0.0, %v4893
      %v4895 = vpop.f32.mrf.mxu0
      %4896 = vmatprep.mubr.bf16.mxu0 0
      %4897 = vmatmul.mubr.bf16.gmra.mxu0 %v2353
      %v4898 = vpop.f32.mrf.mxu0
      %v4899 = vadd.f32 0.0, %v4898
      %v4900 = vpop.f32.mrf.mxu0
      %v4901 = vpop.f32.mrf.mxu0
      %v4902 = vadd.f32 0.0, %v4901
      %v4903 = vpop.f32.mrf.mxu0
      %4904 = vdwg.mxu0
      %v4905 = vsel %vm2414, %v4891, -inf
      %4906 = vmax.xlane.f32.xlu0 %v4905
      %v4907 = vpop.xlane.xlu0 %4906
      %v4908 = vsel %vm2414, %v4894, -inf
      %4909 = vmax.xlane.f32.xlu0 %v4908
      %v4910 = vpop.xlane.xlu0 %4909
      %v4911 = vsel %vm2414, %v4899, -inf
      %4912 = vmax.xlane.f32.xlu0 %v4911
      %v4913 = vpop.xlane.xlu0 %4912
      %v4914 = vsel %vm2414, %v4902, -inf
      %4915 = vmax.xlane.f32.xlu0 %v4914
      %v4916 = vpop.xlane.xlu0 %4915
      %v4917 = vsub.f32 %v4891, %v4907
      %v4918 = vsub.f32 %v4894, %v4910
      %v4919 = vsub.f32 %v4899, %v4913
      %v4920 = vsub.f32 %v4902, %v4916
      %v4921 = vmul.f32 %v4917, 1.442695
      %v4922 = vpow.pop %v4921
      %v4923 = vmul.f32 %v4918, 1.442695
      %v4924 = vpow.pop %v4923
      %v4925 = vmul.f32 %v4919, 1.442695
      %v4926 = vpow.pop %v4925
      %v4927 = vmul.f32 %v4920, 1.442695
      %v4928 = vpow.pop %v4927
      %v4929 = vsel %vm2414, %v4922, 0.0
      %4930 = vadd.xlane.f32.xlu0 %v4929
      %v4931 = vpop.xlane.xlu0 %4930
      %v4932 = vsel %vm2414, %v4924, 0.0
      %4933 = vadd.xlane.f32.xlu0 %v4932
      %v4934 = vpop.xlane.xlu0 %4933
      %v4935 = vsel %vm2414, %v4926, 0.0
      %4936 = vadd.xlane.f32.xlu0 %v4935
      %v4937 = vpop.xlane.xlu0 %4936
      %v4938 = vsel %vm2414, %v4928, 0.0
      %4939 = vadd.xlane.f32.xlu0 %v4938
      %v4940 = vpop.xlane.xlu0 %4939
      %v4941 = vrcp.pop %v4931
      %v4942 = vrcp.pop %v4934
      %v4943 = vrcp.pop %v4937
      %v4944 = vrcp.pop %v4940
      %v4945 = vmul.f32 %v4922, %v4941
      %v4946 = vmul.f32 %v4924, %v4942
      %v4947 = vmul.f32 %v4926, %v4943
      %v4948 = vmul.f32 %v4928, %v4944
      %v4949 = vpack.c.bf16 %v4946, %v4945
      %v4950 = vpack.c.bf16 %v4948, %v4947
      %v4951 = vmul.bf16 %v2355, %v4854
      %v4953 = vsel %vm2414, %v4949, 0
      %v4956 = vsel %vm2414, %v4950, 0
      %v4959 = vsel %vm2572, %v4951, 0
      %4961 = vmatprep.subr.bf16.mxu0 0
      %4962 = vmatpush1.bf16.msra.mxu0 0
      %4963 = vmatprep.subr.bf16.mxu0 0
      %4964 = vmatpush1.bf16.msra.mxu0 0
      %4965 = vmatprep.subr.bf16.mxu0 0
      %4966 = vmatpush1.bf16.msra.mxu0 0
      %4967 = vmatprep.subr.bf16.mxu0 0
      %4968 = vmatpush1.bf16.msra.mxu0 0
      %4969 = vmatprep.subr.bf16.mxu0 0
      %4970 = vmatpush1.bf16.msra.mxu0 0
      %4971 = vmatprep.subr.bf16.mxu0 0
      %4972 = vmatpush1.bf16.msra.mxu0 0
      %4973 = vmatprep.subr.bf16.mxu0 0
      %4974 = vmatpush1.bf16.msra.mxu0 0
      %4975 = vmatprep.subr.bf16.mxu0 0
      %4976 = vmatpush1.bf16.msra.mxu0 %v4959
      %4977 = vmatprep.subr.bf16.mxu0 0
      %4978 = vmatpush2.bf16.msra.mxu0 0
      %4979 = vmatprep.subr.bf16.mxu0 0
      %4980 = vmatpush2.bf16.msra.mxu0 0
      %4981 = vmatprep.subr.bf16.mxu0 0
      %4982 = vmatpush2.bf16.msra.mxu0 0
      %4983 = vmatprep.subr.bf16.mxu0 0
      %4984 = vmatpush2.bf16.msra.mxu0 0
      %4985 = vmatprep.subr.bf16.mxu0 0
      %4986 = vmatpush2.bf16.msra.mxu0 0
      %4987 = vmatprep.subr.bf16.mxu0 0
      %4988 = vmatpush2.bf16.msra.mxu0 0
      %4989 = vmatprep.subr.bf16.mxu0 0
      %4990 = vmatpush2.bf16.msra.mxu0 0
      %4991 = vmatprep.subr.bf16.mxu0 0
      %4992 = vmatpush2.bf16.msra.mxu0 0
      %4993 = vmatprep.mubr.bf16.mxu0 0
      %4994 = vmatmul.mubr.bf16.gmra.mxu0 %v4953
      %v4995 = vpop.f32.mrf.mxu0
      %v4996 = vadd.f32 0.0, %v4995
      %v4997 = vpop.f32.mrf.mxu0
      %v4998 = vpop.f32.mrf.mxu0
      %v4999 = vadd.f32 0.0, %v4998
      %v5000 = vpop.f32.mrf.mxu0
      %5001 = vmatprep.mubr.bf16.mxu0 0
      %5002 = vmatmul.mubr.bf16.gmra.mxu0 %v4956
      %v5003 = vpop.f32.mrf.mxu0
      %v5004 = vadd.f32 0.0, %v5003
      %v5005 = vpop.f32.mrf.mxu0
      %v5006 = vpop.f32.mrf.mxu0
      %v5007 = vadd.f32 0.0, %v5006
      %v5008 = vpop.f32.mrf.mxu0
      %5009 = vdwg.mxu0
      %v5010 = vadd.f32 %v4844, %v4996
      %v5011 = vadd.f32 %v4845, %v4999
      %v5012 = vadd.f32 %v4846, %v5004
      %v5013 = vadd.f32 %v4847, %v5007
      %v5014 = vpack.c.bf16 %v5011, %v5010
      %v5015 = vpack.c.bf16 %v5013, %v5012
      %v5016 = vld [vmem:[%s12] sm:$0xf]
      %v5017 = vld [vmem:[%s12 + $0x4] sm:$0xf]
      %v5018 = vld [vmem:[%s12 + $0x8] sm:$0xf]
      %v5019 = vld [vmem:[%s12 + $0xc] sm:$0xf]
      %v5020 = vld [vmem:[%s12 + $0x10] sm:$0xf]
      %v5021 = vld [vmem:[%s12 + $0x14] sm:$0xf]
      %v5022 = vld [vmem:[%s12 + $0x18] sm:$0xf]
      %v5023 = vld [vmem:[%s12 + $0x1c] sm:$0xf]
      %v5024 = vld [vmem:[%s12 + $0x20] sm:$0xf]
      %v5025 = vld [vmem:[%s12 + $0x24] sm:$0xf]
      %v5026 = vld [vmem:[%s12 + $0x28] sm:$0xf]
      %v5027 = vld [vmem:[%s12 + $0x2c] sm:$0xf]
      %v5028 = vld [vmem:[%s12 + $0x30] sm:$0xf]
      %v5029 = vld [vmem:[%s12 + $0x34] sm:$0xf]
      %v5030 = vld [vmem:[%s12 + $0x38] sm:$0xf]
      %v5031 = vld [vmem:[%s12 + $0x3c] sm:$0xf]
      %s5032 = scalar_lea.vmem [#allocation3], %s2231
      %v5033 = vld [vmem:[%s5032] sm:$0xff]
      %v5034 = vld [vmem:[%s5032 + $0x8] sm:$0xff]
      %v5035 = vld [vmem:[%s5032 + $0x10] sm:$0xff]
      %v5036 = vld [vmem:[%s5032 + $0x18] sm:$0xff]
      %v5053 = vunpack.c.l.b16 %v5016
      %v5054 = vunpack.c.l.b16 %v5017
      %v5055 = vunpack.c.l.b16 %v5018
      %v5056 = vunpack.c.l.b16 %v5019
      %v5057 = vunpack.c.l.b16 %v5020
      %v5058 = vunpack.c.l.b16 %v5021
      %v5059 = vunpack.c.l.b16 %v5022
      %v5060 = vunpack.c.l.b16 %v5023
      %v5061 = vunpack.c.l.b16 %v5024
      %v5062 = vunpack.c.l.b16 %v5025
      %v5063 = vunpack.c.l.b16 %v5026
      %v5064 = vunpack.c.l.b16 %v5027
      %v5065 = vunpack.c.l.b16 %v5028
      %v5066 = vunpack.c.l.b16 %v5029
      %v5067 = vunpack.c.l.b16 %v5030
      %v5068 = vunpack.c.l.b16 %v5031
      %v5069 = vpack.c.b16 %v5054, %v5053
      %v5070 = vpack.c.b16 %v5056, %v5055
      %v5071 = vpack.c.b16 %v5058, %v5057
      %v5072 = vpack.c.b16 %v5060, %v5059
      %v5073 = vpack.c.b16 %v5062, %v5061
      %v5074 = vpack.c.b16 %v5064, %v5063
      %v5075 = vpack.c.b16 %v5066, %v5065
      %v5076 = vpack.c.b16 %v5068, %v5067
      %5085 = vmatprep.subr.bf16.mxu0 0
      %5086 = vmatpush1.bf16.msra.mxu0 %v5076
      %5087 = vmatprep.subr.bf16.mxu0 0
      %5088 = vmatpush1.bf16.msra.mxu0 %v5075
      %5089 = vmatprep.subr.bf16.mxu0 0
      %5090 = vmatpush1.bf16.msra.mxu0 %v5074
      %5091 = vmatprep.subr.bf16.mxu0 0
      %5092 = vmatpush1.bf16.msra.mxu0 %v5073
      %5093 = vmatprep.subr.bf16.mxu0 0
      %5094 = vmatpush1.bf16.msra.mxu0 %v5072
      %5095 = vmatprep.subr.bf16.mxu0 0
      %5096 = vmatpush1.bf16.msra.mxu0 %v5071
      %5097 = vmatprep.subr.bf16.mxu0 0
      %5098 = vmatpush1.bf16.msra.mxu0 %v5070
      %5099 = vmatprep.subr.bf16.mxu0 0
      %5100 = vmatpush1.bf16.msra.mxu0 %v5069
      %5101 = vmatprep.subr.bf16.mxu0 0
      %5102 = vmatpush2.bf16.msra.mxu0 0
      %5103 = vmatprep.subr.bf16.mxu0 0
      %5104 = vmatpush2.bf16.msra.mxu0 0
      %5105 = vmatprep.subr.bf16.mxu0 0
      %5106 = vmatpush2.bf16.msra.mxu0 0
      %5107 = vmatprep.subr.bf16.mxu0 0
      %5108 = vmatpush2.bf16.msra.mxu0 0
      %5109 = vmatprep.subr.bf16.mxu0 0
      %5110 = vmatpush2.bf16.msra.mxu0 0
      %5111 = vmatprep.subr.bf16.mxu0 0
      %5112 = vmatpush2.bf16.msra.mxu0 0
      %5113 = vmatprep.subr.bf16.mxu0 0
      %5114 = vmatpush2.bf16.msra.mxu0 0
      %5115 = vmatprep.subr.bf16.mxu0 0
      %5116 = vmatpush2.bf16.msra.mxu0 0
      %5117 = vmatprep.mubr.bf16.mxu0 0
      %5118 = vmatmul.mubr.bf16.gmra.mxu0 %v5014
      %v5119 = vpop.f32.mrf.mxu0
      %v5120 = vadd.f32 %v5033, %v5119
      %v5121 = vpop.f32.mrf.mxu0
      %v5122 = vpop.f32.mrf.mxu0
      %v5123 = vadd.f32 %v5034, %v5122
      %v5124 = vpop.f32.mrf.mxu0
      %5125 = vmatprep.mubr.bf16.mxu0 0
      %5126 = vmatmul.mubr.bf16.gmra.mxu0 %v5015
      %v5127 = vpop.f32.mrf.mxu0
      %v5128 = vadd.f32 %v5035, %v5127
      %v5129 = vpop.f32.mrf.mxu0
      %v5130 = vpop.f32.mrf.mxu0
      %v5131 = vadd.f32 %v5036, %v5130
      %v5132 = vpop.f32.mrf.mxu0
      %5133 = vdwg.mxu0
      %v5134 = vld [vmem:[%s13] sm:$0x1]
      %v5136 = vlaneseq
      %v5137 = vshrl.u32 %v5136, 7
      %v5138 = vsub.s32 0, %v5137
      %v5139 = vrot.slane %v5134, %v5138
      %v5141 = vadd.f32 %v5120, %v5139
      %v5142 = vadd.f32 %v5123, %v5139
      %v5143 = vadd.f32 %v5128, %v5139
      %v5144 = vadd.f32 %v5131, %v5139
      %5145 = vst [vmem:[%s489] sm:$0xff] %v5141
      %5146 = vst [vmem:[%s489 + $0x8] sm:$0xff] %v5142
      %5147 = vst [vmem:[%s489 + $0x10] sm:$0xff] %v5143
      %5148 = vst [vmem:[%s489 + $0x18] sm:$0xff] %v5144
      %s5149 = smul.u32 4, %s30
      %p5150 = scmp.lt.s32.totalorder %s29, 1
      %s5151 = scalar_select %p5150, %s29, 1
      %p5152 = scmp.lt.s32.totalorder %s5149, 7
      %s5153 = scalar_select %p5152, %s5149, 7
      %s5154 = smul.addr %s5151, 8
      %s5155 = sadd.s32 %s5153, %s5154
      %s5156 = smul.addr %s5155, 8
      %s5157 = scalar_lea.vmem %s14, %s5156
      // Predicated region
      $region81: #{wave_attention.1} parent=75 // pred_check
        %p5158 = pneg %p356
      $region82: #{wave_attention.1} parent=75 // pred_check_branch
        %5160 = sbr.rel (%p5158) target = $region84
      $region83: #{wave_attention.1} parent=75 // pred_region
        %s5161 = smul.u32 4, %s30
      $region84: #{wave_attention.1} parent=75 // pred_fallthru
        _
    $region76: #{wave_attention.1} parent=5 // pred_fallthru
      _
    %p5162 = scmp.le.s32.totalorder 2, %s20
    // Predicated region
    $region85: #{wave_attention.1} parent=5 // pred_check
      %p5163 = pneg %p5162
    $region86: #{wave_attention.1} parent=5 // pred_check_branch
      %5165 = sbr.rel (%p5163) target = $region88
    $region87: #{wave_attention.1} parent=5 // pred_region
      %s5166 = ssub.s32 %s20, 2
      // Predicated region
      $region89: #{wave_attention.1} parent=87 // pred_check
        %p5167 = pneg %p362
      $region90: #{wave_attention.1} parent=87 // pred_check_branch
        %5169 = sbr.rel (%p5167) target = $region92
      $region91: #{wave_attention.1} parent=87 // pred_region
        %s5170 = smul.u32 4, %s32
        %p5171 = scmp.lt.s32.totalorder %s31, 1
        %s5172 = scalar_select %p5171, %s31, 1
        %p5173 = scmp.lt.s32.totalorder %s5170, 7
        %s5174 = scalar_select %p5173, %s5170, 7
        %s5175 = smul.addr %s5172, 8
        %s5176 = sadd.s32 %s5174, %s5175
        %s5177 = smul.addr %s5176, 8
        %s5178 = scalar_lea.vmem %s14, %s5177
      $region92: #{wave_attention.1} parent=87 // pred_fallthru
        _
    $region88: #{wave_attention.1} parent=5 // pred_fallthru
      _
  $region6: #{wave_attention.1} parent=0 // loop_footer
    %s24 = sadd.s32 1, %s20
  $region7: #{wave_attention.1} parent=0 // loop_footer_branch
    %19 = sbr.rel target = $region3
  $region8: #{wave_attention.1} parent=0 // loop_exit
    _

</llo_original>
